<compile_context>
chip_gen: v7x
topology: tpu7x:2x2x1
jax: 0.10.0
libtpu: 0.0.40
codegen_flags: <defaults>
</compile_context>

<pallas_src>
import numpy as np
import jax
import jax.numpy as jnp
from jax import lax
from jax.experimental import pallas as pl
from jax.experimental.pallas import tpu as pltpu

RNN_HIDDEN_SIZE = 8
RNN_INPUT_SIZE = 3
RNN_NUM_LAYERS = 3
RNN_OUT_FEATURES = 3


def _make_kernel(T, BP, H):
    """Build the fused GRU+Linear kernel for static T (time steps) and BP (padded batch)."""

    def kernel(x_ref, m_ref,
               wi0, wh0, bc0, bn0,
               wi1, wh1, bc1, bn1,
               wi2, wh2, bc2, bn2,
               lw_ref, lb_ref,
               out_ref, seq_ref):
        layer_refs = ((wi0, wh0, bc0, bn0),
                      (wi1, wh1, bc1, bn1),
                      (wi2, wh2, bc2, bn2))

        m = m_ref[...]                 # (T*BP, 1) float validity mask (packed-seq lengths)
        inp = x_ref[...]               # (T*BP, I) time-major, batch padded to BP

        for (wi_r, wh_r, bc_r, bn_r) in layer_refs:
            wi = wi_r[...]             # (in, 3H)  fused gate weights  [r | z | n]
            wh = wh_r[...]             # (H, 3H)
            bc = bc_r[...]             # (1, 3H)   pre-folded biases (r,z: bi+bh; n: bi)
            bn = bn_r[...]             # (1, H)    hidden-side n-gate bias

            # Hoisted input-side projection for the whole layer: one big matmul.
            X = jnp.dot(inp, wi, preferred_element_type=jnp.float32) + bc   # (T*BP, 3H)

            h = jnp.zeros((BP, H), jnp.float32)
            for t in range(T):                       # static unroll (T is small)
                gx = X[t * BP:(t + 1) * BP, :]       # (BP, 3H)
                gh = jnp.dot(h, wh, preferred_element_type=jnp.float32)     # (BP, 3H)

                r = jax.nn.sigmoid(gx[:, 0:H] + gh[:, 0:H])
                z = jax.nn.sigmoid(gx[:, H:2 * H] + gh[:, H:2 * H])
                n = jnp.tanh(gx[:, 2 * H:3 * H] + r * (gh[:, 2 * H:3 * H] + bn))
                hn = n + z * (h - n)                 # == (1-z)*n + z*h

                # Unmasked layer output feeds the next layer (matches reference).
                seq_ref[pl.ds(t * BP, BP), :] = hn
                # Packed-sequence semantics: hidden state frozen past each length.
                mt = m[t * BP:(t + 1) * BP]          # (BP, 1)
                h = h + mt * (hn - h)

            inp = seq_ref[...]                       # (T*BP, H) -> next layer input

        # pad_packed_sequence zero-fills past each length, then the Linear is applied.
        top = m * inp                                # (T*BP, H)
        y = jnp.dot(top, lw_ref[...], preferred_element_type=jnp.float32) + lb_ref[...]
        out_ref[...] = y.astype(out_ref.dtype)

    return kernel


def init_params(key):
    """Deterministic parameter init mimicking PyTorch's U(-1/sqrt(H), 1/sqrt(H))."""
    params = {}
    k = 1.0 / np.sqrt(RNN_HIDDEN_SIZE)
    keys = jax.random.split(key, 4 * RNN_NUM_LAYERS + 2)
    i = 0
    for l in range(RNN_NUM_LAYERS):
        in_sz = RNN_INPUT_SIZE if l == 0 else RNN_HIDDEN_SIZE
        params[f"wi{l}"] = jax.random.uniform(keys[i], (3, in_sz, RNN_HIDDEN_SIZE),
                                              jnp.float32, -k, k); i += 1
        params[f"wh{l}"] = jax.random.uniform(keys[i], (3, RNN_HIDDEN_SIZE, RNN_HIDDEN_SIZE),
                                              jnp.float32, -k, k); i += 1
        params[f"bi{l}"] = jax.random.uniform(keys[i], (3, 1, RNN_HIDDEN_SIZE),
                                              jnp.float32, -k, k); i += 1
        params[f"bh{l}"] = jax.random.uniform(keys[i], (3, 1, RNN_HIDDEN_SIZE),
                                              jnp.float32, -k, k); i += 1
    params["lw"] = jax.random.uniform(keys[i], (RNN_HIDDEN_SIZE, RNN_OUT_FEATURES),
                                      jnp.float32, -k, k); i += 1
    params["lb"] = jax.random.uniform(keys[i], (1, RNN_OUT_FEATURES),
                                      jnp.float32, -k, k)
    return params


def my_model_forward(x, lengths, params):
    """x: (B, T, RNN_INPUT_SIZE) float32; lengths: (B,) host ints (as PyTorch requires)."""
    B, T, I = x.shape
    H = RNN_HIDDEN_SIZE
    O = RNN_OUT_FEATURES
    BP = ((B + 7) // 8) * 8                     # pad batch to sublane multiple

    lens_np = np.zeros((BP,), np.int32)
    lens_np[:B] = np.asarray(lengths, np.int32)

    # Time-major, batch-padded, flattened to 2-D (T*BP, I).
    x_tm = jnp.transpose(x.astype(jnp.float32), (1, 0, 2))          # (T, B, I)
    x_tm = jnp.pad(x_tm, ((0, 0), (0, BP - B), (0, 0)))             # (T, BP, I)
    x2 = x_tm.reshape(T * BP, I)

    # Validity mask precomputed once (t < length[b]); padded batch rows are always 0.
    mask_np = (np.arange(T, dtype=np.int32)[:, None] < lens_np[None, :]).astype(np.float32)
    mask = jnp.asarray(mask_np.reshape(T * BP, 1))

    # Fuse gate weights / fold biases in the wrapper (gate order r, z, n).
    args = [x2, mask]
    for l in range(RNN_NUM_LAYERS):
        wi = params[f"wi{l}"]; wh = params[f"wh{l}"]
        bi = params[f"bi{l}"]; bh = params[f"bh{l}"]
        wi_cat = jnp.concatenate([wi[0], wi[1], wi[2]], axis=1)                 # (in, 3H)
        wh_cat = jnp.concatenate([wh[0], wh[1], wh[2]], axis=1)                 # (H, 3H)
        b_cat = jnp.concatenate([bi[0] + bh[0], bi[1] + bh[1], bi[2]], axis=1)  # (1, 3H)
        bhn = bh[2]                                                             # (1, H)
        args += [wi_cat, wh_cat, b_cat, bhn]
    args += [params["lw"], params["lb"]]

    vmem = pl.BlockSpec(memory_space=pltpu.MemorySpace.VMEM)
    out2 = pl.pallas_call(
        _make_kernel(T, BP, H),
        out_shape=jax.ShapeDtypeStruct((T * BP, O), jnp.float32),
        in_specs=[vmem] * len(args),
        out_specs=vmem,
        scratch_shapes=[pltpu.VMEM((T * BP, H), jnp.float32)],
    )(*args)

    y = out2.reshape(T, BP, O).transpose(1, 0, 2)[:B]                # (B, T, O)
    t_out = int(np.max(np.asarray(lengths)))                         # pad_packed -> max(lengths)
    return y[:, :t_out]


# ----------------------------------------------------------------------------------
# Pure-JAX reference (unfused, timestep-by-timestep) with identical packed semantics.
# ----------------------------------------------------------------------------------
def _gru_cell(xt, h, wi, wh, bi, bh):
    r = jax.nn.sigmoid(jnp.dot(xt, wi[0], preferred_element_type=jnp.float32) + bi[0]
                       + jnp.dot(h, wh[0], preferred_element_type=jnp.float32) + bh[0])
    z = jax.nn.sigmoid(jnp.dot(xt, wi[1], preferred_element_type=jnp.float32) + bi[1]
                       + jnp.dot(h, wh[1], preferred_element_type=jnp.float32) + bh[1])
    n = jnp.tanh(jnp.dot(xt, wi[2], preferred_element_type=jnp.float32) + bi[2]
                 + r * (jnp.dot(h, wh[2], preferred_element_type=jnp.float32) + bh[2]))
    return (1.0 - z) * n + z * h


def reference_forward(x, lengths, params):
    B, T, _ = x.shape
    H = RNN_HIDDEN_SIZE
    lens = jnp.asarray(lengths, jnp.int32)[:, None]
    hs = [jnp.zeros((B, H), jnp.float32) for _ in range(RNN_NUM_LAYERS)]
    outs = []
    for t in range(T):
        xt = x[:, t]
        mask = t < lens
        inp = xt
        for l in range(RNN_NUM_LAYERS):
            nh = _gru_cell(inp, hs[l], params[f"wi{l}"], params[f"wh{l}"],
                           params[f"bi{l}"], params[f"bh{l}"])
            hs[l] = jnp.where(mask, nh, hs[l])
            inp = nh
        top = jnp.where(mask, inp, 0.0)
        outs.append(jnp.dot(top, params["lw"]) + params["lb"])
    y = jnp.stack(outs, axis=1)
    t_out = int(np.max(np.asarray(lengths)))
    return y[:, :t_out]


if __name__ == "__main__":
    B, T = 4, 8
    key = jax.random.PRNGKey(0)
    k_x, k_p = jax.random.split(key)
    x = jax.random.normal(k_x, (B, T, RNN_INPUT_SIZE), jnp.float32)
    lengths = np.array([8, 5, 3, 6], dtype=np.int32)   # variable, unsorted (enforce_sorted=False)
    params = init_params(k_p)

    y = jax.block_until_ready(my_model_forward(x, lengths, params))
    y_ref = jax.block_until_ready(reference_forward(x, lengths, params))

    assert y.shape == (B, int(lengths.max()), RNN_OUT_FEATURES), y.shape
    np.testing.assert_allclose(np.asarray(y), np.asarray(y_ref), atol=2e-5, rtol=2e-5)

    print("KERNEL_OK")
</pallas_src>

<mosaic_0001>
module attributes {stable_mosaic.version = 11 : i64} {
  func.func @kernel(%arg0: memref<64x3xf32, #tpu.memory_space<vmem>>, %arg1: memref<64x1xf32, #tpu.memory_space<vmem>>, %arg2: memref<3x24xf32, #tpu.memory_space<vmem>>, %arg3: memref<8x24xf32, #tpu.memory_space<vmem>>, %arg4: memref<1x24xf32, #tpu.memory_space<vmem>>, %arg5: memref<1x8xf32, #tpu.memory_space<vmem>>, %arg6: memref<8x24xf32, #tpu.memory_space<vmem>>, %arg7: memref<8x24xf32, #tpu.memory_space<vmem>>, %arg8: memref<1x24xf32, #tpu.memory_space<vmem>>, %arg9: memref<1x8xf32, #tpu.memory_space<vmem>>, %arg10: memref<8x24xf32, #tpu.memory_space<vmem>>, %arg11: memref<8x24xf32, #tpu.memory_space<vmem>>, %arg12: memref<1x24xf32, #tpu.memory_space<vmem>>, %arg13: memref<1x8xf32, #tpu.memory_space<vmem>>, %arg14: memref<8x3xf32, #tpu.memory_space<vmem>>, %arg15: memref<1x3xf32, #tpu.memory_space<vmem>>, %arg16: memref<64x3xf32, #tpu.memory_space<vmem>>, %arg17: memref<64x8xf32, #tpu.memory_space<vmem>>) attributes {dimension_semantics = [], scalar_prefetch = 0 : i64, scratch_operands = 1 : i64, tpu.core_type = #tpu.core_type<tc>} {
    %c0 = arith.constant 0 : index
    %c0_0 = arith.constant 0 : index
    %0 = vector.load %arg1[%c0, %c0_0] : memref<64x1xf32, #tpu.memory_space<vmem>>, vector<64x1xf32>
    %c0_1 = arith.constant 0 : index
    %c0_2 = arith.constant 0 : index
    %1 = vector.load %arg0[%c0_1, %c0_2] : memref<64x3xf32, #tpu.memory_space<vmem>>, vector<64x3xf32>
    %c0_3 = arith.constant 0 : index
    %c0_4 = arith.constant 0 : index
    %2 = vector.load %arg2[%c0_3, %c0_4] : memref<3x24xf32, #tpu.memory_space<vmem>>, vector<3x24xf32>
    %c0_5 = arith.constant 0 : index
    %c0_6 = arith.constant 0 : index
    %3 = vector.load %arg3[%c0_5, %c0_6] : memref<8x24xf32, #tpu.memory_space<vmem>>, vector<8x24xf32>
    %c0_7 = arith.constant 0 : index
    %c0_8 = arith.constant 0 : index
    %4 = vector.load %arg4[%c0_7, %c0_8] : memref<1x24xf32, #tpu.memory_space<vmem>>, vector<1x24xf32>
    %c0_9 = arith.constant 0 : index
    %c0_10 = arith.constant 0 : index
    %5 = vector.load %arg5[%c0_9, %c0_10] : memref<1x8xf32, #tpu.memory_space<vmem>>, vector<1x8xf32>
    %cst = arith.constant dense<0.000000e+00> : vector<64x24xf32>
    %6 = tpu.matmul %1, %2, %cst {dimension_numbers = #tpu.dot_dimension_numbers<[1], [0], [0], [1], [0, 0, 1, 1], [], []>} : vector<64x3xf32>, vector<3x24xf32>, vector<64x24xf32> -> vector<64x24xf32>
    %7 = vector.broadcast %4 : vector<1x24xf32> to vector<64x24xf32>
    %8 = arith.addf %6, %7 : vector<64x24xf32>
    %cst_11 = arith.constant 0.000000e+00 : f32
    %9 = vector.broadcast %cst_11 : f32 to vector<8x8xf32>
    %10 = vector.extract_strided_slice %8 {offsets = [0, 0], sizes = [8, 24], strides = [1, 1]} : vector<64x24xf32> to vector<8x24xf32>
    %cst_12 = arith.constant dense<0.000000e+00> : vector<8x24xf32>
    %11 = tpu.matmul %9, %3, %cst_12 {dimension_numbers = #tpu.dot_dimension_numbers<[1], [0], [0], [1], [0, 0, 1, 1], [], []>} : vector<8x8xf32>, vector<8x24xf32>, vector<8x24xf32> -> vector<8x24xf32>
    %12 = vector.extract_strided_slice %10 {offsets = [0, 0], sizes = [8, 8], strides = [1, 1]} : vector<8x24xf32> to vector<8x8xf32>
    %13 = vector.extract_strided_slice %11 {offsets = [0, 0], sizes = [8, 8], strides = [1, 1]} : vector<8x24xf32> to vector<8x8xf32>
    %14 = arith.addf %12, %13 : vector<8x8xf32>
    %15 = arith.negf %14 : vector<8x8xf32>
    %16 = math.exp %15 : vector<8x8xf32>
    %cst_13 = arith.constant 1.000000e+00 : f32
    %17 = vector.broadcast %cst_13 : f32 to vector<8x8xf32>
    %18 = arith.addf %17, %16 : vector<8x8xf32>
    %19 = arith.divf %17, %18 : vector<8x8xf32>
    %20 = vector.extract_strided_slice %10 {offsets = [0, 8], sizes = [8, 8], strides = [1, 1]} : vector<8x24xf32> to vector<8x8xf32>
    %21 = vector.extract_strided_slice %11 {offsets = [0, 8], sizes = [8, 8], strides = [1, 1]} : vector<8x24xf32> to vector<8x8xf32>
    %22 = arith.addf %20, %21 : vector<8x8xf32>
    %23 = arith.negf %22 : vector<8x8xf32>
    %24 = math.exp %23 : vector<8x8xf32>
    %cst_14 = arith.constant 1.000000e+00 : f32
    %25 = vector.broadcast %cst_14 : f32 to vector<8x8xf32>
    %26 = arith.addf %25, %24 : vector<8x8xf32>
    %27 = arith.divf %25, %26 : vector<8x8xf32>
    %28 = vector.extract_strided_slice %10 {offsets = [0, 16], sizes = [8, 8], strides = [1, 1]} : vector<8x24xf32> to vector<8x8xf32>
    %29 = vector.extract_strided_slice %11 {offsets = [0, 16], sizes = [8, 8], strides = [1, 1]} : vector<8x24xf32> to vector<8x8xf32>
    %30 = vector.broadcast %5 : vector<1x8xf32> to vector<8x8xf32>
    %31 = arith.addf %29, %30 : vector<8x8xf32>
    %32 = arith.mulf %19, %31 : vector<8x8xf32>
    %33 = arith.addf %28, %32 : vector<8x8xf32>
    %34 = math.tanh %33 : vector<8x8xf32>
    %35 = arith.subf %9, %34 : vector<8x8xf32>
    %36 = arith.mulf %27, %35 : vector<8x8xf32>
    %37 = arith.addf %34, %36 : vector<8x8xf32>
    %c0_15 = arith.constant 0 : index
    %c0_16 = arith.constant 0 : index
    %38 = vector.load %arg17[%c0_15, %c0_16] : memref<64x8xf32, #tpu.memory_space<vmem>>, vector<8x8xf32>
    tpu.vector_store %arg17[%c0_15, %c0_16], %37 {strides = array<i32>} : memref<64x8xf32, #tpu.memory_space<vmem>>, vector<8x8xf32>,
    %39 = vector.extract_strided_slice %0 {offsets = [0, 0], sizes = [8, 1], strides = [1, 1]} : vector<64x1xf32> to vector<8x1xf32>
    %40 = arith.subf %37, %9 : vector<8x8xf32>
    %41 = vector.broadcast %39 : vector<8x1xf32> to vector<8x8xf32>
    %42 = arith.mulf %41, %40 : vector<8x8xf32>
    %43 = arith.addf %9, %42 : vector<8x8xf32>
    %44 = vector.extract_strided_slice %8 {offsets = [8, 0], sizes = [8, 24], strides = [1, 1]} : vector<64x24xf32> to vector<8x24xf32>
    %cst_17 = arith.constant dense<0.000000e+00> : vector<8x24xf32>
    %45 = tpu.matmul %43, %3, %cst_17 {dimension_numbers = #tpu.dot_dimension_numbers<[1], [0], [0], [1], [0, 0, 1, 1], [], []>} : vector<8x8xf32>, vector<8x24xf32>, vector<8x24xf32> -> vector<8x24xf32>
    %46 = vector.extract_strided_slice %44 {offsets = [0, 0], sizes = [8, 8], strides = [1, 1]} : vector<8x24xf32> to vector<8x8xf32>
    %47 = vector.extract_strided_slice %45 {offsets = [0, 0], sizes = [8, 8], strides = [1, 1]} : vector<8x24xf32> to vector<8x8xf32>
    %48 = arith.addf %46, %47 : vector<8x8xf32>
    %49 = arith.negf %48 : vector<8x8xf32>
    %50 = math.exp %49 : vector<8x8xf32>
    %cst_18 = arith.constant 1.000000e+00 : f32
    %51 = vector.broadcast %cst_18 : f32 to vector<8x8xf32>
    %52 = arith.addf %51, %50 : vector<8x8xf32>
    %53 = arith.divf %51, %52 : vector<8x8xf32>
    %54 = vector.extract_strided_slice %44 {offsets = [0, 8], sizes = [8, 8], strides = [1, 1]} : vector<8x24xf32> to vector<8x8xf32>
    %55 = vector.extract_strided_slice %45 {offsets = [0, 8], sizes = [8, 8], strides = [1, 1]} : vector<8x24xf32> to vector<8x8xf32>
    %56 = arith.addf %54, %55 : vector<8x8xf32>
    %57 = arith.negf %56 : vector<8x8xf32>
    %58 = math.exp %57 : vector<8x8xf32>
    %cst_19 = arith.constant 1.000000e+00 : f32
    %59 = vector.broadcast %cst_19 : f32 to vector<8x8xf32>
    %60 = arith.addf %59, %58 : vector<8x8xf32>
    %61 = arith.divf %59, %60 : vector<8x8xf32>
    %62 = vector.extract_strided_slice %44 {offsets = [0, 16], sizes = [8, 8], strides = [1, 1]} : vector<8x24xf32> to vector<8x8xf32>
    %63 = vector.extract_strided_slice %45 {offsets = [0, 16], sizes = [8, 8], strides = [1, 1]} : vector<8x24xf32> to vector<8x8xf32>
    %64 = vector.broadcast %5 : vector<1x8xf32> to vector<8x8xf32>
    %65 = arith.addf %63, %64 : vector<8x8xf32>
    %66 = arith.mulf %53, %65 : vector<8x8xf32>
    %67 = arith.addf %62, %66 : vector<8x8xf32>
    %68 = math.tanh %67 : vector<8x8xf32>
    %69 = arith.subf %43, %68 : vector<8x8xf32>
    %70 = arith.mulf %61, %69 : vector<8x8xf32>
    %71 = arith.addf %68, %70 : vector<8x8xf32>
    %c8 = arith.constant 8 : index
    %c0_20 = arith.constant 0 : index
    %72 = vector.load %arg17[%c8, %c0_20] : memref<64x8xf32, #tpu.memory_space<vmem>>, vector<8x8xf32>
    tpu.vector_store %arg17[%c8, %c0_20], %71 {strides = array<i32>} : memref<64x8xf32, #tpu.memory_space<vmem>>, vector<8x8xf32>,
    %73 = vector.extract_strided_slice %0 {offsets = [8, 0], sizes = [8, 1], strides = [1, 1]} : vector<64x1xf32> to vector<8x1xf32>
    %74 = arith.subf %71, %43 : vector<8x8xf32>
    %75 = vector.broadcast %73 : vector<8x1xf32> to vector<8x8xf32>
    %76 = arith.mulf %75, %74 : vector<8x8xf32>
    %77 = arith.addf %43, %76 : vector<8x8xf32>
    %78 = vector.extract_strided_slice %8 {offsets = [16, 0], sizes = [8, 24], strides = [1, 1]} : vector<64x24xf32> to vector<8x24xf32>
    %cst_21 = arith.constant dense<0.000000e+00> : vector<8x24xf32>
    %79 = tpu.matmul %77, %3, %cst_21 {dimension_numbers = #tpu.dot_dimension_numbers<[1], [0], [0], [1], [0, 0, 1, 1], [], []>} : vector<8x8xf32>, vector<8x24xf32>, vector<8x24xf32> -> vector<8x24xf32>
    %80 = vector.extract_strided_slice %78 {offsets = [0, 0], sizes = [8, 8], strides = [1, 1]} : vector<8x24xf32> to vector<8x8xf32>
    %81 = vector.extract_strided_slice %79 {offsets = [0, 0], sizes = [8, 8], strides = [1, 1]} : vector<8x24xf32> to vector<8x8xf32>
    %82 = arith.addf %80, %81 : vector<8x8xf32>
    %83 = arith.negf %82 : vector<8x8xf32>
    %84 = math.exp %83 : vector<8x8xf32>
    %cst_22 = arith.constant 1.000000e+00 : f32
    %85 = vector.broadcast %cst_22 : f32 to vector<8x8xf32>
    %86 = arith.addf %85, %84 : vector<8x8xf32>
    %87 = arith.divf %85, %86 : vector<8x8xf32>
    %88 = vector.extract_strided_slice %78 {offsets = [0, 8], sizes = [8, 8], strides = [1, 1]} : vector<8x24xf32> to vector<8x8xf32>
    %89 = vector.extract_strided_slice %79 {offsets = [0, 8], sizes = [8, 8], strides = [1, 1]} : vector<8x24xf32> to vector<8x8xf32>
    %90 = arith.addf %88, %89 : vector<8x8xf32>
    %91 = arith.negf %90 : vector<8x8xf32>
    %92 = math.exp %91 : vector<8x8xf32>
    %cst_23 = arith.constant 1.000000e+00 : f32
    %93 = vector.broadcast %cst_23 : f32 to vector<8x8xf32>
    %94 = arith.addf %93, %92 : vector<8x8xf32>
    %95 = arith.divf %93, %94 : vector<8x8xf32>
    %96 = vector.extract_strided_slice %78 {offsets = [0, 16], sizes = [8, 8], strides = [1, 1]} : vector<8x24xf32> to vector<8x8xf32>
    %97 = vector.extract_strided_slice %79 {offsets = [0, 16], sizes = [8, 8], strides = [1, 1]} : vector<8x24xf32> to vector<8x8xf32>
    %98 = vector.broadcast %5 : vector<1x8xf32> to vector<8x8xf32>
    %99 = arith.addf %97, %98 : vector<8x8xf32>
    %100 = arith.mulf %87, %99 : vector<8x8xf32>
    %101 = arith.addf %96, %100 : vector<8x8xf32>
    %102 = math.tanh %101 : vector<8x8xf32>
    %103 = arith.subf %77, %102 : vector<8x8xf32>
    %104 = arith.mulf %95, %103 : vector<8x8xf32>
    %105 = arith.addf %102, %104 : vector<8x8xf32>
    %c16 = arith.constant 16 : index
    %c0_24 = arith.constant 0 : index
    %106 = vector.load %arg17[%c16, %c0_24] : memref<64x8xf32, #tpu.memory_space<vmem>>, vector<8x8xf32>
    tpu.vector_store %arg17[%c16, %c0_24], %105 {strides = array<i32>} : memref<64x8xf32, #tpu.memory_space<vmem>>, vector<8x8xf32>,
    %107 = vector.extract_strided_slice %0 {offsets = [16, 0], sizes = [8, 1], strides = [1, 1]} : vector<64x1xf32> to vector<8x1xf32>
    %108 = arith.subf %105, %77 : vector<8x8xf32>
    %109 = vector.broadcast %107 : vector<8x1xf32> to vector<8x8xf32>
    %110 = arith.mulf %109, %108 : vector<8x8xf32>
    %111 = arith.addf %77, %110 : vector<8x8xf32>
    %112 = vector.extract_strided_slice %8 {offsets = [24, 0], sizes = [8, 24], strides = [1, 1]} : vector<64x24xf32> to vector<8x24xf32>
    %cst_25 = arith.constant dense<0.000000e+00> : vector<8x24xf32>
    %113 = tpu.matmul %111, %3, %cst_25 {dimension_numbers = #tpu.dot_dimension_numbers<[1], [0], [0], [1], [0, 0, 1, 1], [], []>} : vector<8x8xf32>, vector<8x24xf32>, vector<8x24xf32> -> vector<8x24xf32>
    %114 = vector.extract_strided_slice %112 {offsets = [0, 0], sizes = [8, 8], strides = [1, 1]} : vector<8x24xf32> to vector<8x8xf32>
    %115 = vector.extract_strided_slice %113 {offsets = [0, 0], sizes = [8, 8], strides = [1, 1]} : vector<8x24xf32> to vector<8x8xf32>
    %116 = arith.addf %114, %115 : vector<8x8xf32>
    %117 = arith.negf %116 : vector<8x8xf32>
    %118 = math.exp %117 : vector<8x8xf32>
    %cst_26 = arith.constant 1.000000e+00 : f32
    %119 = vector.broadcast %cst_26 : f32 to vector<8x8xf32>
    %120 = arith.addf %119, %118 : vector<8x8xf32>
    %121 = arith.divf %119, %120 : vector<8x8xf32>
    %122 = vector.extract_strided_slice %112 {offsets = [0, 8], sizes = [8, 8], strides = [1, 1]} : vector<8x24xf32> to vector<8x8xf32>
    %123 = vector.extract_strided_slice %113 {offsets = [0, 8], sizes = [8, 8], strides = [1, 1]} : vector<8x24xf32> to vector<8x8xf32>
    %124 = arith.addf %122, %123 : vector<8x8xf32>
    %125 = arith.negf %124 : vector<8x8xf32>
    %126 = math.exp %125 : vector<8x8xf32>
    %cst_27 = arith.constant 1.000000e+00 : f32
    %127 = vector.broadcast %cst_27 : f32 to vector<8x8xf32>
    %128 = arith.addf %127, %126 : vector<8x8xf32>
    %129 = arith.divf %127, %128 : vector<8x8xf32>
    %130 = vector.extract_strided_slice %112 {offsets = [0, 16], sizes = [8, 8], strides = [1, 1]} : vector<8x24xf32> to vector<8x8xf32>
    %131 = vector.extract_strided_slice %113 {offsets = [0, 16], sizes = [8, 8], strides = [1, 1]} : vector<8x24xf32> to vector<8x8xf32>
    %132 = vector.broadcast %5 : vector<1x8xf32> to vector<8x8xf32>
    %133 = arith.addf %131, %132 : vector<8x8xf32>
    %134 = arith.mulf %121, %133 : vector<8x8xf32>
    %135 = arith.addf %130, %134 : vector<8x8xf32>
    %136 = math.tanh %135 : vector<8x8xf32>
    %137 = arith.subf %111, %136 : vector<8x8xf32>
    %138 = arith.mulf %129, %137 : vector<8x8xf32>
    %139 = arith.addf %136, %138 : vector<8x8xf32>
    %c24 = arith.constant 24 : index
    %c0_28 = arith.constant 0 : index
    %140 = vector.load %arg17[%c24, %c0_28] : memref<64x8xf32, #tpu.memory_space<vmem>>, vector<8x8xf32>
    tpu.vector_store %arg17[%c24, %c0_28], %139 {strides = array<i32>} : memref<64x8xf32, #tpu.memory_space<vmem>>, vector<8x8xf32>,
    %141 = vector.extract_strided_slice %0 {offsets = [24, 0], sizes = [8, 1], strides = [1, 1]} : vector<64x1xf32> to vector<8x1xf32>
    %142 = arith.subf %139, %111 : vector<8x8xf32>
    %143 = vector.broadcast %141 : vector<8x1xf32> to vector<8x8xf32>
    %144 = arith.mulf %143, %142 : vector<8x8xf32>
    %145 = arith.addf %111, %144 : vector<8x8xf32>
    %146 = vector.extract_strided_slice %8 {offsets = [32, 0], sizes = [8, 24], strides = [1, 1]} : vector<64x24xf32> to vector<8x24xf32>
    %cst_29 = arith.constant dense<0.000000e+00> : vector<8x24xf32>
    %147 = tpu.matmul %145, %3, %cst_29 {dimension_numbers = #tpu.dot_dimension_numbers<[1], [0], [0], [1], [0, 0, 1, 1], [], []>} : vector<8x8xf32>, vector<8x24xf32>, vector<8x24xf32> -> vector<8x24xf32>
    %148 = vector.extract_strided_slice %146 {offsets = [0, 0], sizes = [8, 8], strides = [1, 1]} : vector<8x24xf32> to vector<8x8xf32>
    %149 = vector.extract_strided_slice %147 {offsets = [0, 0], sizes = [8, 8], strides = [1, 1]} : vector<8x24xf32> to vector<8x8xf32>
    %150 = arith.addf %148, %149 : vector<8x8xf32>
    %151 = arith.negf %150 : vector<8x8xf32>
    %152 = math.exp %151 : vector<8x8xf32>
    %cst_30 = arith.constant 1.000000e+00 : f32
    %153 = vector.broadcast %cst_30 : f32 to vector<8x8xf32>
    %154 = arith.addf %153, %152 : vector<8x8xf32>
    %155 = arith.divf %153, %154 : vector<8x8xf32>
    %156 = vector.extract_strided_slice %146 {offsets = [0, 8], sizes = [8, 8], strides = [1, 1]} : vector<8x24xf32> to vector<8x8xf32>
    %157 = vector.extract_strided_slice %147 {offsets = [0, 8], sizes = [8, 8], strides = [1, 1]} : vector<8x24xf32> to vector<8x8xf32>
    %158 = arith.addf %156, %157 : vector<8x8xf32>
    %159 = arith.negf %158 : vector<8x8xf32>
    %160 = math.exp %159 : vector<8x8xf32>
    %cst_31 = arith.constant 1.000000e+00 : f32
    %161 = vector.broadcast %cst_31 : f32 to vector<8x8xf32>
    %162 = arith.addf %161, %160 : vector<8x8xf32>
    %163 = arith.divf %161, %162 : vector<8x8xf32>
    %164 = vector.extract_strided_slice %146 {offsets = [0, 16], sizes = [8, 8], strides = [1, 1]} : vector<8x24xf32> to vector<8x8xf32>
    %165 = vector.extract_strided_slice %147 {offsets = [0, 16], sizes = [8, 8], strides = [1, 1]} : vector<8x24xf32> to vector<8x8xf32>
    %166 = vector.broadcast %5 : vector<1x8xf32> to vector<8x8xf32>
    %167 = arith.addf %165, %166 : vector<8x8xf32>
    %168 = arith.mulf %155, %167 : vector<8x8xf32>
    %169 = arith.addf %164, %168 : vector<8x8xf32>
    %170 = math.tanh %169 : vector<8x8xf32>
    %171 = arith.subf %145, %170 : vector<8x8xf32>
    %172 = arith.mulf %163, %171 : vector<8x8xf32>
    %173 = arith.addf %170, %172 : vector<8x8xf32>
    %c32 = arith.constant 32 : index
    %c0_32 = arith.constant 0 : index
    %174 = vector.load %arg17[%c32, %c0_32] : memref<64x8xf32, #tpu.memory_space<vmem>>, vector<8x8xf32>
    tpu.vector_store %arg17[%c32, %c0_32], %173 {strides = array<i32>} : memref<64x8xf32, #tpu.memory_space<vmem>>, vector<8x8xf32>,
    %175 = vector.extract_strided_slice %0 {offsets = [32, 0], sizes = [8, 1], strides = [1, 1]} : vector<64x1xf32> to vector<8x1xf32>
    %176 = arith.subf %173, %145 : vector<8x8xf32>
    %177 = vector.broadcast %175 : vector<8x1xf32> to vector<8x8xf32>
    %178 = arith.mulf %177, %176 : vector<8x8xf32>
    %179 = arith.addf %145, %178 : vector<8x8xf32>
    %180 = vector.extract_strided_slice %8 {offsets = [40, 0], sizes = [8, 24], strides = [1, 1]} : vector<64x24xf32> to vector<8x24xf32>
    %cst_33 = arith.constant dense<0.000000e+00> : vector<8x24xf32>
    %181 = tpu.matmul %179, %3, %cst_33 {dimension_numbers = #tpu.dot_dimension_numbers<[1], [0], [0], [1], [0, 0, 1, 1], [], []>} : vector<8x8xf32>, vector<8x24xf32>, vector<8x24xf32> -> vector<8x24xf32>
    %182 = vector.extract_strided_slice %180 {offsets = [0, 0], sizes = [8, 8], strides = [1, 1]} : vector<8x24xf32> to vector<8x8xf32>
    %183 = vector.extract_strided_slice %181 {offsets = [0, 0], sizes = [8, 8], strides = [1, 1]} : vector<8x24xf32> to vector<8x8xf32>
    %184 = arith.addf %182, %183 : vector<8x8xf32>
    %185 = arith.negf %184 : vector<8x8xf32>
    %186 = math.exp %185 : vector<8x8xf32>
    %cst_34 = arith.constant 1.000000e+00 : f32
    %187 = vector.broadcast %cst_34 : f32 to vector<8x8xf32>
    %188 = arith.addf %187, %186 : vector<8x8xf32>
    %189 = arith.divf %187, %188 : vector<8x8xf32>
    %190 = vector.extract_strided_slice %180 {offsets = [0, 8], sizes = [8, 8], strides = [1, 1]} : vector<8x24xf32> to vector<8x8xf32>
    %191 = vector.extract_strided_slice %181 {offsets = [0, 8], sizes = [8, 8], strides = [1, 1]} : vector<8x24xf32> to vector<8x8xf32>
    %192 = arith.addf %190, %191 : vector<8x8xf32>
    %193 = arith.negf %192 : vector<8x8xf32>
    %194 = math.exp %193 : vector<8x8xf32>
    %cst_35 = arith.constant 1.000000e+00 : f32
    %195 = vector.broadcast %cst_35 : f32 to vector<8x8xf32>
    %196 = arith.addf %195, %194 : vector<8x8xf32>
    %197 = arith.divf %195, %196 : vector<8x8xf32>
    %198 = vector.extract_strided_slice %180 {offsets = [0, 16], sizes = [8, 8], strides = [1, 1]} : vector<8x24xf32> to vector<8x8xf32>
    %199 = vector.extract_strided_slice %181 {offsets = [0, 16], sizes = [8, 8], strides = [1, 1]} : vector<8x24xf32> to vector<8x8xf32>
    %200 = vector.broadcast %5 : vector<1x8xf32> to vector<8x8xf32>
    %201 = arith.addf %199, %200 : vector<8x8xf32>
    %202 = arith.mulf %189, %201 : vector<8x8xf32>
    %203 = arith.addf %198, %202 : vector<8x8xf32>
    %204 = math.tanh %203 : vector<8x8xf32>
    %205 = arith.subf %179, %204 : vector<8x8xf32>
    %206 = arith.mulf %197, %205 : vector<8x8xf32>
    %207 = arith.addf %204, %206 : vector<8x8xf32>
    %c40 = arith.constant 40 : index
    %c0_36 = arith.constant 0 : index
    %208 = vector.load %arg17[%c40, %c0_36] : memref<64x8xf32, #tpu.memory_space<vmem>>, vector<8x8xf32>
    tpu.vector_store %arg17[%c40, %c0_36], %207 {strides = array<i32>} : memref<64x8xf32, #tpu.memory_space<vmem>>, vector<8x8xf32>,
    %209 = vector.extract_strided_slice %0 {offsets = [40, 0], sizes = [8, 1], strides = [1, 1]} : vector<64x1xf32> to vector<8x1xf32>
    %210 = arith.subf %207, %179 : vector<8x8xf32>
    %211 = vector.broadcast %209 : vector<8x1xf32> to vector<8x8xf32>
    %212 = arith.mulf %211, %210 : vector<8x8xf32>
    %213 = arith.addf %179, %212 : vector<8x8xf32>
    %214 = vector.extract_strided_slice %8 {offsets = [48, 0], sizes = [8, 24], strides = [1, 1]} : vector<64x24xf32> to vector<8x24xf32>
    %cst_37 = arith.constant dense<0.000000e+00> : vector<8x24xf32>
    %215 = tpu.matmul %213, %3, %cst_37 {dimension_numbers = #tpu.dot_dimension_numbers<[1], [0], [0], [1], [0, 0, 1, 1], [], []>} : vector<8x8xf32>, vector<8x24xf32>, vector<8x24xf32> -> vector<8x24xf32>
    %216 = vector.extract_strided_slice %214 {offsets = [0, 0], sizes = [8, 8], strides = [1, 1]} : vector<8x24xf32> to vector<8x8xf32>
    %217 = vector.extract_strided_slice %215 {offsets = [0, 0], sizes = [8, 8], strides = [1, 1]} : vector<8x24xf32> to vector<8x8xf32>
    %218 = arith.addf %216, %217 : vector<8x8xf32>
    %219 = arith.negf %218 : vector<8x8xf32>
    %220 = math.exp %219 : vector<8x8xf32>
    %cst_38 = arith.constant 1.000000e+00 : f32
    %221 = vector.broadcast %cst_38 : f32 to vector<8x8xf32>
    %222 = arith.addf %221, %220 : vector<8x8xf32>
    %223 = arith.divf %221, %222 : vector<8x8xf32>
    %224 = vector.extract_strided_slice %214 {offsets = [0, 8], sizes = [8, 8], strides = [1, 1]} : vector<8x24xf32> to vector<8x8xf32>
    %225 = vector.extract_strided_slice %215 {offsets = [0, 8], sizes = [8, 8], strides = [1, 1]} : vector<8x24xf32> to vector<8x8xf32>
    %226 = arith.addf %224, %225 : vector<8x8xf32>
    %227 = arith.negf %226 : vector<8x8xf32>
    %228 = math.exp %227 : vector<8x8xf32>
    %cst_39 = arith.constant 1.000000e+00 : f32
    %229 = vector.broadcast %cst_39 : f32 to vector<8x8xf32>
    %230 = arith.addf %229, %228 : vector<8x8xf32>
    %231 = arith.divf %229, %230 : vector<8x8xf32>
    %232 = vector.extract_strided_slice %214 {offsets = [0, 16], sizes = [8, 8], strides = [1, 1]} : vector<8x24xf32> to vector<8x8xf32>
    %233 = vector.extract_strided_slice %215 {offsets = [0, 16], sizes = [8, 8], strides = [1, 1]} : vector<8x24xf32> to vector<8x8xf32>
    %234 = vector.broadcast %5 : vector<1x8xf32> to vector<8x8xf32>
    %235 = arith.addf %233, %234 : vector<8x8xf32>
    %236 = arith.mulf %223, %235 : vector<8x8xf32>
    %237 = arith.addf %232, %236 : vector<8x8xf32>
    %238 = math.tanh %237 : vector<8x8xf32>
    %239 = arith.subf %213, %238 : vector<8x8xf32>
    %240 = arith.mulf %231, %239 : vector<8x8xf32>
    %241 = arith.addf %238, %240 : vector<8x8xf32>
    %c48 = arith.constant 48 : index
    %c0_40 = arith.constant 0 : index
    %242 = vector.load %arg17[%c48, %c0_40] : memref<64x8xf32, #tpu.memory_space<vmem>>, vector<8x8xf32>
    tpu.vector_store %arg17[%c48, %c0_40], %241 {strides = array<i32>} : memref<64x8xf32, #tpu.memory_space<vmem>>, vector<8x8xf32>,
    %243 = vector.extract_strided_slice %0 {offsets = [48, 0], sizes = [8, 1], strides = [1, 1]} : vector<64x1xf32> to vector<8x1xf32>
    %244 = arith.subf %241, %213 : vector<8x8xf32>
    %245 = vector.broadcast %243 : vector<8x1xf32> to vector<8x8xf32>
    %246 = arith.mulf %245, %244 : vector<8x8xf32>
    %247 = arith.addf %213, %246 : vector<8x8xf32>
    %248 = vector.extract_strided_slice %8 {offsets = [56, 0], sizes = [8, 24], strides = [1, 1]} : vector<64x24xf32> to vector<8x24xf32>
    %cst_41 = arith.constant dense<0.000000e+00> : vector<8x24xf32>
    %249 = tpu.matmul %247, %3, %cst_41 {dimension_numbers = #tpu.dot_dimension_numbers<[1], [0], [0], [1], [0, 0, 1, 1], [], []>} : vector<8x8xf32>, vector<8x24xf32>, vector<8x24xf32> -> vector<8x24xf32>
    %250 = vector.extract_strided_slice %248 {offsets = [0, 0], sizes = [8, 8], strides = [1, 1]} : vector<8x24xf32> to vector<8x8xf32>
    %251 = vector.extract_strided_slice %249 {offsets = [0, 0], sizes = [8, 8], strides = [1, 1]} : vector<8x24xf32> to vector<8x8xf32>
    %252 = arith.addf %250, %251 : vector<8x8xf32>
    %253 = arith.negf %252 : vector<8x8xf32>
    %254 = math.exp %253 : vector<8x8xf32>
    %cst_42 = arith.constant 1.000000e+00 : f32
    %255 = vector.broadcast %cst_42 : f32 to vector<8x8xf32>
    %256 = arith.addf %255, %254 : vector<8x8xf32>
    %257 = arith.divf %255, %256 : vector<8x8xf32>
    %258 = vector.extract_strided_slice %248 {offsets = [0, 8], sizes = [8, 8], strides = [1, 1]} : vector<8x24xf32> to vector<8x8xf32>
    %259 = vector.extract_strided_slice %249 {offsets = [0, 8], sizes = [8, 8], strides = [1, 1]} : vector<8x24xf32> to vector<8x8xf32>
    %260 = arith.addf %258, %259 : vector<8x8xf32>
    %261 = arith.negf %260 : vector<8x8xf32>
    %262 = math.exp %261 : vector<8x8xf32>
    %cst_43 = arith.constant 1.000000e+00 : f32
    %263 = vector.broadcast %cst_43 : f32 to vector<8x8xf32>
    %264 = arith.addf %263, %262 : vector<8x8xf32>
    %265 = arith.divf %263, %264 : vector<8x8xf32>
    %266 = vector.extract_strided_slice %248 {offsets = [0, 16], sizes = [8, 8], strides = [1, 1]} : vector<8x24xf32> to vector<8x8xf32>
    %267 = vector.extract_strided_slice %249 {offsets = [0, 16], sizes = [8, 8], strides = [1, 1]} : vector<8x24xf32> to vector<8x8xf32>
    %268 = vector.broadcast %5 : vector<1x8xf32> to vector<8x8xf32>
    %269 = arith.addf %267, %268 : vector<8x8xf32>
    %270 = arith.mulf %257, %269 : vector<8x8xf32>
    %271 = arith.addf %266, %270 : vector<8x8xf32>
    %272 = math.tanh %271 : vector<8x8xf32>
    %273 = arith.subf %247, %272 : vector<8x8xf32>
    %274 = arith.mulf %265, %273 : vector<8x8xf32>
    %275 = arith.addf %272, %274 : vector<8x8xf32>
    %c56 = arith.constant 56 : index
    %c0_44 = arith.constant 0 : index
    %276 = vector.load %arg17[%c56, %c0_44] : memref<64x8xf32, #tpu.memory_space<vmem>>, vector<8x8xf32>
    tpu.vector_store %arg17[%c56, %c0_44], %275 {strides = array<i32>} : memref<64x8xf32, #tpu.memory_space<vmem>>, vector<8x8xf32>,
    %c0_45 = arith.constant 0 : index
    %c0_46 = arith.constant 0 : index
    %277 = vector.load %arg17[%c0_45, %c0_46] : memref<64x8xf32, #tpu.memory_space<vmem>>, vector<64x8xf32>
    %c0_47 = arith.constant 0 : index
    %c0_48 = arith.constant 0 : index
    %278 = vector.load %arg6[%c0_47, %c0_48] : memref<8x24xf32, #tpu.memory_space<vmem>>, vector<8x24xf32>
    %c0_49 = arith.constant 0 : index
    %c0_50 = arith.constant 0 : index
    %279 = vector.load %arg7[%c0_49, %c0_50] : memref<8x24xf32, #tpu.memory_space<vmem>>, vector<8x24xf32>
    %c0_51 = arith.constant 0 : index
    %c0_52 = arith.constant 0 : index
    %280 = vector.load %arg8[%c0_51, %c0_52] : memref<1x24xf32, #tpu.memory_space<vmem>>, vector<1x24xf32>
    %c0_53 = arith.constant 0 : index
    %c0_54 = arith.constant 0 : index
    %281 = vector.load %arg9[%c0_53, %c0_54] : memref<1x8xf32, #tpu.memory_space<vmem>>, vector<1x8xf32>
    %cst_55 = arith.constant dense<0.000000e+00> : vector<64x24xf32>
    %282 = tpu.matmul %277, %278, %cst_55 {dimension_numbers = #tpu.dot_dimension_numbers<[1], [0], [0], [1], [0, 0, 1, 1], [], []>} : vector<64x8xf32>, vector<8x24xf32>, vector<64x24xf32> -> vector<64x24xf32>
    %283 = vector.broadcast %280 : vector<1x24xf32> to vector<64x24xf32>
    %284 = arith.addf %282, %283 : vector<64x24xf32>
    %cst_56 = arith.constant 0.000000e+00 : f32
    %285 = vector.broadcast %cst_56 : f32 to vector<8x8xf32>
    %286 = vector.extract_strided_slice %284 {offsets = [0, 0], sizes = [8, 24], strides = [1, 1]} : vector<64x24xf32> to vector<8x24xf32>
    %cst_57 = arith.constant dense<0.000000e+00> : vector<8x24xf32>
    %287 = tpu.matmul %285, %279, %cst_57 {dimension_numbers = #tpu.dot_dimension_numbers<[1], [0], [0], [1], [0, 0, 1, 1], [], []>} : vector<8x8xf32>, vector<8x24xf32>, vector<8x24xf32> -> vector<8x24xf32>
    %288 = vector.extract_strided_slice %286 {offsets = [0, 0], sizes = [8, 8], strides = [1, 1]} : vector<8x24xf32> to vector<8x8xf32>
    %289 = vector.extract_strided_slice %287 {offsets = [0, 0], sizes = [8, 8], strides = [1, 1]} : vector<8x24xf32> to vector<8x8xf32>
    %290 = arith.addf %288, %289 : vector<8x8xf32>
    %291 = arith.negf %290 : vector<8x8xf32>
    %292 = math.exp %291 : vector<8x8xf32>
    %cst_58 = arith.constant 1.000000e+00 : f32
    %293 = vector.broadcast %cst_58 : f32 to vector<8x8xf32>
    %294 = arith.addf %293, %292 : vector<8x8xf32>
    %295 = arith.divf %293, %294 : vector<8x8xf32>
    %296 = vector.extract_strided_slice %286 {offsets = [0, 8], sizes = [8, 8], strides = [1, 1]} : vector<8x24xf32> to vector<8x8xf32>
    %297 = vector.extract_strided_slice %287 {offsets = [0, 8], sizes = [8, 8], strides = [1, 1]} : vector<8x24xf32> to vector<8x8xf32>
    %298 = arith.addf %296, %297 : vector<8x8xf32>
    %299 = arith.negf %298 : vector<8x8xf32>
    %300 = math.exp %299 : vector<8x8xf32>
    %cst_59 = arith.constant 1.000000e+00 : f32
    %301 = vector.broadcast %cst_59 : f32 to vector<8x8xf32>
    %302 = arith.addf %301, %300 : vector<8x8xf32>
    %303 = arith.divf %301, %302 : vector<8x8xf32>
    %304 = vector.extract_strided_slice %286 {offsets = [0, 16], sizes = [8, 8], strides = [1, 1]} : vector<8x24xf32> to vector<8x8xf32>
    %305 = vector.extract_strided_slice %287 {offsets = [0, 16], sizes = [8, 8], strides = [1, 1]} : vector<8x24xf32> to vector<8x8xf32>
    %306 = vector.broadcast %281 : vector<1x8xf32> to vector<8x8xf32>
    %307 = arith.addf %305, %306 : vector<8x8xf32>
    %308 = arith.mulf %295, %307 : vector<8x8xf32>
    %309 = arith.addf %304, %308 : vector<8x8xf32>
    %310 = math.tanh %309 : vector<8x8xf32>
    %311 = arith.subf %285, %310 : vector<8x8xf32>
    %312 = arith.mulf %303, %311 : vector<8x8xf32>
    %313 = arith.addf %310, %312 : vector<8x8xf32>
    %c0_60 = arith.constant 0 : index
    %c0_61 = arith.constant 0 : index
    %314 = vector.load %arg17[%c0_60, %c0_61] : memref<64x8xf32, #tpu.memory_space<vmem>>, vector<8x8xf32>
    tpu.vector_store %arg17[%c0_60, %c0_61], %313 {strides = array<i32>} : memref<64x8xf32, #tpu.memory_space<vmem>>, vector<8x8xf32>,
    %315 = vector.extract_strided_slice %0 {offsets = [0, 0], sizes = [8, 1], strides = [1, 1]} : vector<64x1xf32> to vector<8x1xf32>
    %316 = arith.subf %313, %285 : vector<8x8xf32>
    %317 = vector.broadcast %315 : vector<8x1xf32> to vector<8x8xf32>
    %318 = arith.mulf %317, %316 : vector<8x8xf32>
    %319 = arith.addf %285, %318 : vector<8x8xf32>
    %320 = vector.extract_strided_slice %284 {offsets = [8, 0], sizes = [8, 24], strides = [1, 1]} : vector<64x24xf32> to vector<8x24xf32>
    %cst_62 = arith.constant dense<0.000000e+00> : vector<8x24xf32>
    %321 = tpu.matmul %319, %279, %cst_62 {dimension_numbers = #tpu.dot_dimension_numbers<[1], [0], [0], [1], [0, 0, 1, 1], [], []>} : vector<8x8xf32>, vector<8x24xf32>, vector<8x24xf32> -> vector<8x24xf32>
    %322 = vector.extract_strided_slice %320 {offsets = [0, 0], sizes = [8, 8], strides = [1, 1]} : vector<8x24xf32> to vector<8x8xf32>
    %323 = vector.extract_strided_slice %321 {offsets = [0, 0], sizes = [8, 8], strides = [1, 1]} : vector<8x24xf32> to vector<8x8xf32>
    %324 = arith.addf %322, %323 : vector<8x8xf32>
    %325 = arith.negf %324 : vector<8x8xf32>
    %326 = math.exp %325 : vector<8x8xf32>
    %cst_63 = arith.constant 1.000000e+00 : f32
    %327 = vector.broadcast %cst_63 : f32 to vector<8x8xf32>
    %328 = arith.addf %327, %326 : vector<8x8xf32>
    %329 = arith.divf %327, %328 : vector<8x8xf32>
    %330 = vector.extract_strided_slice %320 {offsets = [0, 8], sizes = [8, 8], strides = [1, 1]} : vector<8x24xf32> to vector<8x8xf32>
    %331 = vector.extract_strided_slice %321 {offsets = [0, 8], sizes = [8, 8], strides = [1, 1]} : vector<8x24xf32> to vector<8x8xf32>
    %332 = arith.addf %330, %331 : vector<8x8xf32>
    %333 = arith.negf %332 : vector<8x8xf32>
    %334 = math.exp %333 : vector<8x8xf32>
    %cst_64 = arith.constant 1.000000e+00 : f32
    %335 = vector.broadcast %cst_64 : f32 to vector<8x8xf32>
    %336 = arith.addf %335, %334 : vector<8x8xf32>
    %337 = arith.divf %335, %336 : vector<8x8xf32>
    %338 = vector.extract_strided_slice %320 {offsets = [0, 16], sizes = [8, 8], strides = [1, 1]} : vector<8x24xf32> to vector<8x8xf32>
    %339 = vector.extract_strided_slice %321 {offsets = [0, 16], sizes = [8, 8], strides = [1, 1]} : vector<8x24xf32> to vector<8x8xf32>
    %340 = vector.broadcast %281 : vector<1x8xf32> to vector<8x8xf32>
    %341 = arith.addf %339, %340 : vector<8x8xf32>
    %342 = arith.mulf %329, %341 : vector<8x8xf32>
    %343 = arith.addf %338, %342 : vector<8x8xf32>
    %344 = math.tanh %343 : vector<8x8xf32>
    %345 = arith.subf %319, %344 : vector<8x8xf32>
    %346 = arith.mulf %337, %345 : vector<8x8xf32>
    %347 = arith.addf %344, %346 : vector<8x8xf32>
    %c8_65 = arith.constant 8 : index
    %c0_66 = arith.constant 0 : index
    %348 = vector.load %arg17[%c8_65, %c0_66] : memref<64x8xf32, #tpu.memory_space<vmem>>, vector<8x8xf32>
    tpu.vector_store %arg17[%c8_65, %c0_66], %347 {strides = array<i32>} : memref<64x8xf32, #tpu.memory_space<vmem>>, vector<8x8xf32>,
    %349 = vector.extract_strided_slice %0 {offsets = [8, 0], sizes = [8, 1], strides = [1, 1]} : vector<64x1xf32> to vector<8x1xf32>
    %350 = arith.subf %347, %319 : vector<8x8xf32>
    %351 = vector.broadcast %349 : vector<8x1xf32> to vector<8x8xf32>
    %352 = arith.mulf %351, %350 : vector<8x8xf32>
    %353 = arith.addf %319, %352 : vector<8x8xf32>
    %354 = vector.extract_strided_slice %284 {offsets = [16, 0], sizes = [8, 24], strides = [1, 1]} : vector<64x24xf32> to vector<8x24xf32>
    %cst_67 = arith.constant dense<0.000000e+00> : vector<8x24xf32>
    %355 = tpu.matmul %353, %279, %cst_67 {dimension_numbers = #tpu.dot_dimension_numbers<[1], [0], [0], [1], [0, 0, 1, 1], [], []>} : vector<8x8xf32>, vector<8x24xf32>, vector<8x24xf32> -> vector<8x24xf32>
    %356 = vector.extract_strided_slice %354 {offsets = [0, 0], sizes = [8, 8], strides = [1, 1]} : vector<8x24xf32> to vector<8x8xf32>
    %357 = vector.extract_strided_slice %355 {offsets = [0, 0], sizes = [8, 8], strides = [1, 1]} : vector<8x24xf32> to vector<8x8xf32>
    %358 = arith.addf %356, %357 : vector<8x8xf32>
    %359 = arith.negf %358 : vector<8x8xf32>
    %360 = math.exp %359 : vector<8x8xf32>
    %cst_68 = arith.constant 1.000000e+00 : f32
    %361 = vector.broadcast %cst_68 : f32 to vector<8x8xf32>
    %362 = arith.addf %361, %360 : vector<8x8xf32>
    %363 = arith.divf %361, %362 : vector<8x8xf32>
    %364 = vector.extract_strided_slice %354 {offsets = [0, 8], sizes = [8, 8], strides = [1, 1]} : vector<8x24xf32> to vector<8x8xf32>
    %365 = vector.extract_strided_slice %355 {offsets = [0, 8], sizes = [8, 8], strides = [1, 1]} : vector<8x24xf32> to vector<8x8xf32>
    %366 = arith.addf %364, %365 : vector<8x8xf32>
    %367 = arith.negf %366 : vector<8x8xf32>
    %368 = math.exp %367 : vector<8x8xf32>
    %cst_69 = arith.constant 1.000000e+00 : f32
    %369 = vector.broadcast %cst_69 : f32 to vector<8x8xf32>
    %370 = arith.addf %369, %368 : vector<8x8xf32>
    %371 = arith.divf %369, %370 : vector<8x8xf32>
    %372 = vector.extract_strided_slice %354 {offsets = [0, 16], sizes = [8, 8], strides = [1, 1]} : vector<8x24xf32> to vector<8x8xf32>
    %373 = vector.extract_strided_slice %355 {offsets = [0, 16], sizes = [8, 8], strides = [1, 1]} : vector<8x24xf32> to vector<8x8xf32>
    %374 = vector.broadcast %281 : vector<1x8xf32> to vector<8x8xf32>
    %375 = arith.addf %373, %374 : vector<8x8xf32>
    %376 = arith.mulf %363, %375 : vector<8x8xf32>
    %377 = arith.addf %372, %376 : vector<8x8xf32>
    %378 = math.tanh %377 : vector<8x8xf32>
    %379 = arith.subf %353, %378 : vector<8x8xf32>
    %380 = arith.mulf %371, %379 : vector<8x8xf32>
    %381 = arith.addf %378, %380 : vector<8x8xf32>
    %c16_70 = arith.constant 16 : index
    %c0_71 = arith.constant 0 : index
    %382 = vector.load %arg17[%c16_70, %c0_71] : memref<64x8xf32, #tpu.memory_space<vmem>>, vector<8x8xf32>
    tpu.vector_store %arg17[%c16_70, %c0_71], %381 {strides = array<i32>} : memref<64x8xf32, #tpu.memory_space<vmem>>, vector<8x8xf32>,
    %383 = vector.extract_strided_slice %0 {offsets = [16, 0], sizes = [8, 1], strides = [1, 1]} : vector<64x1xf32> to vector<8x1xf32>
    %384 = arith.subf %381, %353 : vector<8x8xf32>
    %385 = vector.broadcast %383 : vector<8x1xf32> to vector<8x8xf32>
    %386 = arith.mulf %385, %384 : vector<8x8xf32>
    %387 = arith.addf %353, %386 : vector<8x8xf32>
    %388 = vector.extract_strided_slice %284 {offsets = [24, 0], sizes = [8, 24], strides = [1, 1]} : vector<64x24xf32> to vector<8x24xf32>
    %cst_72 = arith.constant dense<0.000000e+00> : vector<8x24xf32>
    %389 = tpu.matmul %387, %279, %cst_72 {dimension_numbers = #tpu.dot_dimension_numbers<[1], [0], [0], [1], [0, 0, 1, 1], [], []>} : vector<8x8xf32>, vector<8x24xf32>, vector<8x24xf32> -> vector<8x24xf32>
    %390 = vector.extract_strided_slice %388 {offsets = [0, 0], sizes = [8, 8], strides = [1, 1]} : vector<8x24xf32> to vector<8x8xf32>
    %391 = vector.extract_strided_slice %389 {offsets = [0, 0], sizes = [8, 8], strides = [1, 1]} : vector<8x24xf32> to vector<8x8xf32>
    %392 = arith.addf %390, %391 : vector<8x8xf32>
    %393 = arith.negf %392 : vector<8x8xf32>
    %394 = math.exp %393 : vector<8x8xf32>
    %cst_73 = arith.constant 1.000000e+00 : f32
    %395 = vector.broadcast %cst_73 : f32 to vector<8x8xf32>
    %396 = arith.addf %395, %394 : vector<8x8xf32>
    %397 = arith.divf %395, %396 : vector<8x8xf32>
    %398 = vector.extract_strided_slice %388 {offsets = [0, 8], sizes = [8, 8], strides = [1, 1]} : vector<8x24xf32> to vector<8x8xf32>
    %399 = vector.extract_strided_slice %389 {offsets = [0, 8], sizes = [8, 8], strides = [1, 1]} : vector<8x24xf32> to vector<8x8xf32>
    %400 = arith.addf %398, %399 : vector<8x8xf32>
    %401 = arith.negf %400 : vector<8x8xf32>
    %402 = math.exp %401 : vector<8x8xf32>
    %cst_74 = arith.constant 1.000000e+00 : f32
    %403 = vector.broadcast %cst_74 : f32 to vector<8x8xf32>
    %404 = arith.addf %403, %402 : vector<8x8xf32>
    %405 = arith.divf %403, %404 : vector<8x8xf32>
    %406 = vector.extract_strided_slice %388 {offsets = [0, 16], sizes = [8, 8], strides = [1, 1]} : vector<8x24xf32> to vector<8x8xf32>
    %407 = vector.extract_strided_slice %389 {offsets = [0, 16], sizes = [8, 8], strides = [1, 1]} : vector<8x24xf32> to vector<8x8xf32>
    %408 = vector.broadcast %281 : vector<1x8xf32> to vector<8x8xf32>
    %409 = arith.addf %407, %408 : vector<8x8xf32>
    %410 = arith.mulf %397, %409 : vector<8x8xf32>
    %411 = arith.addf %406, %410 : vector<8x8xf32>
    %412 = math.tanh %411 : vector<8x8xf32>
    %413 = arith.subf %387, %412 : vector<8x8xf32>
    %414 = arith.mulf %405, %413 : vector<8x8xf32>
    %415 = arith.addf %412, %414 : vector<8x8xf32>
    %c24_75 = arith.constant 24 : index
    %c0_76 = arith.constant 0 : index
    %416 = vector.load %arg17[%c24_75, %c0_76] : memref<64x8xf32, #tpu.memory_space<vmem>>, vector<8x8xf32>
    tpu.vector_store %arg17[%c24_75, %c0_76], %415 {strides = array<i32>} : memref<64x8xf32, #tpu.memory_space<vmem>>, vector<8x8xf32>,
    %417 = vector.extract_strided_slice %0 {offsets = [24, 0], sizes = [8, 1], strides = [1, 1]} : vector<64x1xf32> to vector<8x1xf32>
    %418 = arith.subf %415, %387 : vector<8x8xf32>
    %419 = vector.broadcast %417 : vector<8x1xf32> to vector<8x8xf32>
    %420 = arith.mulf %419, %418 : vector<8x8xf32>
    %421 = arith.addf %387, %420 : vector<8x8xf32>
    %422 = vector.extract_strided_slice %284 {offsets = [32, 0], sizes = [8, 24], strides = [1, 1]} : vector<64x24xf32> to vector<8x24xf32>
    %cst_77 = arith.constant dense<0.000000e+00> : vector<8x24xf32>
    %423 = tpu.matmul %421, %279, %cst_77 {dimension_numbers = #tpu.dot_dimension_numbers<[1], [0], [0], [1], [0, 0, 1, 1], [], []>} : vector<8x8xf32>, vector<8x24xf32>, vector<8x24xf32> -> vector<8x24xf32>
    %424 = vector.extract_strided_slice %422 {offsets = [0, 0], sizes = [8, 8], strides = [1, 1]} : vector<8x24xf32> to vector<8x8xf32>
    %425 = vector.extract_strided_slice %423 {offsets = [0, 0], sizes = [8, 8], strides = [1, 1]} : vector<8x24xf32> to vector<8x8xf32>
    %426 = arith.addf %424, %425 : vector<8x8xf32>
    %427 = arith.negf %426 : vector<8x8xf32>
    %428 = math.exp %427 : vector<8x8xf32>
    %cst_78 = arith.constant 1.000000e+00 : f32
    %429 = vector.broadcast %cst_78 : f32 to vector<8x8xf32>
    %430 = arith.addf %429, %428 : vector<8x8xf32>
    %431 = arith.divf %429, %430 : vector<8x8xf32>
    %432 = vector.extract_strided_slice %422 {offsets = [0, 8], sizes = [8, 8], strides = [1, 1]} : vector<8x24xf32> to vector<8x8xf32>
    %433 = vector.extract_strided_slice %423 {offsets = [0, 8], sizes = [8, 8], strides = [1, 1]} : vector<8x24xf32> to vector<8x8xf32>
    %434 = arith.addf %432, %433 : vector<8x8xf32>
    %435 = arith.negf %434 : vector<8x8xf32>
    %436 = math.exp %435 : vector<8x8xf32>
    %cst_79 = arith.constant 1.000000e+00 : f32
    %437 = vector.broadcast %cst_79 : f32 to vector<8x8xf32>
    %438 = arith.addf %437, %436 : vector<8x8xf32>
    %439 = arith.divf %437, %438 : vector<8x8xf32>
    %440 = vector.extract_strided_slice %422 {offsets = [0, 16], sizes = [8, 8], strides = [1, 1]} : vector<8x24xf32> to vector<8x8xf32>
    %441 = vector.extract_strided_slice %423 {offsets = [0, 16], sizes = [8, 8], strides = [1, 1]} : vector<8x24xf32> to vector<8x8xf32>
    %442 = vector.broadcast %281 : vector<1x8xf32> to vector<8x8xf32>
    %443 = arith.addf %441, %442 : vector<8x8xf32>
    %444 = arith.mulf %431, %443 : vector<8x8xf32>
    %445 = arith.addf %440, %444 : vector<8x8xf32>
    %446 = math.tanh %445 : vector<8x8xf32>
    %447 = arith.subf %421, %446 : vector<8x8xf32>
    %448 = arith.mulf %439, %447 : vector<8x8xf32>
    %449 = arith.addf %446, %448 : vector<8x8xf32>
    %c32_80 = arith.constant 32 : index
    %c0_81 = arith.constant 0 : index
    %450 = vector.load %arg17[%c32_80, %c0_81] : memref<64x8xf32, #tpu.memory_space<vmem>>, vector<8x8xf32>
    tpu.vector_store %arg17[%c32_80, %c0_81], %449 {strides = array<i32>} : memref<64x8xf32, #tpu.memory_space<vmem>>, vector<8x8xf32>,
    %451 = vector.extract_strided_slice %0 {offsets = [32, 0], sizes = [8, 1], strides = [1, 1]} : vector<64x1xf32> to vector<8x1xf32>
    %452 = arith.subf %449, %421 : vector<8x8xf32>
    %453 = vector.broadcast %451 : vector<8x1xf32> to vector<8x8xf32>
    %454 = arith.mulf %453, %452 : vector<8x8xf32>
    %455 = arith.addf %421, %454 : vector<8x8xf32>
    %456 = vector.extract_strided_slice %284 {offsets = [40, 0], sizes = [8, 24], strides = [1, 1]} : vector<64x24xf32> to vector<8x24xf32>
    %cst_82 = arith.constant dense<0.000000e+00> : vector<8x24xf32>
    %457 = tpu.matmul %455, %279, %cst_82 {dimension_numbers = #tpu.dot_dimension_numbers<[1], [0], [0], [1], [0, 0, 1, 1], [], []>} : vector<8x8xf32>, vector<8x24xf32>, vector<8x24xf32> -> vector<8x24xf32>
    %458 = vector.extract_strided_slice %456 {offsets = [0, 0], sizes = [8, 8], strides = [1, 1]} : vector<8x24xf32> to vector<8x8xf32>
    %459 = vector.extract_strided_slice %457 {offsets = [0, 0], sizes = [8, 8], strides = [1, 1]} : vector<8x24xf32> to vector<8x8xf32>
    %460 = arith.addf %458, %459 : vector<8x8xf32>
    %461 = arith.negf %460 : vector<8x8xf32>
    %462 = math.exp %461 : vector<8x8xf32>
    %cst_83 = arith.constant 1.000000e+00 : f32
    %463 = vector.broadcast %cst_83 : f32 to vector<8x8xf32>
    %464 = arith.addf %463, %462 : vector<8x8xf32>
    %465 = arith.divf %463, %464 : vector<8x8xf32>
    %466 = vector.extract_strided_slice %456 {offsets = [0, 8], sizes = [8, 8], strides = [1, 1]} : vector<8x24xf32> to vector<8x8xf32>
    %467 = vector.extract_strided_slice %457 {offsets = [0, 8], sizes = [8, 8], strides = [1, 1]} : vector<8x24xf32> to vector<8x8xf32>
    %468 = arith.addf %466, %467 : vector<8x8xf32>
    %469 = arith.negf %468 : vector<8x8xf32>
    %470 = math.exp %469 : vector<8x8xf32>
    %cst_84 = arith.constant 1.000000e+00 : f32
    %471 = vector.broadcast %cst_84 : f32 to vector<8x8xf32>
    %472 = arith.addf %471, %470 : vector<8x8xf32>
    %473 = arith.divf %471, %472 : vector<8x8xf32>
    %474 = vector.extract_strided_slice %456 {offsets = [0, 16], sizes = [8, 8], strides = [1, 1]} : vector<8x24xf32> to vector<8x8xf32>
    %475 = vector.extract_strided_slice %457 {offsets = [0, 16], sizes = [8, 8], strides = [1, 1]} : vector<8x24xf32> to vector<8x8xf32>
    %476 = vector.broadcast %281 : vector<1x8xf32> to vector<8x8xf32>
    %477 = arith.addf %475, %476 : vector<8x8xf32>
    %478 = arith.mulf %465, %477 : vector<8x8xf32>
    %479 = arith.addf %474, %478 : vector<8x8xf32>
    %480 = math.tanh %479 : vector<8x8xf32>
    %481 = arith.subf %455, %480 : vector<8x8xf32>
    %482 = arith.mulf %473, %481 : vector<8x8xf32>
    %483 = arith.addf %480, %482 : vector<8x8xf32>
    %c40_85 = arith.constant 40 : index
    %c0_86 = arith.constant 0 : index
    %484 = vector.load %arg17[%c40_85, %c0_86] : memref<64x8xf32, #tpu.memory_space<vmem>>, vector<8x8xf32>
    tpu.vector_store %arg17[%c40_85, %c0_86], %483 {strides = array<i32>} : memref<64x8xf32, #tpu.memory_space<vmem>>, vector<8x8xf32>,
    %485 = vector.extract_strided_slice %0 {offsets = [40, 0], sizes = [8, 1], strides = [1, 1]} : vector<64x1xf32> to vector<8x1xf32>
    %486 = arith.subf %483, %455 : vector<8x8xf32>
    %487 = vector.broadcast %485 : vector<8x1xf32> to vector<8x8xf32>
    %488 = arith.mulf %487, %486 : vector<8x8xf32>
    %489 = arith.addf %455, %488 : vector<8x8xf32>
    %490 = vector.extract_strided_slice %284 {offsets = [48, 0], sizes = [8, 24], strides = [1, 1]} : vector<64x24xf32> to vector<8x24xf32>
    %cst_87 = arith.constant dense<0.000000e+00> : vector<8x24xf32>
    %491 = tpu.matmul %489, %279, %cst_87 {dimension_numbers = #tpu.dot_dimension_numbers<[1], [0], [0], [1], [0, 0, 1, 1], [], []>} : vector<8x8xf32>, vector<8x24xf32>, vector<8x24xf32> -> vector<8x24xf32>
    %492 = vector.extract_strided_slice %490 {offsets = [0, 0], sizes = [8, 8], strides = [1, 1]} : vector<8x24xf32> to vector<8x8xf32>
    %493 = vector.extract_strided_slice %491 {offsets = [0, 0], sizes = [8, 8], strides = [1, 1]} : vector<8x24xf32> to vector<8x8xf32>
    %494 = arith.addf %492, %493 : vector<8x8xf32>
    %495 = arith.negf %494 : vector<8x8xf32>
    %496 = math.exp %495 : vector<8x8xf32>
    %cst_88 = arith.constant 1.000000e+00 : f32
    %497 = vector.broadcast %cst_88 : f32 to vector<8x8xf32>
    %498 = arith.addf %497, %496 : vector<8x8xf32>
    %499 = arith.divf %497, %498 : vector<8x8xf32>
    %500 = vector.extract_strided_slice %490 {offsets = [0, 8], sizes = [8, 8], strides = [1, 1]} : vector<8x24xf32> to vector<8x8xf32>
    %501 = vector.extract_strided_slice %491 {offsets = [0, 8], sizes = [8, 8], strides = [1, 1]} : vector<8x24xf32> to vector<8x8xf32>
    %502 = arith.addf %500, %501 : vector<8x8xf32>
    %503 = arith.negf %502 : vector<8x8xf32>
    %504 = math.exp %503 : vector<8x8xf32>
    %cst_89 = arith.constant 1.000000e+00 : f32
    %505 = vector.broadcast %cst_89 : f32 to vector<8x8xf32>
    %506 = arith.addf %505, %504 : vector<8x8xf32>
    %507 = arith.divf %505, %506 : vector<8x8xf32>
    %508 = vector.extract_strided_slice %490 {offsets = [0, 16], sizes = [8, 8], strides = [1, 1]} : vector<8x24xf32> to vector<8x8xf32>
    %509 = vector.extract_strided_slice %491 {offsets = [0, 16], sizes = [8, 8], strides = [1, 1]} : vector<8x24xf32> to vector<8x8xf32>
    %510 = vector.broadcast %281 : vector<1x8xf32> to vector<8x8xf32>
    %511 = arith.addf %509, %510 : vector<8x8xf32>
    %512 = arith.mulf %499, %511 : vector<8x8xf32>
    %513 = arith.addf %508, %512 : vector<8x8xf32>
    %514 = math.tanh %513 : vector<8x8xf32>
    %515 = arith.subf %489, %514 : vector<8x8xf32>
    %516 = arith.mulf %507, %515 : vector<8x8xf32>
    %517 = arith.addf %514, %516 : vector<8x8xf32>
    %c48_90 = arith.constant 48 : index
    %c0_91 = arith.constant 0 : index
    %518 = vector.load %arg17[%c48_90, %c0_91] : memref<64x8xf32, #tpu.memory_space<vmem>>, vector<8x8xf32>
    tpu.vector_store %arg17[%c48_90, %c0_91], %517 {strides = array<i32>} : memref<64x8xf32, #tpu.memory_space<vmem>>, vector<8x8xf32>,
    %519 = vector.extract_strided_slice %0 {offsets = [48, 0], sizes = [8, 1], strides = [1, 1]} : vector<64x1xf32> to vector<8x1xf32>
    %520 = arith.subf %517, %489 : vector<8x8xf32>
    %521 = vector.broadcast %519 : vector<8x1xf32> to vector<8x8xf32>
    %522 = arith.mulf %521, %520 : vector<8x8xf32>
    %523 = arith.addf %489, %522 : vector<8x8xf32>
    %524 = vector.extract_strided_slice %284 {offsets = [56, 0], sizes = [8, 24], strides = [1, 1]} : vector<64x24xf32> to vector<8x24xf32>
    %cst_92 = arith.constant dense<0.000000e+00> : vector<8x24xf32>
    %525 = tpu.matmul %523, %279, %cst_92 {dimension_numbers = #tpu.dot_dimension_numbers<[1], [0], [0], [1], [0, 0, 1, 1], [], []>} : vector<8x8xf32>, vector<8x24xf32>, vector<8x24xf32> -> vector<8x24xf32>
    %526 = vector.extract_strided_slice %524 {offsets = [0, 0], sizes = [8, 8], strides = [1, 1]} : vector<8x24xf32> to vector<8x8xf32>
    %527 = vector.extract_strided_slice %525 {offsets = [0, 0], sizes = [8, 8], strides = [1, 1]} : vector<8x24xf32> to vector<8x8xf32>
    %528 = arith.addf %526, %527 : vector<8x8xf32>
    %529 = arith.negf %528 : vector<8x8xf32>
    %530 = math.exp %529 : vector<8x8xf32>
    %cst_93 = arith.constant 1.000000e+00 : f32
    %531 = vector.broadcast %cst_93 : f32 to vector<8x8xf32>
    %532 = arith.addf %531, %530 : vector<8x8xf32>
    %533 = arith.divf %531, %532 : vector<8x8xf32>
    %534 = vector.extract_strided_slice %524 {offsets = [0, 8], sizes = [8, 8], strides = [1, 1]} : vector<8x24xf32> to vector<8x8xf32>
    %535 = vector.extract_strided_slice %525 {offsets = [0, 8], sizes = [8, 8], strides = [1, 1]} : vector<8x24xf32> to vector<8x8xf32>
    %536 = arith.addf %534, %535 : vector<8x8xf32>
    %537 = arith.negf %536 : vector<8x8xf32>
    %538 = math.exp %537 : vector<8x8xf32>
    %cst_94 = arith.constant 1.000000e+00 : f32
    %539 = vector.broadcast %cst_94 : f32 to vector<8x8xf32>
    %540 = arith.addf %539, %538 : vector<8x8xf32>
    %541 = arith.divf %539, %540 : vector<8x8xf32>
    %542 = vector.extract_strided_slice %524 {offsets = [0, 16], sizes = [8, 8], strides = [1, 1]} : vector<8x24xf32> to vector<8x8xf32>
    %543 = vector.extract_strided_slice %525 {offsets = [0, 16], sizes = [8, 8], strides = [1, 1]} : vector<8x24xf32> to vector<8x8xf32>
    %544 = vector.broadcast %281 : vector<1x8xf32> to vector<8x8xf32>
    %545 = arith.addf %543, %544 : vector<8x8xf32>
    %546 = arith.mulf %533, %545 : vector<8x8xf32>
    %547 = arith.addf %542, %546 : vector<8x8xf32>
    %548 = math.tanh %547 : vector<8x8xf32>
    %549 = arith.subf %523, %548 : vector<8x8xf32>
    %550 = arith.mulf %541, %549 : vector<8x8xf32>
    %551 = arith.addf %548, %550 : vector<8x8xf32>
    %c56_95 = arith.constant 56 : index
    %c0_96 = arith.constant 0 : index
    %552 = vector.load %arg17[%c56_95, %c0_96] : memref<64x8xf32, #tpu.memory_space<vmem>>, vector<8x8xf32>
    tpu.vector_store %arg17[%c56_95, %c0_96], %551 {strides = array<i32>} : memref<64x8xf32, #tpu.memory_space<vmem>>, vector<8x8xf32>,
    %c0_97 = arith.constant 0 : index
    %c0_98 = arith.constant 0 : index
    %553 = vector.load %arg17[%c0_97, %c0_98] : memref<64x8xf32, #tpu.memory_space<vmem>>, vector<64x8xf32>
    %c0_99 = arith.constant 0 : index
    %c0_100 = arith.constant 0 : index
    %554 = vector.load %arg10[%c0_99, %c0_100] : memref<8x24xf32, #tpu.memory_space<vmem>>, vector<8x24xf32>
    %c0_101 = arith.constant 0 : index
    %c0_102 = arith.constant 0 : index
    %555 = vector.load %arg11[%c0_101, %c0_102] : memref<8x24xf32, #tpu.memory_space<vmem>>, vector<8x24xf32>
    %c0_103 = arith.constant 0 : index
    %c0_104 = arith.constant 0 : index
    %556 = vector.load %arg12[%c0_103, %c0_104] : memref<1x24xf32, #tpu.memory_space<vmem>>, vector<1x24xf32>
    %c0_105 = arith.constant 0 : index
    %c0_106 = arith.constant 0 : index
    %557 = vector.load %arg13[%c0_105, %c0_106] : memref<1x8xf32, #tpu.memory_space<vmem>>, vector<1x8xf32>
    %cst_107 = arith.constant dense<0.000000e+00> : vector<64x24xf32>
    %558 = tpu.matmul %553, %554, %cst_107 {dimension_numbers = #tpu.dot_dimension_numbers<[1], [0], [0], [1], [0, 0, 1, 1], [], []>} : vector<64x8xf32>, vector<8x24xf32>, vector<64x24xf32> -> vector<64x24xf32>
    %559 = vector.broadcast %556 : vector<1x24xf32> to vector<64x24xf32>
    %560 = arith.addf %558, %559 : vector<64x24xf32>
    %cst_108 = arith.constant 0.000000e+00 : f32
    %561 = vector.broadcast %cst_108 : f32 to vector<8x8xf32>
    %562 = vector.extract_strided_slice %560 {offsets = [0, 0], sizes = [8, 24], strides = [1, 1]} : vector<64x24xf32> to vector<8x24xf32>
    %cst_109 = arith.constant dense<0.000000e+00> : vector<8x24xf32>
    %563 = tpu.matmul %561, %555, %cst_109 {dimension_numbers = #tpu.dot_dimension_numbers<[1], [0], [0], [1], [0, 0, 1, 1], [], []>} : vector<8x8xf32>, vector<8x24xf32>, vector<8x24xf32> -> vector<8x24xf32>
    %564 = vector.extract_strided_slice %562 {offsets = [0, 0], sizes = [8, 8], strides = [1, 1]} : vector<8x24xf32> to vector<8x8xf32>
    %565 = vector.extract_strided_slice %563 {offsets = [0, 0], sizes = [8, 8], strides = [1, 1]} : vector<8x24xf32> to vector<8x8xf32>
    %566 = arith.addf %564, %565 : vector<8x8xf32>
    %567 = arith.negf %566 : vector<8x8xf32>
    %568 = math.exp %567 : vector<8x8xf32>
    %cst_110 = arith.constant 1.000000e+00 : f32
    %569 = vector.broadcast %cst_110 : f32 to vector<8x8xf32>
    %570 = arith.addf %569, %568 : vector<8x8xf32>
    %571 = arith.divf %569, %570 : vector<8x8xf32>
    %572 = vector.extract_strided_slice %562 {offsets = [0, 8], sizes = [8, 8], strides = [1, 1]} : vector<8x24xf32> to vector<8x8xf32>
    %573 = vector.extract_strided_slice %563 {offsets = [0, 8], sizes = [8, 8], strides = [1, 1]} : vector<8x24xf32> to vector<8x8xf32>
    %574 = arith.addf %572, %573 : vector<8x8xf32>
    %575 = arith.negf %574 : vector<8x8xf32>
    %576 = math.exp %575 : vector<8x8xf32>
    %cst_111 = arith.constant 1.000000e+00 : f32
    %577 = vector.broadcast %cst_111 : f32 to vector<8x8xf32>
    %578 = arith.addf %577, %576 : vector<8x8xf32>
    %579 = arith.divf %577, %578 : vector<8x8xf32>
    %580 = vector.extract_strided_slice %562 {offsets = [0, 16], sizes = [8, 8], strides = [1, 1]} : vector<8x24xf32> to vector<8x8xf32>
    %581 = vector.extract_strided_slice %563 {offsets = [0, 16], sizes = [8, 8], strides = [1, 1]} : vector<8x24xf32> to vector<8x8xf32>
    %582 = vector.broadcast %557 : vector<1x8xf32> to vector<8x8xf32>
    %583 = arith.addf %581, %582 : vector<8x8xf32>
    %584 = arith.mulf %571, %583 : vector<8x8xf32>
    %585 = arith.addf %580, %584 : vector<8x8xf32>
    %586 = math.tanh %585 : vector<8x8xf32>
    %587 = arith.subf %561, %586 : vector<8x8xf32>
    %588 = arith.mulf %579, %587 : vector<8x8xf32>
    %589 = arith.addf %586, %588 : vector<8x8xf32>
    %c0_112 = arith.constant 0 : index
    %c0_113 = arith.constant 0 : index
    %590 = vector.load %arg17[%c0_112, %c0_113] : memref<64x8xf32, #tpu.memory_space<vmem>>, vector<8x8xf32>
    tpu.vector_store %arg17[%c0_112, %c0_113], %589 {strides = array<i32>} : memref<64x8xf32, #tpu.memory_space<vmem>>, vector<8x8xf32>,
    %591 = vector.extract_strided_slice %0 {offsets = [0, 0], sizes = [8, 1], strides = [1, 1]} : vector<64x1xf32> to vector<8x1xf32>
    %592 = arith.subf %589, %561 : vector<8x8xf32>
    %593 = vector.broadcast %591 : vector<8x1xf32> to vector<8x8xf32>
    %594 = arith.mulf %593, %592 : vector<8x8xf32>
    %595 = arith.addf %561, %594 : vector<8x8xf32>
    %596 = vector.extract_strided_slice %560 {offsets = [8, 0], sizes = [8, 24], strides = [1, 1]} : vector<64x24xf32> to vector<8x24xf32>
    %cst_114 = arith.constant dense<0.000000e+00> : vector<8x24xf32>
    %597 = tpu.matmul %595, %555, %cst_114 {dimension_numbers = #tpu.dot_dimension_numbers<[1], [0], [0], [1], [0, 0, 1, 1], [], []>} : vector<8x8xf32>, vector<8x24xf32>, vector<8x24xf32> -> vector<8x24xf32>
    %598 = vector.extract_strided_slice %596 {offsets = [0, 0], sizes = [8, 8], strides = [1, 1]} : vector<8x24xf32> to vector<8x8xf32>
    %599 = vector.extract_strided_slice %597 {offsets = [0, 0], sizes = [8, 8], strides = [1, 1]} : vector<8x24xf32> to vector<8x8xf32>
    %600 = arith.addf %598, %599 : vector<8x8xf32>
    %601 = arith.negf %600 : vector<8x8xf32>
    %602 = math.exp %601 : vector<8x8xf32>
    %cst_115 = arith.constant 1.000000e+00 : f32
    %603 = vector.broadcast %cst_115 : f32 to vector<8x8xf32>
    %604 = arith.addf %603, %602 : vector<8x8xf32>
    %605 = arith.divf %603, %604 : vector<8x8xf32>
    %606 = vector.extract_strided_slice %596 {offsets = [0, 8], sizes = [8, 8], strides = [1, 1]} : vector<8x24xf32> to vector<8x8xf32>
    %607 = vector.extract_strided_slice %597 {offsets = [0, 8], sizes = [8, 8], strides = [1, 1]} : vector<8x24xf32> to vector<8x8xf32>
    %608 = arith.addf %606, %607 : vector<8x8xf32>
    %609 = arith.negf %608 : vector<8x8xf32>
    %610 = math.exp %609 : vector<8x8xf32>
    %cst_116 = arith.constant 1.000000e+00 : f32
    %611 = vector.broadcast %cst_116 : f32 to vector<8x8xf32>
    %612 = arith.addf %611, %610 : vector<8x8xf32>
    %613 = arith.divf %611, %612 : vector<8x8xf32>
    %614 = vector.extract_strided_slice %596 {offsets = [0, 16], sizes = [8, 8], strides = [1, 1]} : vector<8x24xf32> to vector<8x8xf32>
    %615 = vector.extract_strided_slice %597 {offsets = [0, 16], sizes = [8, 8], strides = [1, 1]} : vector<8x24xf32> to vector<8x8xf32>
    %616 = vector.broadcast %557 : vector<1x8xf32> to vector<8x8xf32>
    %617 = arith.addf %615, %616 : vector<8x8xf32>
    %618 = arith.mulf %605, %617 : vector<8x8xf32>
    %619 = arith.addf %614, %618 : vector<8x8xf32>
    %620 = math.tanh %619 : vector<8x8xf32>
    %621 = arith.subf %595, %620 : vector<8x8xf32>
    %622 = arith.mulf %613, %621 : vector<8x8xf32>
    %623 = arith.addf %620, %622 : vector<8x8xf32>
    %c8_117 = arith.constant 8 : index
    %c0_118 = arith.constant 0 : index
    %624 = vector.load %arg17[%c8_117, %c0_118] : memref<64x8xf32, #tpu.memory_space<vmem>>, vector<8x8xf32>
    tpu.vector_store %arg17[%c8_117, %c0_118], %623 {strides = array<i32>} : memref<64x8xf32, #tpu.memory_space<vmem>>, vector<8x8xf32>,
    %625 = vector.extract_strided_slice %0 {offsets = [8, 0], sizes = [8, 1], strides = [1, 1]} : vector<64x1xf32> to vector<8x1xf32>
    %626 = arith.subf %623, %595 : vector<8x8xf32>
    %627 = vector.broadcast %625 : vector<8x1xf32> to vector<8x8xf32>
    %628 = arith.mulf %627, %626 : vector<8x8xf32>
    %629 = arith.addf %595, %628 : vector<8x8xf32>
    %630 = vector.extract_strided_slice %560 {offsets = [16, 0], sizes = [8, 24], strides = [1, 1]} : vector<64x24xf32> to vector<8x24xf32>
    %cst_119 = arith.constant dense<0.000000e+00> : vector<8x24xf32>
    %631 = tpu.matmul %629, %555, %cst_119 {dimension_numbers = #tpu.dot_dimension_numbers<[1], [0], [0], [1], [0, 0, 1, 1], [], []>} : vector<8x8xf32>, vector<8x24xf32>, vector<8x24xf32> -> vector<8x24xf32>
    %632 = vector.extract_strided_slice %630 {offsets = [0, 0], sizes = [8, 8], strides = [1, 1]} : vector<8x24xf32> to vector<8x8xf32>
    %633 = vector.extract_strided_slice %631 {offsets = [0, 0], sizes = [8, 8], strides = [1, 1]} : vector<8x24xf32> to vector<8x8xf32>
    %634 = arith.addf %632, %633 : vector<8x8xf32>
    %635 = arith.negf %634 : vector<8x8xf32>
    %636 = math.exp %635 : vector<8x8xf32>
    %cst_120 = arith.constant 1.000000e+00 : f32
    %637 = vector.broadcast %cst_120 : f32 to vector<8x8xf32>
    %638 = arith.addf %637, %636 : vector<8x8xf32>
    %639 = arith.divf %637, %638 : vector<8x8xf32>
    %640 = vector.extract_strided_slice %630 {offsets = [0, 8], sizes = [8, 8], strides = [1, 1]} : vector<8x24xf32> to vector<8x8xf32>
    %641 = vector.extract_strided_slice %631 {offsets = [0, 8], sizes = [8, 8], strides = [1, 1]} : vector<8x24xf32> to vector<8x8xf32>
    %642 = arith.addf %640, %641 : vector<8x8xf32>
    %643 = arith.negf %642 : vector<8x8xf32>
    %644 = math.exp %643 : vector<8x8xf32>
    %cst_121 = arith.constant 1.000000e+00 : f32
    %645 = vector.broadcast %cst_121 : f32 to vector<8x8xf32>
    %646 = arith.addf %645, %644 : vector<8x8xf32>
    %647 = arith.divf %645, %646 : vector<8x8xf32>
    %648 = vector.extract_strided_slice %630 {offsets = [0, 16], sizes = [8, 8], strides = [1, 1]} : vector<8x24xf32> to vector<8x8xf32>
    %649 = vector.extract_strided_slice %631 {offsets = [0, 16], sizes = [8, 8], strides = [1, 1]} : vector<8x24xf32> to vector<8x8xf32>
    %650 = vector.broadcast %557 : vector<1x8xf32> to vector<8x8xf32>
    %651 = arith.addf %649, %650 : vector<8x8xf32>
    %652 = arith.mulf %639, %651 : vector<8x8xf32>
    %653 = arith.addf %648, %652 : vector<8x8xf32>
    %654 = math.tanh %653 : vector<8x8xf32>
    %655 = arith.subf %629, %654 : vector<8x8xf32>
    %656 = arith.mulf %647, %655 : vector<8x8xf32>
    %657 = arith.addf %654, %656 : vector<8x8xf32>
    %c16_122 = arith.constant 16 : index
    %c0_123 = arith.constant 0 : index
    %658 = vector.load %arg17[%c16_122, %c0_123] : memref<64x8xf32, #tpu.memory_space<vmem>>, vector<8x8xf32>
    tpu.vector_store %arg17[%c16_122, %c0_123], %657 {strides = array<i32>} : memref<64x8xf32, #tpu.memory_space<vmem>>, vector<8x8xf32>,
    %659 = vector.extract_strided_slice %0 {offsets = [16, 0], sizes = [8, 1], strides = [1, 1]} : vector<64x1xf32> to vector<8x1xf32>
    %660 = arith.subf %657, %629 : vector<8x8xf32>
    %661 = vector.broadcast %659 : vector<8x1xf32> to vector<8x8xf32>
    %662 = arith.mulf %661, %660 : vector<8x8xf32>
    %663 = arith.addf %629, %662 : vector<8x8xf32>
    %664 = vector.extract_strided_slice %560 {offsets = [24, 0], sizes = [8, 24], strides = [1, 1]} : vector<64x24xf32> to vector<8x24xf32>
    %cst_124 = arith.constant dense<0.000000e+00> : vector<8x24xf32>
    %665 = tpu.matmul %663, %555, %cst_124 {dimension_numbers = #tpu.dot_dimension_numbers<[1], [0], [0], [1], [0, 0, 1, 1], [], []>} : vector<8x8xf32>, vector<8x24xf32>, vector<8x24xf32> -> vector<8x24xf32>
    %666 = vector.extract_strided_slice %664 {offsets = [0, 0], sizes = [8, 8], strides = [1, 1]} : vector<8x24xf32> to vector<8x8xf32>
    %667 = vector.extract_strided_slice %665 {offsets = [0, 0], sizes = [8, 8], strides = [1, 1]} : vector<8x24xf32> to vector<8x8xf32>
    %668 = arith.addf %666, %667 : vector<8x8xf32>
    %669 = arith.negf %668 : vector<8x8xf32>
    %670 = math.exp %669 : vector<8x8xf32>
    %cst_125 = arith.constant 1.000000e+00 : f32
    %671 = vector.broadcast %cst_125 : f32 to vector<8x8xf32>
    %672 = arith.addf %671, %670 : vector<8x8xf32>
    %673 = arith.divf %671, %672 : vector<8x8xf32>
    %674 = vector.extract_strided_slice %664 {offsets = [0, 8], sizes = [8, 8], strides = [1, 1]} : vector<8x24xf32> to vector<8x8xf32>
    %675 = vector.extract_strided_slice %665 {offsets = [0, 8], sizes = [8, 8], strides = [1, 1]} : vector<8x24xf32> to vector<8x8xf32>
    %676 = arith.addf %674, %675 : vector<8x8xf32>
    %677 = arith.negf %676 : vector<8x8xf32>
    %678 = math.exp %677 : vector<8x8xf32>
    %cst_126 = arith.constant 1.000000e+00 : f32
    %679 = vector.broadcast %cst_126 : f32 to vector<8x8xf32>
    %680 = arith.addf %679, %678 : vector<8x8xf32>
    %681 = arith.divf %679, %680 : vector<8x8xf32>
    %682 = vector.extract_strided_slice %664 {offsets = [0, 16], sizes = [8, 8], strides = [1, 1]} : vector<8x24xf32> to vector<8x8xf32>
    %683 = vector.extract_strided_slice %665 {offsets = [0, 16], sizes = [8, 8], strides = [1, 1]} : vector<8x24xf32> to vector<8x8xf32>
    %684 = vector.broadcast %557 : vector<1x8xf32> to vector<8x8xf32>
    %685 = arith.addf %683, %684 : vector<8x8xf32>
    %686 = arith.mulf %673, %685 : vector<8x8xf32>
    %687 = arith.addf %682, %686 : vector<8x8xf32>
    %688 = math.tanh %687 : vector<8x8xf32>
    %689 = arith.subf %663, %688 : vector<8x8xf32>
    %690 = arith.mulf %681, %689 : vector<8x8xf32>
    %691 = arith.addf %688, %690 : vector<8x8xf32>
    %c24_127 = arith.constant 24 : index
    %c0_128 = arith.constant 0 : index
    %692 = vector.load %arg17[%c24_127, %c0_128] : memref<64x8xf32, #tpu.memory_space<vmem>>, vector<8x8xf32>
    tpu.vector_store %arg17[%c24_127, %c0_128], %691 {strides = array<i32>} : memref<64x8xf32, #tpu.memory_space<vmem>>, vector<8x8xf32>,
    %693 = vector.extract_strided_slice %0 {offsets = [24, 0], sizes = [8, 1], strides = [1, 1]} : vector<64x1xf32> to vector<8x1xf32>
    %694 = arith.subf %691, %663 : vector<8x8xf32>
    %695 = vector.broadcast %693 : vector<8x1xf32> to vector<8x8xf32>
    %696 = arith.mulf %695, %694 : vector<8x8xf32>
    %697 = arith.addf %663, %696 : vector<8x8xf32>
    %698 = vector.extract_strided_slice %560 {offsets = [32, 0], sizes = [8, 24], strides = [1, 1]} : vector<64x24xf32> to vector<8x24xf32>
    %cst_129 = arith.constant dense<0.000000e+00> : vector<8x24xf32>
    %699 = tpu.matmul %697, %555, %cst_129 {dimension_numbers = #tpu.dot_dimension_numbers<[1], [0], [0], [1], [0, 0, 1, 1], [], []>} : vector<8x8xf32>, vector<8x24xf32>, vector<8x24xf32> -> vector<8x24xf32>
    %700 = vector.extract_strided_slice %698 {offsets = [0, 0], sizes = [8, 8], strides = [1, 1]} : vector<8x24xf32> to vector<8x8xf32>
    %701 = vector.extract_strided_slice %699 {offsets = [0, 0], sizes = [8, 8], strides = [1, 1]} : vector<8x24xf32> to vector<8x8xf32>
    %702 = arith.addf %700, %701 : vector<8x8xf32>
    %703 = arith.negf %702 : vector<8x8xf32>
    %704 = math.exp %703 : vector<8x8xf32>
    %cst_130 = arith.constant 1.000000e+00 : f32
    %705 = vector.broadcast %cst_130 : f32 to vector<8x8xf32>
    %706 = arith.addf %705, %704 : vector<8x8xf32>
    %707 = arith.divf %705, %706 : vector<8x8xf32>
    %708 = vector.extract_strided_slice %698 {offsets = [0, 8], sizes = [8, 8], strides = [1, 1]} : vector<8x24xf32> to vector<8x8xf32>
    %709 = vector.extract_strided_slice %699 {offsets = [0, 8], sizes = [8, 8], strides = [1, 1]} : vector<8x24xf32> to vector<8x8xf32>
    %710 = arith.addf %708, %709 : vector<8x8xf32>
    %711 = arith.negf %710 : vector<8x8xf32>
    %712 = math.exp %711 : vector<8x8xf32>
    %cst_131 = arith.constant 1.000000e+00 : f32
    %713 = vector.broadcast %cst_131 : f32 to vector<8x8xf32>
    %714 = arith.addf %713, %712 : vector<8x8xf32>
    %715 = arith.divf %713, %714 : vector<8x8xf32>
    %716 = vector.extract_strided_slice %698 {offsets = [0, 16], sizes = [8, 8], strides = [1, 1]} : vector<8x24xf32> to vector<8x8xf32>
    %717 = vector.extract_strided_slice %699 {offsets = [0, 16], sizes = [8, 8], strides = [1, 1]} : vector<8x24xf32> to vector<8x8xf32>
    %718 = vector.broadcast %557 : vector<1x8xf32> to vector<8x8xf32>
    %719 = arith.addf %717, %718 : vector<8x8xf32>
    %720 = arith.mulf %707, %719 : vector<8x8xf32>
    %721 = arith.addf %716, %720 : vector<8x8xf32>
    %722 = math.tanh %721 : vector<8x8xf32>
    %723 = arith.subf %697, %722 : vector<8x8xf32>
    %724 = arith.mulf %715, %723 : vector<8x8xf32>
    %725 = arith.addf %722, %724 : vector<8x8xf32>
    %c32_132 = arith.constant 32 : index
    %c0_133 = arith.constant 0 : index
    %726 = vector.load %arg17[%c32_132, %c0_133] : memref<64x8xf32, #tpu.memory_space<vmem>>, vector<8x8xf32>
    tpu.vector_store %arg17[%c32_132, %c0_133], %725 {strides = array<i32>} : memref<64x8xf32, #tpu.memory_space<vmem>>, vector<8x8xf32>,
    %727 = vector.extract_strided_slice %0 {offsets = [32, 0], sizes = [8, 1], strides = [1, 1]} : vector<64x1xf32> to vector<8x1xf32>
    %728 = arith.subf %725, %697 : vector<8x8xf32>
    %729 = vector.broadcast %727 : vector<8x1xf32> to vector<8x8xf32>
    %730 = arith.mulf %729, %728 : vector<8x8xf32>
    %731 = arith.addf %697, %730 : vector<8x8xf32>
    %732 = vector.extract_strided_slice %560 {offsets = [40, 0], sizes = [8, 24], strides = [1, 1]} : vector<64x24xf32> to vector<8x24xf32>
    %cst_134 = arith.constant dense<0.000000e+00> : vector<8x24xf32>
    %733 = tpu.matmul %731, %555, %cst_134 {dimension_numbers = #tpu.dot_dimension_numbers<[1], [0], [0], [1], [0, 0, 1, 1], [], []>} : vector<8x8xf32>, vector<8x24xf32>, vector<8x24xf32> -> vector<8x24xf32>
    %734 = vector.extract_strided_slice %732 {offsets = [0, 0], sizes = [8, 8], strides = [1, 1]} : vector<8x24xf32> to vector<8x8xf32>
    %735 = vector.extract_strided_slice %733 {offsets = [0, 0], sizes = [8, 8], strides = [1, 1]} : vector<8x24xf32> to vector<8x8xf32>
    %736 = arith.addf %734, %735 : vector<8x8xf32>
    %737 = arith.negf %736 : vector<8x8xf32>
    %738 = math.exp %737 : vector<8x8xf32>
    %cst_135 = arith.constant 1.000000e+00 : f32
    %739 = vector.broadcast %cst_135 : f32 to vector<8x8xf32>
    %740 = arith.addf %739, %738 : vector<8x8xf32>
    %741 = arith.divf %739, %740 : vector<8x8xf32>
    %742 = vector.extract_strided_slice %732 {offsets = [0, 8], sizes = [8, 8], strides = [1, 1]} : vector<8x24xf32> to vector<8x8xf32>
    %743 = vector.extract_strided_slice %733 {offsets = [0, 8], sizes = [8, 8], strides = [1, 1]} : vector<8x24xf32> to vector<8x8xf32>
    %744 = arith.addf %742, %743 : vector<8x8xf32>
    %745 = arith.negf %744 : vector<8x8xf32>
    %746 = math.exp %745 : vector<8x8xf32>
    %cst_136 = arith.constant 1.000000e+00 : f32
    %747 = vector.broadcast %cst_136 : f32 to vector<8x8xf32>
    %748 = arith.addf %747, %746 : vector<8x8xf32>
    %749 = arith.divf %747, %748 : vector<8x8xf32>
    %750 = vector.extract_strided_slice %732 {offsets = [0, 16], sizes = [8, 8], strides = [1, 1]} : vector<8x24xf32> to vector<8x8xf32>
    %751 = vector.extract_strided_slice %733 {offsets = [0, 16], sizes = [8, 8], strides = [1, 1]} : vector<8x24xf32> to vector<8x8xf32>
    %752 = vector.broadcast %557 : vector<1x8xf32> to vector<8x8xf32>
    %753 = arith.addf %751, %752 : vector<8x8xf32>
    %754 = arith.mulf %741, %753 : vector<8x8xf32>
    %755 = arith.addf %750, %754 : vector<8x8xf32>
    %756 = math.tanh %755 : vector<8x8xf32>
    %757 = arith.subf %731, %756 : vector<8x8xf32>
    %758 = arith.mulf %749, %757 : vector<8x8xf32>
    %759 = arith.addf %756, %758 : vector<8x8xf32>
    %c40_137 = arith.constant 40 : index
    %c0_138 = arith.constant 0 : index
    %760 = vector.load %arg17[%c40_137, %c0_138] : memref<64x8xf32, #tpu.memory_space<vmem>>, vector<8x8xf32>
    tpu.vector_store %arg17[%c40_137, %c0_138], %759 {strides = array<i32>} : memref<64x8xf32, #tpu.memory_space<vmem>>, vector<8x8xf32>,
    %761 = vector.extract_strided_slice %0 {offsets = [40, 0], sizes = [8, 1], strides = [1, 1]} : vector<64x1xf32> to vector<8x1xf32>
    %762 = arith.subf %759, %731 : vector<8x8xf32>
    %763 = vector.broadcast %761 : vector<8x1xf32> to vector<8x8xf32>
    %764 = arith.mulf %763, %762 : vector<8x8xf32>
    %765 = arith.addf %731, %764 : vector<8x8xf32>
    %766 = vector.extract_strided_slice %560 {offsets = [48, 0], sizes = [8, 24], strides = [1, 1]} : vector<64x24xf32> to vector<8x24xf32>
    %cst_139 = arith.constant dense<0.000000e+00> : vector<8x24xf32>
    %767 = tpu.matmul %765, %555, %cst_139 {dimension_numbers = #tpu.dot_dimension_numbers<[1], [0], [0], [1], [0, 0, 1, 1], [], []>} : vector<8x8xf32>, vector<8x24xf32>, vector<8x24xf32> -> vector<8x24xf32>
    %768 = vector.extract_strided_slice %766 {offsets = [0, 0], sizes = [8, 8], strides = [1, 1]} : vector<8x24xf32> to vector<8x8xf32>
    %769 = vector.extract_strided_slice %767 {offsets = [0, 0], sizes = [8, 8], strides = [1, 1]} : vector<8x24xf32> to vector<8x8xf32>
    %770 = arith.addf %768, %769 : vector<8x8xf32>
    %771 = arith.negf %770 : vector<8x8xf32>
    %772 = math.exp %771 : vector<8x8xf32>
    %cst_140 = arith.constant 1.000000e+00 : f32
    %773 = vector.broadcast %cst_140 : f32 to vector<8x8xf32>
    %774 = arith.addf %773, %772 : vector<8x8xf32>
    %775 = arith.divf %773, %774 : vector<8x8xf32>
    %776 = vector.extract_strided_slice %766 {offsets = [0, 8], sizes = [8, 8], strides = [1, 1]} : vector<8x24xf32> to vector<8x8xf32>
    %777 = vector.extract_strided_slice %767 {offsets = [0, 8], sizes = [8, 8], strides = [1, 1]} : vector<8x24xf32> to vector<8x8xf32>
    %778 = arith.addf %776, %777 : vector<8x8xf32>
    %779 = arith.negf %778 : vector<8x8xf32>
    %780 = math.exp %779 : vector<8x8xf32>
    %cst_141 = arith.constant 1.000000e+00 : f32
    %781 = vector.broadcast %cst_141 : f32 to vector<8x8xf32>
    %782 = arith.addf %781, %780 : vector<8x8xf32>
    %783 = arith.divf %781, %782 : vector<8x8xf32>
    %784 = vector.extract_strided_slice %766 {offsets = [0, 16], sizes = [8, 8], strides = [1, 1]} : vector<8x24xf32> to vector<8x8xf32>
    %785 = vector.extract_strided_slice %767 {offsets = [0, 16], sizes = [8, 8], strides = [1, 1]} : vector<8x24xf32> to vector<8x8xf32>
    %786 = vector.broadcast %557 : vector<1x8xf32> to vector<8x8xf32>
    %787 = arith.addf %785, %786 : vector<8x8xf32>
    %788 = arith.mulf %775, %787 : vector<8x8xf32>
    %789 = arith.addf %784, %788 : vector<8x8xf32>
    %790 = math.tanh %789 : vector<8x8xf32>
    %791 = arith.subf %765, %790 : vector<8x8xf32>
    %792 = arith.mulf %783, %791 : vector<8x8xf32>
    %793 = arith.addf %790, %792 : vector<8x8xf32>
    %c48_142 = arith.constant 48 : index
    %c0_143 = arith.constant 0 : index
    %794 = vector.load %arg17[%c48_142, %c0_143] : memref<64x8xf32, #tpu.memory_space<vmem>>, vector<8x8xf32>
    tpu.vector_store %arg17[%c48_142, %c0_143], %793 {strides = array<i32>} : memref<64x8xf32, #tpu.memory_space<vmem>>, vector<8x8xf32>,
    %795 = vector.extract_strided_slice %0 {offsets = [48, 0], sizes = [8, 1], strides = [1, 1]} : vector<64x1xf32> to vector<8x1xf32>
    %796 = arith.subf %793, %765 : vector<8x8xf32>
    %797 = vector.broadcast %795 : vector<8x1xf32> to vector<8x8xf32>
    %798 = arith.mulf %797, %796 : vector<8x8xf32>
    %799 = arith.addf %765, %798 : vector<8x8xf32>
    %800 = vector.extract_strided_slice %560 {offsets = [56, 0], sizes = [8, 24], strides = [1, 1]} : vector<64x24xf32> to vector<8x24xf32>
    %cst_144 = arith.constant dense<0.000000e+00> : vector<8x24xf32>
    %801 = tpu.matmul %799, %555, %cst_144 {dimension_numbers = #tpu.dot_dimension_numbers<[1], [0], [0], [1], [0, 0, 1, 1], [], []>} : vector<8x8xf32>, vector<8x24xf32>, vector<8x24xf32> -> vector<8x24xf32>
    %802 = vector.extract_strided_slice %800 {offsets = [0, 0], sizes = [8, 8], strides = [1, 1]} : vector<8x24xf32> to vector<8x8xf32>
    %803 = vector.extract_strided_slice %801 {offsets = [0, 0], sizes = [8, 8], strides = [1, 1]} : vector<8x24xf32> to vector<8x8xf32>
    %804 = arith.addf %802, %803 : vector<8x8xf32>
    %805 = arith.negf %804 : vector<8x8xf32>
    %806 = math.exp %805 : vector<8x8xf32>
    %cst_145 = arith.constant 1.000000e+00 : f32
    %807 = vector.broadcast %cst_145 : f32 to vector<8x8xf32>
    %808 = arith.addf %807, %806 : vector<8x8xf32>
    %809 = arith.divf %807, %808 : vector<8x8xf32>
    %810 = vector.extract_strided_slice %800 {offsets = [0, 8], sizes = [8, 8], strides = [1, 1]} : vector<8x24xf32> to vector<8x8xf32>
    %811 = vector.extract_strided_slice %801 {offsets = [0, 8], sizes = [8, 8], strides = [1, 1]} : vector<8x24xf32> to vector<8x8xf32>
    %812 = arith.addf %810, %811 : vector<8x8xf32>
    %813 = arith.negf %812 : vector<8x8xf32>
    %814 = math.exp %813 : vector<8x8xf32>
    %cst_146 = arith.constant 1.000000e+00 : f32
    %815 = vector.broadcast %cst_146 : f32 to vector<8x8xf32>
    %816 = arith.addf %815, %814 : vector<8x8xf32>
    %817 = arith.divf %815, %816 : vector<8x8xf32>
    %818 = vector.extract_strided_slice %800 {offsets = [0, 16], sizes = [8, 8], strides = [1, 1]} : vector<8x24xf32> to vector<8x8xf32>
    %819 = vector.extract_strided_slice %801 {offsets = [0, 16], sizes = [8, 8], strides = [1, 1]} : vector<8x24xf32> to vector<8x8xf32>
    %820 = vector.broadcast %557 : vector<1x8xf32> to vector<8x8xf32>
    %821 = arith.addf %819, %820 : vector<8x8xf32>
    %822 = arith.mulf %809, %821 : vector<8x8xf32>
    %823 = arith.addf %818, %822 : vector<8x8xf32>
    %824 = math.tanh %823 : vector<8x8xf32>
    %825 = arith.subf %799, %824 : vector<8x8xf32>
    %826 = arith.mulf %817, %825 : vector<8x8xf32>
    %827 = arith.addf %824, %826 : vector<8x8xf32>
    %c56_147 = arith.constant 56 : index
    %c0_148 = arith.constant 0 : index
    %828 = vector.load %arg17[%c56_147, %c0_148] : memref<64x8xf32, #tpu.memory_space<vmem>>, vector<8x8xf32>
    tpu.vector_store %arg17[%c56_147, %c0_148], %827 {strides = array<i32>} : memref<64x8xf32, #tpu.memory_space<vmem>>, vector<8x8xf32>,
    %c0_149 = arith.constant 0 : index
    %c0_150 = arith.constant 0 : index
    %829 = vector.load %arg17[%c0_149, %c0_150] : memref<64x8xf32, #tpu.memory_space<vmem>>, vector<64x8xf32>
    %830 = vector.broadcast %0 : vector<64x1xf32> to vector<64x8xf32>
    %831 = arith.mulf %830, %829 : vector<64x8xf32>
    %c0_151 = arith.constant 0 : index
    %c0_152 = arith.constant 0 : index
    %832 = vector.load %arg14[%c0_151, %c0_152] : memref<8x3xf32, #tpu.memory_space<vmem>>, vector<8x3xf32>
    %cst_153 = arith.constant dense<0.000000e+00> : vector<64x3xf32>
    %833 = tpu.matmul %831, %832, %cst_153 {dimension_numbers = #tpu.dot_dimension_numbers<[1], [0], [0], [1], [0, 0, 1, 1], [], []>} : vector<64x8xf32>, vector<8x3xf32>, vector<64x3xf32> -> vector<64x3xf32>
    %c0_154 = arith.constant 0 : index
    %c0_155 = arith.constant 0 : index
    %834 = vector.load %arg15[%c0_154, %c0_155] : memref<1x3xf32, #tpu.memory_space<vmem>>, vector<1x3xf32>
    %835 = vector.broadcast %834 : vector<1x3xf32> to vector<64x3xf32>
    %836 = arith.addf %833, %835 : vector<64x3xf32>
    %c0_156 = arith.constant 0 : index
    %c0_157 = arith.constant 0 : index
    %837 = vector.load %arg16[%c0_156, %c0_157] : memref<64x3xf32, #tpu.memory_space<vmem>>, vector<64x3xf32>
    tpu.vector_store %arg16[%c0_156, %c0_157], %836 {strides = array<i32>} : memref<64x3xf32, #tpu.memory_space<vmem>>, vector<64x3xf32>,
    return
  }
}

</mosaic_0001>

<llo_original>
// kernel: tpu_custom_call.1
$region0: #{tpu_custom_call.1}
  #allocation0 [shape = 'u32[]', space=smem, size = 0x4, offset = 0x4, fixed_abs, tag = 'smem constant byte address 0x4 - core index']
  #allocation1 [shape = 'u32[144,128]{1,0:T(1,128)}', space=vmem, size = 0x12000, scoped, tag = 'internal scratch']
  #allocation2 [shape = 'f32[64,8]{1,0:T(8,128)}', space=vmem, size = 0x8000, scoped, tag = 'scratch operand']
  %s0 = inlined_call_operand.vmem [shape: f32[64,3], index: 0, kind: input, shape index: {}]
  %s1 = inlined_call_operand.vmem [shape: f32[64,1], index: 1, kind: input, shape index: {}]
  %s2 = inlined_call_operand.vmem [shape: f32[3,24], index: 2, kind: input, shape index: {}]
  %s3 = inlined_call_operand.vmem [shape: f32[8,24], index: 3, kind: input, shape index: {}]
  %s4 = inlined_call_operand.vmem [shape: f32[1,24], index: 4, kind: input, shape index: {}]
  %s5 = inlined_call_operand.vmem [shape: f32[1,8], index: 5, kind: input, shape index: {}]
  %s6 = inlined_call_operand.vmem [shape: f32[8,24], index: 6, kind: input, shape index: {}]
  %s7 = inlined_call_operand.vmem [shape: f32[8,24], index: 7, kind: input, shape index: {}]
  %s8 = inlined_call_operand.vmem [shape: f32[1,24], index: 8, kind: input, shape index: {}]
  %s9 = inlined_call_operand.vmem [shape: f32[1,8], index: 9, kind: input, shape index: {}]
  %s10 = inlined_call_operand.vmem [shape: f32[8,24], index: 10, kind: input, shape index: {}]
  %s11 = inlined_call_operand.vmem [shape: f32[8,24], index: 11, kind: input, shape index: {}]
  %s12 = inlined_call_operand.vmem [shape: f32[1,24], index: 12, kind: input, shape index: {}]
  %s13 = inlined_call_operand.vmem [shape: f32[1,8], index: 13, kind: input, shape index: {}]
  %s14 = inlined_call_operand.vmem [shape: f32[8,3], index: 14, kind: input, shape index: {}]
  %s15 = inlined_call_operand.vmem [shape: f32[1,3], index: 15, kind: input, shape index: {}]
  %s16 = inlined_call_operand.vmem [shape: f32[64,3], index: 16, kind: output, shape index: {}]
  %s17 = sld [smem:[#allocation0]]
  $region74: #{tpu_custom_call.1} parent=0
    _
  %s19 = ssub.s32 1, %s17
  %s20 = scalar_select 0, %s19, %s17
  // Predicated region
  $region2: #{tpu_custom_call.1} parent=0 // pred_check
    _
  $region3: #{tpu_custom_call.1} parent=0 // pred_check_branch
    %22 = sbr.rel (0) target = $region5
  $region4: #{tpu_custom_call.1} parent=0 // pred_region
    _
  $region5: #{tpu_custom_call.1} parent=0 // pred_fallthru
    _
  // Predicated region
  $region6: #{tpu_custom_call.1} parent=0 // pred_check
    _
  $region7: #{tpu_custom_call.1} parent=0 // pred_check_branch
    %24 = sbr.rel (0) target = $region9
  $region8: #{tpu_custom_call.1} parent=0 // pred_region
    _
  $region9: #{tpu_custom_call.1} parent=0 // pred_fallthru
    _
  // Predicated region
  $region10: #{tpu_custom_call.1} parent=0 // pred_check
    _
  $region11: #{tpu_custom_call.1} parent=0 // pred_check_branch
    %26 = sbr.rel (0) target = $region13
  $region12: #{tpu_custom_call.1} parent=0 // pred_region
    _
  $region13: #{tpu_custom_call.1} parent=0 // pred_fallthru
    _
  // Predicated region
  $region14: #{tpu_custom_call.1} parent=0 // pred_check
    _
  $region15: #{tpu_custom_call.1} parent=0 // pred_check_branch
    %28 = sbr.rel (0) target = $region17
  $region16: #{tpu_custom_call.1} parent=0 // pred_region
    _
  $region17: #{tpu_custom_call.1} parent=0 // pred_fallthru
    _
  // Predicated region
  $region18: #{tpu_custom_call.1} parent=0 // pred_check
    _
  $region19: #{tpu_custom_call.1} parent=0 // pred_check_branch
    %30 = sbr.rel (0) target = $region21
  $region20: #{tpu_custom_call.1} parent=0 // pred_region
    _
  $region21: #{tpu_custom_call.1} parent=0 // pred_fallthru
    _
  // Predicated region
  $region22: #{tpu_custom_call.1} parent=0 // pred_check
    _
  $region23: #{tpu_custom_call.1} parent=0 // pred_check_branch
    %32 = sbr.rel (0) target = $region25
  $region24: #{tpu_custom_call.1} parent=0 // pred_region
    _
  $region25: #{tpu_custom_call.1} parent=0 // pred_fallthru
    _
  // Predicated region
  $region26: #{tpu_custom_call.1} parent=0 // pred_check
    _
  $region27: #{tpu_custom_call.1} parent=0 // pred_check_branch
    %34 = sbr.rel (0) target = $region29
  $region28: #{tpu_custom_call.1} parent=0 // pred_region
    _
  $region29: #{tpu_custom_call.1} parent=0 // pred_fallthru
    _
  // Predicated region
  $region30: #{tpu_custom_call.1} parent=0 // pred_check
    _
  $region31: #{tpu_custom_call.1} parent=0 // pred_check_branch
    %36 = sbr.rel (0) target = $region33
  $region32: #{tpu_custom_call.1} parent=0 // pred_region
    _
  $region33: #{tpu_custom_call.1} parent=0 // pred_fallthru
    _
  // Predicated region
  $region34: #{tpu_custom_call.1} parent=0 // pred_check
    _
  $region35: #{tpu_custom_call.1} parent=0 // pred_check_branch
    %38 = sbr.rel (0) target = $region37
  $region36: #{tpu_custom_call.1} parent=0 // pred_region
    _
  $region37: #{tpu_custom_call.1} parent=0 // pred_fallthru
    _
  // Predicated region
  $region38: #{tpu_custom_call.1} parent=0 // pred_check
    _
  $region39: #{tpu_custom_call.1} parent=0 // pred_check_branch
    %40 = sbr.rel (0) target = $region41
  $region40: #{tpu_custom_call.1} parent=0 // pred_region
    _
  $region41: #{tpu_custom_call.1} parent=0 // pred_fallthru
    _
  // Predicated region
  $region42: #{tpu_custom_call.1} parent=0 // pred_check
    _
  $region43: #{tpu_custom_call.1} parent=0 // pred_check_branch
    %42 = sbr.rel (0) target = $region45
  $region44: #{tpu_custom_call.1} parent=0 // pred_region
    _
  $region45: #{tpu_custom_call.1} parent=0 // pred_fallthru
    _
  // Predicated region
  $region46: #{tpu_custom_call.1} parent=0 // pred_check
    _
  $region47: #{tpu_custom_call.1} parent=0 // pred_check_branch
    %44 = sbr.rel (0) target = $region49
  $region48: #{tpu_custom_call.1} parent=0 // pred_region
    _
  $region49: #{tpu_custom_call.1} parent=0 // pred_fallthru
    _
  // Predicated region
  $region50: #{tpu_custom_call.1} parent=0 // pred_check
    _
  $region51: #{tpu_custom_call.1} parent=0 // pred_check_branch
    %46 = sbr.rel (0) target = $region53
  $region52: #{tpu_custom_call.1} parent=0 // pred_region
    _
  $region53: #{tpu_custom_call.1} parent=0 // pred_fallthru
    _
  // Predicated region
  $region54: #{tpu_custom_call.1} parent=0 // pred_check
    _
  $region55: #{tpu_custom_call.1} parent=0 // pred_check_branch
    %48 = sbr.rel (0) target = $region57
  $region56: #{tpu_custom_call.1} parent=0 // pred_region
    _
  $region57: #{tpu_custom_call.1} parent=0 // pred_fallthru
    _
  // Predicated region
  $region58: #{tpu_custom_call.1} parent=0 // pred_check
    _
  $region59: #{tpu_custom_call.1} parent=0 // pred_check_branch
    %50 = sbr.rel (0) target = $region61
  $region60: #{tpu_custom_call.1} parent=0 // pred_region
    _
  $region61: #{tpu_custom_call.1} parent=0 // pred_fallthru
    _
  // Predicated region
  $region62: #{tpu_custom_call.1} parent=0 // pred_check
    _
  $region63: #{tpu_custom_call.1} parent=0 // pred_check_branch
    %52 = sbr.rel (0) target = $region65
  $region64: #{tpu_custom_call.1} parent=0 // pred_region
    _
  $region65: #{tpu_custom_call.1} parent=0 // pred_fallthru
    _
  %v53 = vld [vmem:[%s1] sm:$0xff]
  %v54 = vld [vmem:[%s1 + $0x8] sm:$0xff]
  %v55 = vld [vmem:[%s1 + $0x10] sm:$0xff]
  %v56 = vld [vmem:[%s1 + $0x18] sm:$0xff]
  %v57 = vld [vmem:[%s1 + $0x20] sm:$0xff]
  %v58 = vld [vmem:[%s1 + $0x28] sm:$0xff]
  %v59 = vld [vmem:[%s1 + $0x30] sm:$0xff]
  %v60 = vld [vmem:[%s1 + $0x38] sm:$0xff]
  %v61 = vld [vmem:[%s0] sm:$0xff]
  %v62 = vld [vmem:[%s0 + $0x8] sm:$0xff]
  %v63 = vld [vmem:[%s0 + $0x10] sm:$0xff]
  %v64 = vld [vmem:[%s0 + $0x18] sm:$0xff]
  %v65 = vld [vmem:[%s0 + $0x20] sm:$0xff]
  %v66 = vld [vmem:[%s0 + $0x28] sm:$0xff]
  %v67 = vld [vmem:[%s0 + $0x30] sm:$0xff]
  %v68 = vld [vmem:[%s0 + $0x38] sm:$0xff]
  %v69 = vld [vmem:[%s2] sm:$0x7]
  %v70 = vld [vmem:[%s3] sm:$0xff]
  %v71 = vld [vmem:[%s4] sm:$0x1]
  %v72 = vld [vmem:[%s5] sm:$0x1]
  %v74 = vlaneseq
  %v75 = vshrl.u32 %v74, 7
  %v76 = vsub.s32 0, %v75
  %v77 = vrot.slane %v71, %v76
  %vm79 = vcmask 23552
  %v81 = vsel %vm79, %v61, 0
  %v84 = vsel %vm79, %v62, 0
  %v87 = vsel %vm79, %v63, 0
  %v90 = vsel %vm79, %v64, 0
  %v93 = vsel %vm79, %v65, 0
  %v96 = vsel %vm79, %v66, 0
  %v99 = vsel %vm79, %v67, 0
  %v102 = vsel %vm79, %v68, 0
  %vm104 = vcmask 1042432
  %v106 = vsel %vm104, %v69, 0
  %108 = vmatprep.subr.mxu0 0.0
  %109 = vmatpush1.msra.mxu0 %v106
  %110 = vmatprep.subr.mxu0 0.0
  %111 = vmatpush1.msra.mxu0 0.0
  %112 = vmatprep.subr.mxu0 0.0
  %113 = vmatpush1.msra.mxu0 0.0
  %114 = vmatprep.subr.mxu0 0.0
  %115 = vmatpush1.msra.mxu0 0.0
  %116 = vmatprep.subr.mxu0 0.0
  %117 = vmatpush1.msra.mxu0 0.0
  %118 = vmatprep.subr.mxu0 0.0
  %119 = vmatpush1.msra.mxu0 0.0
  %120 = vmatprep.subr.mxu0 0.0
  %121 = vmatpush1.msra.mxu0 0.0
  %122 = vmatprep.subr.mxu0 0.0
  %123 = vmatpush1.msra.mxu0 0.0
  %124 = vmatprep.subr.mxu0 0.0
  %125 = vmatpush1.msra.mxu0 0.0
  %126 = vmatprep.subr.mxu0 0.0
  %127 = vmatpush1.msra.mxu0 0.0
  %128 = vmatprep.subr.mxu0 0.0
  %129 = vmatpush1.msra.mxu0 0.0
  %130 = vmatprep.subr.mxu0 0.0
  %131 = vmatpush1.msra.mxu0 0.0
  %132 = vmatprep.subr.mxu0 0.0
  %133 = vmatpush1.msra.mxu0 0.0
  %134 = vmatprep.subr.mxu0 0.0
  %135 = vmatpush1.msra.mxu0 0.0
  %136 = vmatprep.subr.mxu0 0.0
  %137 = vmatpush1.msra.mxu0 0.0
  %138 = vmatprep.subr.mxu0 0.0
  %139 = vmatpush1.msra.mxu0 0.0
  %140 = vmatprep.subr.mxu0 0.0
  %141 = vmatpush1.msra.mxu0 0.0
  %142 = vmatprep.subr.mxu0 0.0
  %143 = vmatpush1.msra.mxu0 0.0
  %144 = vmatprep.subr.mxu0 0.0
  %145 = vmatpush1.msra.mxu0 0.0
  %146 = vmatprep.subr.mxu0 0.0
  %147 = vmatpush1.msra.mxu0 0.0
  %148 = vmatprep.subr.mxu0 0.0
  %149 = vmatpush1.msra.mxu0 0.0
  %150 = vmatprep.subr.mxu0 0.0
  %151 = vmatpush1.msra.mxu0 0.0
  %152 = vmatprep.subr.mxu0 0.0
  %153 = vmatpush1.msra.mxu0 0.0
  %154 = vmatprep.subr.mxu0 0.0
  %155 = vmatpush1.msra.mxu0 0.0
  %156 = vmatprep.subr.mxu0 0.0
  %157 = vmatpush1.msra.mxu0 0.0
  %158 = vmatprep.subr.mxu0 0.0
  %159 = vmatpush1.msra.mxu0 0.0
  %160 = vmatprep.subr.mxu0 0.0
  %161 = vmatpush1.msra.mxu0 0.0
  %162 = vmatprep.subr.mxu0 0.0
  %163 = vmatpush1.msra.mxu0 0.0
  %164 = vmatprep.subr.mxu0 0.0
  %165 = vmatpush1.msra.mxu0 0.0
  %166 = vmatprep.subr.mxu0 0.0
  %167 = vmatpush1.msra.mxu0 0.0
  %168 = vmatprep.subr.mxu0 0.0
  %169 = vmatpush1.msra.mxu0 0.0
  %170 = vmatprep.subr.mxu0 0.0
  %171 = vmatpush1.msra.mxu0 0.0
  %172 = vmatprep.mubr.f32.mxu0 0.0
  %173 = vmatmul.mubr.f32.gmra.mrb[0].mxu0 %v81
  %v174 = vpop.f32.mrb[0].mxu0
  %v175 = vadd.f32 %v77, %v174
  %v176 = vpop.f32.mrb[0].mxu0
  %177 = vmatprep.mubr.f32.mxu0 0.0
  %178 = vmatmul.mubr.f32.gmra.mrb[0].mxu0 %v84
  %v179 = vpop.f32.mrb[0].mxu0
  %v180 = vadd.f32 %v77, %v179
  %v181 = vpop.f32.mrb[0].mxu0
  %182 = vmatprep.mubr.f32.mxu0 0.0
  %183 = vmatmul.mubr.f32.gmra.mrb[0].mxu0 %v87
  %v184 = vpop.f32.mrb[0].mxu0
  %v185 = vadd.f32 %v77, %v184
  %v186 = vpop.f32.mrb[0].mxu0
  %187 = vmatprep.mubr.f32.mxu0 0.0
  %188 = vmatmul.mubr.f32.gmra.mrb[0].mxu0 %v90
  %v189 = vpop.f32.mrb[0].mxu0
  %v190 = vadd.f32 %v77, %v189
  %v191 = vpop.f32.mrb[0].mxu0
  %192 = vmatprep.mubr.f32.mxu0 0.0
  %193 = vmatmul.mubr.f32.gmra.mrb[0].mxu0 %v93
  %v194 = vpop.f32.mrb[0].mxu0
  %v195 = vadd.f32 %v77, %v194
  %v196 = vpop.f32.mrb[0].mxu0
  %197 = vmatprep.mubr.f32.mxu0 0.0
  %198 = vmatmul.mubr.f32.gmra.mrb[0].mxu0 %v96
  %v199 = vpop.f32.mrb[0].mxu0
  %v200 = vadd.f32 %v77, %v199
  %v201 = vpop.f32.mrb[0].mxu0
  %202 = vmatprep.mubr.f32.mxu0 0.0
  %203 = vmatmul.mubr.f32.gmra.mrb[0].mxu0 %v99
  %v204 = vpop.f32.mrb[0].mxu0
  %v205 = vadd.f32 %v77, %v204
  %v206 = vpop.f32.mrb[0].mxu0
  %207 = vmatprep.mubr.f32.mxu0 0.0
  %208 = vmatmul.mubr.f32.gmra.mrb[0].mxu0 %v102
  %v209 = vpop.f32.mrb[0].mxu0
  %v210 = vadd.f32 %v77, %v209
  %v211 = vpop.f32.mrb[0].mxu0
  %212 = vdwg.mxu0
  %vm213 = vcmask 64512
  %v215 = vsel %vm213, 0.0, 0
  %217 = vmatprep.subr.mxu0 0.0
  %218 = vmatpush1.msra.mxu0 %v70
  %219 = vmatprep.subr.mxu0 0.0
  %220 = vmatpush1.msra.mxu0 0.0
  %221 = vmatprep.subr.mxu0 0.0
  %222 = vmatpush1.msra.mxu0 0.0
  %223 = vmatprep.subr.mxu0 0.0
  %224 = vmatpush1.msra.mxu0 0.0
  %225 = vmatprep.subr.mxu0 0.0
  %226 = vmatpush1.msra.mxu0 0.0
  %227 = vmatprep.subr.mxu0 0.0
  %228 = vmatpush1.msra.mxu0 0.0
  %229 = vmatprep.subr.mxu0 0.0
  %230 = vmatpush1.msra.mxu0 0.0
  %231 = vmatprep.subr.mxu0 0.0
  %232 = vmatpush1.msra.mxu0 0.0
  %233 = vmatprep.subr.mxu0 0.0
  %234 = vmatpush1.msra.mxu0 0.0
  %235 = vmatprep.subr.mxu0 0.0
  %236 = vmatpush1.msra.mxu0 0.0
  %237 = vmatprep.subr.mxu0 0.0
  %238 = vmatpush1.msra.mxu0 0.0
  %239 = vmatprep.subr.mxu0 0.0
  %240 = vmatpush1.msra.mxu0 0.0
  %241 = vmatprep.subr.mxu0 0.0
  %242 = vmatpush1.msra.mxu0 0.0
  %243 = vmatprep.subr.mxu0 0.0
  %244 = vmatpush1.msra.mxu0 0.0
  %245 = vmatprep.subr.mxu0 0.0
  %246 = vmatpush1.msra.mxu0 0.0
  %247 = vmatprep.subr.mxu0 0.0
  %248 = vmatpush1.msra.mxu0 0.0
  %249 = vmatprep.subr.mxu0 0.0
  %250 = vmatpush1.msra.mxu0 0.0
  %251 = vmatprep.subr.mxu0 0.0
  %252 = vmatpush1.msra.mxu0 0.0
  %253 = vmatprep.subr.mxu0 0.0
  %254 = vmatpush1.msra.mxu0 0.0
  %255 = vmatprep.subr.mxu0 0.0
  %256 = vmatpush1.msra.mxu0 0.0
  %257 = vmatprep.subr.mxu0 0.0
  %258 = vmatpush1.msra.mxu0 0.0
  %259 = vmatprep.subr.mxu0 0.0
  %260 = vmatpush1.msra.mxu0 0.0
  %261 = vmatprep.subr.mxu0 0.0
  %262 = vmatpush1.msra.mxu0 0.0
  %263 = vmatprep.subr.mxu0 0.0
  %264 = vmatpush1.msra.mxu0 0.0
  %265 = vmatprep.subr.mxu0 0.0
  %266 = vmatpush1.msra.mxu0 0.0
  %267 = vmatprep.subr.mxu0 0.0
  %268 = vmatpush1.msra.mxu0 0.0
  %269 = vmatprep.subr.mxu0 0.0
  %270 = vmatpush1.msra.mxu0 0.0
  %271 = vmatprep.subr.mxu0 0.0
  %272 = vmatpush1.msra.mxu0 0.0
  %273 = vmatprep.subr.mxu0 0.0
  %274 = vmatpush1.msra.mxu0 0.0
  %275 = vmatprep.subr.mxu0 0.0
  %276 = vmatpush1.msra.mxu0 0.0
  %277 = vmatprep.subr.mxu0 0.0
  %278 = vmatpush1.msra.mxu0 0.0
  %279 = vmatprep.subr.mxu0 0.0
  %280 = vmatpush1.msra.mxu0 0.0
  %281 = vmatprep.mubr.f32.mxu0 0.0
  %282 = vmatmul.mubr.f32.gmra.mrb[0].mxu0 %v215
  %v283 = vpop.f32.mrb[0].mxu0
  %v284 = vadd.f32 0.0, %v283
  %v285 = vpop.f32.mrb[0].mxu0
  %286 = vdwg.mxu0
  %v287 = vadd.f32 %v175, %v284
  %v288 = vxor.u32 %v287, 2147483648
  %v289 = vmul.f32 %v288, 1.442695
  %v290 = vpow.pop %v289
  %v291 = vadd.f32 %v290, 1.0
  %v292 = vrcp.pop %v291
  %v293 = vmul.f32 1.0, %v292
  %v295 = vlaneseq
  %v296 = vshrl.u32 %v295, 7
  %v297 = vsub.s32 0, %v296
  %v298 = vrot.slane %v72, %v297
  %299 = vrot.lane.b32.xlu0 %v298, 16
  %v300 = vpop.permute.xlu0 %299
  %v302 = vadd.f32 %v284, %v300
  %304 = vrot.lane.b32.xlu0 %v302, 112
  %v305 = vpop.permute.xlu0 %304
  %v307 = vmul.f32 %v293, %v305
  %309 = vrot.lane.b32.xlu0 %v307, 16
  %v310 = vpop.permute.xlu0 %309
  %v312 = vadd.f32 %v175, %v310
  %v313 = vtanh.pop %v312
  %v314 = vsub.f32 0.0, %v313
  %316 = vrot.lane.b32.xlu0 %v314, 120
  %v317 = vpop.permute.xlu0 %316
  %v319 = vmul.f32 %v293, %v317
  %321 = vrot.lane.b32.xlu0 %v319, 8
  %v322 = vpop.permute.xlu0 %321
  %v324 = vadd.f32 %v313, %v322
  %326 = vrot.lane.b32.xlu0 %v324, 112
  %v327 = vpop.permute.xlu0 %326
  %329 = vst.msk [vmem:[#allocation2] sm:$0xff] %vm213, %v327
  %331 = vset.pattern.permute.xlu0 0
  %332 = vperm.xlu0 %331, %v53
  %v333 = vpop.permute.xlu0 %332
  %v335 = vmul.f32 %v333, %v324
  %v336 = vadd.f32 %v335, 0.0
  %338 = vrot.lane.b32.xlu0 %v336, 112
  %v339 = vpop.permute.xlu0 %338
  %v340 = vsel %vm213, %v339, 0
  %342 = vmatprep.subr.mxu0 0.0
  %343 = vmatpush1.msra.mxu0 %v70
  %344 = vmatprep.subr.mxu0 0.0
  %345 = vmatpush1.msra.mxu0 0.0
  %346 = vmatprep.subr.mxu0 0.0
  %347 = vmatpush1.msra.mxu0 0.0
  %348 = vmatprep.subr.mxu0 0.0
  %349 = vmatpush1.msra.mxu0 0.0
  %350 = vmatprep.subr.mxu0 0.0
  %351 = vmatpush1.msra.mxu0 0.0
  %352 = vmatprep.subr.mxu0 0.0
  %353 = vmatpush1.msra.mxu0 0.0
  %354 = vmatprep.subr.mxu0 0.0
  %355 = vmatpush1.msra.mxu0 0.0
  %356 = vmatprep.subr.mxu0 0.0
  %357 = vmatpush1.msra.mxu0 0.0
  %358 = vmatprep.subr.mxu0 0.0
  %359 = vmatpush1.msra.mxu0 0.0
  %360 = vmatprep.subr.mxu0 0.0
  %361 = vmatpush1.msra.mxu0 0.0
  %362 = vmatprep.subr.mxu0 0.0
  %363 = vmatpush1.msra.mxu0 0.0
  %364 = vmatprep.subr.mxu0 0.0
  %365 = vmatpush1.msra.mxu0 0.0
  %366 = vmatprep.subr.mxu0 0.0
  %367 = vmatpush1.msra.mxu0 0.0
  %368 = vmatprep.subr.mxu0 0.0
  %369 = vmatpush1.msra.mxu0 0.0
  %370 = vmatprep.subr.mxu0 0.0
  %371 = vmatpush1.msra.mxu0 0.0
  %372 = vmatprep.subr.mxu0 0.0
  %373 = vmatpush1.msra.mxu0 0.0
  %374 = vmatprep.subr.mxu0 0.0
  %375 = vmatpush1.msra.mxu0 0.0
  %376 = vmatprep.subr.mxu0 0.0
  %377 = vmatpush1.msra.mxu0 0.0
  %378 = vmatprep.subr.mxu0 0.0
  %379 = vmatpush1.msra.mxu0 0.0
  %380 = vmatprep.subr.mxu0 0.0
  %381 = vmatpush1.msra.mxu0 0.0
  %382 = vmatprep.subr.mxu0 0.0
  %383 = vmatpush1.msra.mxu0 0.0
  %384 = vmatprep.subr.mxu0 0.0
  %385 = vmatpush1.msra.mxu0 0.0
  %386 = vmatprep.subr.mxu0 0.0
  %387 = vmatpush1.msra.mxu0 0.0
  %388 = vmatprep.subr.mxu0 0.0
  %389 = vmatpush1.msra.mxu0 0.0
  %390 = vmatprep.subr.mxu0 0.0
  %391 = vmatpush1.msra.mxu0 0.0
  %392 = vmatprep.subr.mxu0 0.0
  %393 = vmatpush1.msra.mxu0 0.0
  %394 = vmatprep.subr.mxu0 0.0
  %395 = vmatpush1.msra.mxu0 0.0
  %396 = vmatprep.subr.mxu0 0.0
  %397 = vmatpush1.msra.mxu0 0.0
  %398 = vmatprep.subr.mxu0 0.0
  %399 = vmatpush1.msra.mxu0 0.0
  %400 = vmatprep.subr.mxu0 0.0
  %401 = vmatpush1.msra.mxu0 0.0
  %402 = vmatprep.subr.mxu0 0.0
  %403 = vmatpush1.msra.mxu0 0.0
  %404 = vmatprep.subr.mxu0 0.0
  %405 = vmatpush1.msra.mxu0 0.0
  %406 = vmatprep.mubr.f32.mxu0 0.0
  %407 = vmatmul.mubr.f32.gmra.mrb[0].mxu0 %v340
  %v408 = vpop.f32.mrb[0].mxu0
  %v409 = vadd.f32 0.0, %v408
  %v410 = vpop.f32.mrb[0].mxu0
  %411 = vdwg.mxu0
  %v412 = vadd.f32 %v180, %v409
  %v413 = vxor.u32 %v412, 2147483648
  %v414 = vmul.f32 %v413, 1.442695
  %v415 = vpow.pop %v414
  %v416 = vadd.f32 %v415, 1.0
  %v417 = vrcp.pop %v416
  %v418 = vmul.f32 1.0, %v417
  %v419 = vadd.f32 %v409, %v300
  %421 = vrot.lane.b32.xlu0 %v419, 112
  %v422 = vpop.permute.xlu0 %421
  %v424 = vmul.f32 %v418, %v422
  %426 = vrot.lane.b32.xlu0 %v424, 16
  %v427 = vpop.permute.xlu0 %426
  %v429 = vadd.f32 %v180, %v427
  %v430 = vtanh.pop %v429
  %v431 = vsub.f32 %v336, %v430
  %433 = vrot.lane.b32.xlu0 %v431, 120
  %v434 = vpop.permute.xlu0 %433
  %v436 = vmul.f32 %v418, %v434
  %438 = vrot.lane.b32.xlu0 %v436, 8
  %v439 = vpop.permute.xlu0 %438
  %v441 = vadd.f32 %v430, %v439
  %443 = vrot.lane.b32.xlu0 %v441, 112
  %v444 = vpop.permute.xlu0 %443
  %446 = vst.msk [vmem:[#allocation2 + $0x8] sm:$0xff] %vm213, %v444
  %v447 = vsub.f32 %v441, %v336
  %449 = vset.pattern.permute.xlu0 0
  %450 = vperm.xlu0 %449, %v54
  %v451 = vpop.permute.xlu0 %450
  %v453 = vmul.f32 %v451, %v447
  %v454 = vadd.f32 %v336, %v453
  %456 = vrot.lane.b32.xlu0 %v454, 112
  %v457 = vpop.permute.xlu0 %456
  %v458 = vsel %vm213, %v457, 0
  %460 = vmatprep.subr.mxu0 0.0
  %461 = vmatpush1.msra.mxu0 %v70
  %462 = vmatprep.subr.mxu0 0.0
  %463 = vmatpush1.msra.mxu0 0.0
  %464 = vmatprep.subr.mxu0 0.0
  %465 = vmatpush1.msra.mxu0 0.0
  %466 = vmatprep.subr.mxu0 0.0
  %467 = vmatpush1.msra.mxu0 0.0
  %468 = vmatprep.subr.mxu0 0.0
  %469 = vmatpush1.msra.mxu0 0.0
  %470 = vmatprep.subr.mxu0 0.0
  %471 = vmatpush1.msra.mxu0 0.0
  %472 = vmatprep.subr.mxu0 0.0
  %473 = vmatpush1.msra.mxu0 0.0
  %474 = vmatprep.subr.mxu0 0.0
  %475 = vmatpush1.msra.mxu0 0.0
  %476 = vmatprep.subr.mxu0 0.0
  %477 = vmatpush1.msra.mxu0 0.0
  %478 = vmatprep.subr.mxu0 0.0
  %479 = vmatpush1.msra.mxu0 0.0
  %480 = vmatprep.subr.mxu0 0.0
  %481 = vmatpush1.msra.mxu0 0.0
  %482 = vmatprep.subr.mxu0 0.0
  %483 = vmatpush1.msra.mxu0 0.0
  %484 = vmatprep.subr.mxu0 0.0
  %485 = vmatpush1.msra.mxu0 0.0
  %486 = vmatprep.subr.mxu0 0.0
  %487 = vmatpush1.msra.mxu0 0.0
  %488 = vmatprep.subr.mxu0 0.0
  %489 = vmatpush1.msra.mxu0 0.0
  %490 = vmatprep.subr.mxu0 0.0
  %491 = vmatpush1.msra.mxu0 0.0
  %492 = vmatprep.subr.mxu0 0.0
  %493 = vmatpush1.msra.mxu0 0.0
  %494 = vmatprep.subr.mxu0 0.0
  %495 = vmatpush1.msra.mxu0 0.0
  %496 = vmatprep.subr.mxu0 0.0
  %497 = vmatpush1.msra.mxu0 0.0
  %498 = vmatprep.subr.mxu0 0.0
  %499 = vmatpush1.msra.mxu0 0.0
  %500 = vmatprep.subr.mxu0 0.0
  %501 = vmatpush1.msra.mxu0 0.0
  %502 = vmatprep.subr.mxu0 0.0
  %503 = vmatpush1.msra.mxu0 0.0
  %504 = vmatprep.subr.mxu0 0.0
  %505 = vmatpush1.msra.mxu0 0.0
  %506 = vmatprep.subr.mxu0 0.0
  %507 = vmatpush1.msra.mxu0 0.0
  %508 = vmatprep.subr.mxu0 0.0
  %509 = vmatpush1.msra.mxu0 0.0
  %510 = vmatprep.subr.mxu0 0.0
  %511 = vmatpush1.msra.mxu0 0.0
  %512 = vmatprep.subr.mxu0 0.0
  %513 = vmatpush1.msra.mxu0 0.0
  %514 = vmatprep.subr.mxu0 0.0
  %515 = vmatpush1.msra.mxu0 0.0
  %516 = vmatprep.subr.mxu0 0.0
  %517 = vmatpush1.msra.mxu0 0.0
  %518 = vmatprep.subr.mxu0 0.0
  %519 = vmatpush1.msra.mxu0 0.0
  %520 = vmatprep.subr.mxu0 0.0
  %521 = vmatpush1.msra.mxu0 0.0
  %522 = vmatprep.subr.mxu0 0.0
  %523 = vmatpush1.msra.mxu0 0.0
  %524 = vmatprep.mubr.f32.mxu0 0.0
  %525 = vmatmul.mubr.f32.gmra.mrb[0].mxu0 %v458
  %v526 = vpop.f32.mrb[0].mxu0
  %v527 = vadd.f32 0.0, %v526
  %v528 = vpop.f32.mrb[0].mxu0
  %529 = vdwg.mxu0
  %v530 = vadd.f32 %v185, %v527
  %v531 = vxor.u32 %v530, 2147483648
  %v532 = vmul.f32 %v531, 1.442695
  %v533 = vpow.pop %v532
  %v534 = vadd.f32 %v533, 1.0
  %v535 = vrcp.pop %v534
  %v536 = vmul.f32 1.0, %v535
  %v537 = vadd.f32 %v527, %v300
  %539 = vrot.lane.b32.xlu0 %v537, 112
  %v540 = vpop.permute.xlu0 %539
  %v542 = vmul.f32 %v536, %v540
  %544 = vrot.lane.b32.xlu0 %v542, 16
  %v545 = vpop.permute.xlu0 %544
  %v547 = vadd.f32 %v185, %v545
  %v548 = vtanh.pop %v547
  %v549 = vsub.f32 %v454, %v548
  %551 = vrot.lane.b32.xlu0 %v549, 120
  %v552 = vpop.permute.xlu0 %551
  %v554 = vmul.f32 %v536, %v552
  %556 = vrot.lane.b32.xlu0 %v554, 8
  %v557 = vpop.permute.xlu0 %556
  %v559 = vadd.f32 %v548, %v557
  %561 = vrot.lane.b32.xlu0 %v559, 112
  %v562 = vpop.permute.xlu0 %561
  %564 = vst.msk [vmem:[#allocation2 + $0x10] sm:$0xff] %vm213, %v562
  %v565 = vsub.f32 %v559, %v454
  %567 = vset.pattern.permute.xlu0 0
  %568 = vperm.xlu0 %567, %v55
  %v569 = vpop.permute.xlu0 %568
  %v571 = vmul.f32 %v569, %v565
  %v572 = vadd.f32 %v454, %v571
  %574 = vrot.lane.b32.xlu0 %v572, 112
  %v575 = vpop.permute.xlu0 %574
  %v576 = vsel %vm213, %v575, 0
  %578 = vmatprep.subr.mxu0 0.0
  %579 = vmatpush1.msra.mxu0 %v70
  %580 = vmatprep.subr.mxu0 0.0
  %581 = vmatpush1.msra.mxu0 0.0
  %582 = vmatprep.subr.mxu0 0.0
  %583 = vmatpush1.msra.mxu0 0.0
  %584 = vmatprep.subr.mxu0 0.0
  %585 = vmatpush1.msra.mxu0 0.0
  %586 = vmatprep.subr.mxu0 0.0
  %587 = vmatpush1.msra.mxu0 0.0
  %588 = vmatprep.subr.mxu0 0.0
  %589 = vmatpush1.msra.mxu0 0.0
  %590 = vmatprep.subr.mxu0 0.0
  %591 = vmatpush1.msra.mxu0 0.0
  %592 = vmatprep.subr.mxu0 0.0
  %593 = vmatpush1.msra.mxu0 0.0
  %594 = vmatprep.subr.mxu0 0.0
  %595 = vmatpush1.msra.mxu0 0.0
  %596 = vmatprep.subr.mxu0 0.0
  %597 = vmatpush1.msra.mxu0 0.0
  %598 = vmatprep.subr.mxu0 0.0
  %599 = vmatpush1.msra.mxu0 0.0
  %600 = vmatprep.subr.mxu0 0.0
  %601 = vmatpush1.msra.mxu0 0.0
  %602 = vmatprep.subr.mxu0 0.0
  %603 = vmatpush1.msra.mxu0 0.0
  %604 = vmatprep.subr.mxu0 0.0
  %605 = vmatpush1.msra.mxu0 0.0
  %606 = vmatprep.subr.mxu0 0.0
  %607 = vmatpush1.msra.mxu0 0.0
  %608 = vmatprep.subr.mxu0 0.0
  %609 = vmatpush1.msra.mxu0 0.0
  %610 = vmatprep.subr.mxu0 0.0
  %611 = vmatpush1.msra.mxu0 0.0
  %612 = vmatprep.subr.mxu0 0.0
  %613 = vmatpush1.msra.mxu0 0.0
  %614 = vmatprep.subr.mxu0 0.0
  %615 = vmatpush1.msra.mxu0 0.0
  %616 = vmatprep.subr.mxu0 0.0
  %617 = vmatpush1.msra.mxu0 0.0
  %618 = vmatprep.subr.mxu0 0.0
  %619 = vmatpush1.msra.mxu0 0.0
  %620 = vmatprep.subr.mxu0 0.0
  %621 = vmatpush1.msra.mxu0 0.0
  %622 = vmatprep.subr.mxu0 0.0
  %623 = vmatpush1.msra.mxu0 0.0
  %624 = vmatprep.subr.mxu0 0.0
  %625 = vmatpush1.msra.mxu0 0.0
  %626 = vmatprep.subr.mxu0 0.0
  %627 = vmatpush1.msra.mxu0 0.0
  %628 = vmatprep.subr.mxu0 0.0
  %629 = vmatpush1.msra.mxu0 0.0
  %630 = vmatprep.subr.mxu0 0.0
  %631 = vmatpush1.msra.mxu0 0.0
  %632 = vmatprep.subr.mxu0 0.0
  %633 = vmatpush1.msra.mxu0 0.0
  %634 = vmatprep.subr.mxu0 0.0
  %635 = vmatpush1.msra.mxu0 0.0
  %636 = vmatprep.subr.mxu0 0.0
  %637 = vmatpush1.msra.mxu0 0.0
  %638 = vmatprep.subr.mxu0 0.0
  %639 = vmatpush1.msra.mxu0 0.0
  %640 = vmatprep.subr.mxu0 0.0
  %641 = vmatpush1.msra.mxu0 0.0
  %642 = vmatprep.mubr.f32.mxu0 0.0
  %643 = vmatmul.mubr.f32.gmra.mrb[0].mxu0 %v576
  %v644 = vpop.f32.mrb[0].mxu0
  %v645 = vadd.f32 0.0, %v644
  %v646 = vpop.f32.mrb[0].mxu0
  %647 = vdwg.mxu0
  %v648 = vadd.f32 %v190, %v645
  %v649 = vxor.u32 %v648, 2147483648
  %v650 = vmul.f32 %v649, 1.442695
  %v651 = vpow.pop %v650
  %v652 = vadd.f32 %v651, 1.0
  %v653 = vrcp.pop %v652
  %v654 = vmul.f32 1.0, %v653
  %v655 = vadd.f32 %v645, %v300
  %657 = vrot.lane.b32.xlu0 %v655, 112
  %v658 = vpop.permute.xlu0 %657
  %v660 = vmul.f32 %v654, %v658
  %662 = vrot.lane.b32.xlu0 %v660, 16
  %v663 = vpop.permute.xlu0 %662
  %v665 = vadd.f32 %v190, %v663
  %v666 = vtanh.pop %v665
  %v667 = vsub.f32 %v572, %v666
  %669 = vrot.lane.b32.xlu0 %v667, 120
  %v670 = vpop.permute.xlu0 %669
  %v672 = vmul.f32 %v654, %v670
  %674 = vrot.lane.b32.xlu0 %v672, 8
  %v675 = vpop.permute.xlu0 %674
  %v677 = vadd.f32 %v666, %v675
  %679 = vrot.lane.b32.xlu0 %v677, 112
  %v680 = vpop.permute.xlu0 %679
  %682 = vst.msk [vmem:[#allocation2 + $0x18] sm:$0xff] %vm213, %v680
  %v683 = vsub.f32 %v677, %v572
  %685 = vset.pattern.permute.xlu0 0
  %686 = vperm.xlu0 %685, %v56
  %v687 = vpop.permute.xlu0 %686
  %v689 = vmul.f32 %v687, %v683
  %v690 = vadd.f32 %v572, %v689
  %692 = vrot.lane.b32.xlu0 %v690, 112
  %v693 = vpop.permute.xlu0 %692
  %v694 = vsel %vm213, %v693, 0
  %696 = vmatprep.subr.mxu0 0.0
  %697 = vmatpush1.msra.mxu0 %v70
  %698 = vmatprep.subr.mxu0 0.0
  %699 = vmatpush1.msra.mxu0 0.0
  %700 = vmatprep.subr.mxu0 0.0
  %701 = vmatpush1.msra.mxu0 0.0
  %702 = vmatprep.subr.mxu0 0.0
  %703 = vmatpush1.msra.mxu0 0.0
  %704 = vmatprep.subr.mxu0 0.0
  %705 = vmatpush1.msra.mxu0 0.0
  %706 = vmatprep.subr.mxu0 0.0
  %707 = vmatpush1.msra.mxu0 0.0
  %708 = vmatprep.subr.mxu0 0.0
  %709 = vmatpush1.msra.mxu0 0.0
  %710 = vmatprep.subr.mxu0 0.0
  %711 = vmatpush1.msra.mxu0 0.0
  %712 = vmatprep.subr.mxu0 0.0
  %713 = vmatpush1.msra.mxu0 0.0
  %714 = vmatprep.subr.mxu0 0.0
  %715 = vmatpush1.msra.mxu0 0.0
  %716 = vmatprep.subr.mxu0 0.0
  %717 = vmatpush1.msra.mxu0 0.0
  %718 = vmatprep.subr.mxu0 0.0
  %719 = vmatpush1.msra.mxu0 0.0
  %720 = vmatprep.subr.mxu0 0.0
  %721 = vmatpush1.msra.mxu0 0.0
  %722 = vmatprep.subr.mxu0 0.0
  %723 = vmatpush1.msra.mxu0 0.0
  %724 = vmatprep.subr.mxu0 0.0
  %725 = vmatpush1.msra.mxu0 0.0
  %726 = vmatprep.subr.mxu0 0.0
  %727 = vmatpush1.msra.mxu0 0.0
  %728 = vmatprep.subr.mxu0 0.0
  %729 = vmatpush1.msra.mxu0 0.0
  %730 = vmatprep.subr.mxu0 0.0
  %731 = vmatpush1.msra.mxu0 0.0
  %732 = vmatprep.subr.mxu0 0.0
  %733 = vmatpush1.msra.mxu0 0.0
  %734 = vmatprep.subr.mxu0 0.0
  %735 = vmatpush1.msra.mxu0 0.0
  %736 = vmatprep.subr.mxu0 0.0
  %737 = vmatpush1.msra.mxu0 0.0
  %738 = vmatprep.subr.mxu0 0.0
  %739 = vmatpush1.msra.mxu0 0.0
  %740 = vmatprep.subr.mxu0 0.0
  %741 = vmatpush1.msra.mxu0 0.0
  %742 = vmatprep.subr.mxu0 0.0
  %743 = vmatpush1.msra.mxu0 0.0
  %744 = vmatprep.subr.mxu0 0.0
  %745 = vmatpush1.msra.mxu0 0.0
  %746 = vmatprep.subr.mxu0 0.0
  %747 = vmatpush1.msra.mxu0 0.0
  %748 = vmatprep.subr.mxu0 0.0
  %749 = vmatpush1.msra.mxu0 0.0
  %750 = vmatprep.subr.mxu0 0.0
  %751 = vmatpush1.msra.mxu0 0.0
  %752 = vmatprep.subr.mxu0 0.0
  %753 = vmatpush1.msra.mxu0 0.0
  %754 = vmatprep.subr.mxu0 0.0
  %755 = vmatpush1.msra.mxu0 0.0
  %756 = vmatprep.subr.mxu0 0.0
  %757 = vmatpush1.msra.mxu0 0.0
  %758 = vmatprep.subr.mxu0 0.0
  %759 = vmatpush1.msra.mxu0 0.0
  %760 = vmatprep.mubr.f32.mxu0 0.0
  %761 = vmatmul.mubr.f32.gmra.mrb[0].mxu0 %v694
  %v762 = vpop.f32.mrb[0].mxu0
  %v763 = vadd.f32 0.0, %v762
  %v764 = vpop.f32.mrb[0].mxu0
  %765 = vdwg.mxu0
  %v766 = vadd.f32 %v195, %v763
  %v767 = vxor.u32 %v766, 2147483648
  %v768 = vmul.f32 %v767, 1.442695
  %v769 = vpow.pop %v768
  %v770 = vadd.f32 %v769, 1.0
  %v771 = vrcp.pop %v770
  %v772 = vmul.f32 1.0, %v771
  %v773 = vadd.f32 %v763, %v300
  %775 = vrot.lane.b32.xlu0 %v773, 112
  %v776 = vpop.permute.xlu0 %775
  %v778 = vmul.f32 %v772, %v776
  %780 = vrot.lane.b32.xlu0 %v778, 16
  %v781 = vpop.permute.xlu0 %780
  %v783 = vadd.f32 %v195, %v781
  %v784 = vtanh.pop %v783
  %v785 = vsub.f32 %v690, %v784
  %787 = vrot.lane.b32.xlu0 %v785, 120
  %v788 = vpop.permute.xlu0 %787
  %v790 = vmul.f32 %v772, %v788
  %792 = vrot.lane.b32.xlu0 %v790, 8
  %v793 = vpop.permute.xlu0 %792
  %v795 = vadd.f32 %v784, %v793
  %797 = vrot.lane.b32.xlu0 %v795, 112
  %v798 = vpop.permute.xlu0 %797
  %800 = vst.msk [vmem:[#allocation2 + $0x20] sm:$0xff] %vm213, %v798
  %v801 = vsub.f32 %v795, %v690
  %803 = vset.pattern.permute.xlu0 0
  %804 = vperm.xlu0 %803, %v57
  %v805 = vpop.permute.xlu0 %804
  %v807 = vmul.f32 %v805, %v801
  %v808 = vadd.f32 %v690, %v807
  %810 = vrot.lane.b32.xlu0 %v808, 112
  %v811 = vpop.permute.xlu0 %810
  %v812 = vsel %vm213, %v811, 0
  %814 = vmatprep.subr.mxu0 0.0
  %815 = vmatpush1.msra.mxu0 %v70
  %816 = vmatprep.subr.mxu0 0.0
  %817 = vmatpush1.msra.mxu0 0.0
  %818 = vmatprep.subr.mxu0 0.0
  %819 = vmatpush1.msra.mxu0 0.0
  %820 = vmatprep.subr.mxu0 0.0
  %821 = vmatpush1.msra.mxu0 0.0
  %822 = vmatprep.subr.mxu0 0.0
  %823 = vmatpush1.msra.mxu0 0.0
  %824 = vmatprep.subr.mxu0 0.0
  %825 = vmatpush1.msra.mxu0 0.0
  %826 = vmatprep.subr.mxu0 0.0
  %827 = vmatpush1.msra.mxu0 0.0
  %828 = vmatprep.subr.mxu0 0.0
  %829 = vmatpush1.msra.mxu0 0.0
  %830 = vmatprep.subr.mxu0 0.0
  %831 = vmatpush1.msra.mxu0 0.0
  %832 = vmatprep.subr.mxu0 0.0
  %833 = vmatpush1.msra.mxu0 0.0
  %834 = vmatprep.subr.mxu0 0.0
  %835 = vmatpush1.msra.mxu0 0.0
  %836 = vmatprep.subr.mxu0 0.0
  %837 = vmatpush1.msra.mxu0 0.0
  %838 = vmatprep.subr.mxu0 0.0
  %839 = vmatpush1.msra.mxu0 0.0
  %840 = vmatprep.subr.mxu0 0.0
  %841 = vmatpush1.msra.mxu0 0.0
  %842 = vmatprep.subr.mxu0 0.0
  %843 = vmatpush1.msra.mxu0 0.0
  %844 = vmatprep.subr.mxu0 0.0
  %845 = vmatpush1.msra.mxu0 0.0
  %846 = vmatprep.subr.mxu0 0.0
  %847 = vmatpush1.msra.mxu0 0.0
  %848 = vmatprep.subr.mxu0 0.0
  %849 = vmatpush1.msra.mxu0 0.0
  %850 = vmatprep.subr.mxu0 0.0
  %851 = vmatpush1.msra.mxu0 0.0
  %852 = vmatprep.subr.mxu0 0.0
  %853 = vmatpush1.msra.mxu0 0.0
  %854 = vmatprep.subr.mxu0 0.0
  %855 = vmatpush1.msra.mxu0 0.0
  %856 = vmatprep.subr.mxu0 0.0
  %857 = vmatpush1.msra.mxu0 0.0
  %858 = vmatprep.subr.mxu0 0.0
  %859 = vmatpush1.msra.mxu0 0.0
  %860 = vmatprep.subr.mxu0 0.0
  %861 = vmatpush1.msra.mxu0 0.0
  %862 = vmatprep.subr.mxu0 0.0
  %863 = vmatpush1.msra.mxu0 0.0
  %864 = vmatprep.subr.mxu0 0.0
  %865 = vmatpush1.msra.mxu0 0.0
  %866 = vmatprep.subr.mxu0 0.0
  %867 = vmatpush1.msra.mxu0 0.0
  %868 = vmatprep.subr.mxu0 0.0
  %869 = vmatpush1.msra.mxu0 0.0
  %870 = vmatprep.subr.mxu0 0.0
  %871 = vmatpush1.msra.mxu0 0.0
  %872 = vmatprep.subr.mxu0 0.0
  %873 = vmatpush1.msra.mxu0 0.0
  %874 = vmatprep.subr.mxu0 0.0
  %875 = vmatpush1.msra.mxu0 0.0
  %876 = vmatprep.subr.mxu0 0.0
  %877 = vmatpush1.msra.mxu0 0.0
  %878 = vmatprep.mubr.f32.mxu0 0.0
  %879 = vmatmul.mubr.f32.gmra.mrb[0].mxu0 %v812
  %v880 = vpop.f32.mrb[0].mxu0
  %v881 = vadd.f32 0.0, %v880
  %v882 = vpop.f32.mrb[0].mxu0
  %883 = vdwg.mxu0
  %v884 = vadd.f32 %v200, %v881
  %v885 = vxor.u32 %v884, 2147483648
  %v886 = vmul.f32 %v885, 1.442695
  %v887 = vpow.pop %v886
  %v888 = vadd.f32 %v887, 1.0
  %v889 = vrcp.pop %v888
  %v890 = vmul.f32 1.0, %v889
  %v891 = vadd.f32 %v881, %v300
  %893 = vrot.lane.b32.xlu0 %v891, 112
  %v894 = vpop.permute.xlu0 %893
  %v896 = vmul.f32 %v890, %v894
  %898 = vrot.lane.b32.xlu0 %v896, 16
  %v899 = vpop.permute.xlu0 %898
  %v901 = vadd.f32 %v200, %v899
  %v902 = vtanh.pop %v901
  %v903 = vsub.f32 %v808, %v902
  %905 = vrot.lane.b32.xlu0 %v903, 120
  %v906 = vpop.permute.xlu0 %905
  %v908 = vmul.f32 %v890, %v906
  %910 = vrot.lane.b32.xlu0 %v908, 8
  %v911 = vpop.permute.xlu0 %910
  %v913 = vadd.f32 %v902, %v911
  %915 = vrot.lane.b32.xlu0 %v913, 112
  %v916 = vpop.permute.xlu0 %915
  %918 = vst.msk [vmem:[#allocation2 + $0x28] sm:$0xff] %vm213, %v916
  %v919 = vsub.f32 %v913, %v808
  %921 = vset.pattern.permute.xlu0 0
  %922 = vperm.xlu0 %921, %v58
  %v923 = vpop.permute.xlu0 %922
  %v925 = vmul.f32 %v923, %v919
  %v926 = vadd.f32 %v808, %v925
  %928 = vrot.lane.b32.xlu0 %v926, 112
  %v929 = vpop.permute.xlu0 %928
  %v930 = vsel %vm213, %v929, 0
  %932 = vmatprep.subr.mxu0 0.0
  %933 = vmatpush1.msra.mxu0 %v70
  %934 = vmatprep.subr.mxu0 0.0
  %935 = vmatpush1.msra.mxu0 0.0
  %936 = vmatprep.subr.mxu0 0.0
  %937 = vmatpush1.msra.mxu0 0.0
  %938 = vmatprep.subr.mxu0 0.0
  %939 = vmatpush1.msra.mxu0 0.0
  %940 = vmatprep.subr.mxu0 0.0
  %941 = vmatpush1.msra.mxu0 0.0
  %942 = vmatprep.subr.mxu0 0.0
  %943 = vmatpush1.msra.mxu0 0.0
  %944 = vmatprep.subr.mxu0 0.0
  %945 = vmatpush1.msra.mxu0 0.0
  %946 = vmatprep.subr.mxu0 0.0
  %947 = vmatpush1.msra.mxu0 0.0
  %948 = vmatprep.subr.mxu0 0.0
  %949 = vmatpush1.msra.mxu0 0.0
  %950 = vmatprep.subr.mxu0 0.0
  %951 = vmatpush1.msra.mxu0 0.0
  %952 = vmatprep.subr.mxu0 0.0
  %953 = vmatpush1.msra.mxu0 0.0
  %954 = vmatprep.subr.mxu0 0.0
  %955 = vmatpush1.msra.mxu0 0.0
  %956 = vmatprep.subr.mxu0 0.0
  %957 = vmatpush1.msra.mxu0 0.0
  %958 = vmatprep.subr.mxu0 0.0
  %959 = vmatpush1.msra.mxu0 0.0
  %960 = vmatprep.subr.mxu0 0.0
  %961 = vmatpush1.msra.mxu0 0.0
  %962 = vmatprep.subr.mxu0 0.0
  %963 = vmatpush1.msra.mxu0 0.0
  %964 = vmatprep.subr.mxu0 0.0
  %965 = vmatpush1.msra.mxu0 0.0
  %966 = vmatprep.subr.mxu0 0.0
  %967 = vmatpush1.msra.mxu0 0.0
  %968 = vmatprep.subr.mxu0 0.0
  %969 = vmatpush1.msra.mxu0 0.0
  %970 = vmatprep.subr.mxu0 0.0
  %971 = vmatpush1.msra.mxu0 0.0
  %972 = vmatprep.subr.mxu0 0.0
  %973 = vmatpush1.msra.mxu0 0.0
  %974 = vmatprep.subr.mxu0 0.0
  %975 = vmatpush1.msra.mxu0 0.0
  %976 = vmatprep.subr.mxu0 0.0
  %977 = vmatpush1.msra.mxu0 0.0
  %978 = vmatprep.subr.mxu0 0.0
  %979 = vmatpush1.msra.mxu0 0.0
  %980 = vmatprep.subr.mxu0 0.0
  %981 = vmatpush1.msra.mxu0 0.0
  %982 = vmatprep.subr.mxu0 0.0
  %983 = vmatpush1.msra.mxu0 0.0
  %984 = vmatprep.subr.mxu0 0.0
  %985 = vmatpush1.msra.mxu0 0.0
  %986 = vmatprep.subr.mxu0 0.0
  %987 = vmatpush1.msra.mxu0 0.0
  %988 = vmatprep.subr.mxu0 0.0
  %989 = vmatpush1.msra.mxu0 0.0
  %990 = vmatprep.subr.mxu0 0.0
  %991 = vmatpush1.msra.mxu0 0.0
  %992 = vmatprep.subr.mxu0 0.0
  %993 = vmatpush1.msra.mxu0 0.0
  %994 = vmatprep.subr.mxu0 0.0
  %995 = vmatpush1.msra.mxu0 0.0
  %996 = vmatprep.mubr.f32.mxu0 0.0
  %997 = vmatmul.mubr.f32.gmra.mrb[0].mxu0 %v930
  %v998 = vpop.f32.mrb[0].mxu0
  %v999 = vadd.f32 0.0, %v998
  %v1000 = vpop.f32.mrb[0].mxu0
  %1001 = vdwg.mxu0
  %v1002 = vadd.f32 %v205, %v999
  %v1003 = vxor.u32 %v1002, 2147483648
  %v1004 = vmul.f32 %v1003, 1.442695
  %v1005 = vpow.pop %v1004
  %v1006 = vadd.f32 %v1005, 1.0
  %v1007 = vrcp.pop %v1006
  %v1008 = vmul.f32 1.0, %v1007
  %v1009 = vadd.f32 %v999, %v300
  %1011 = vrot.lane.b32.xlu0 %v1009, 112
  %v1012 = vpop.permute.xlu0 %1011
  %v1014 = vmul.f32 %v1008, %v1012
  %1016 = vrot.lane.b32.xlu0 %v1014, 16
  %v1017 = vpop.permute.xlu0 %1016
  %v1019 = vadd.f32 %v205, %v1017
  %v1020 = vtanh.pop %v1019
  %v1021 = vsub.f32 %v926, %v1020
  %1023 = vrot.lane.b32.xlu0 %v1021, 120
  %v1024 = vpop.permute.xlu0 %1023
  %v1026 = vmul.f32 %v1008, %v1024
  %1028 = vrot.lane.b32.xlu0 %v1026, 8
  %v1029 = vpop.permute.xlu0 %1028
  %v1031 = vadd.f32 %v1020, %v1029
  %1033 = vrot.lane.b32.xlu0 %v1031, 112
  %v1034 = vpop.permute.xlu0 %1033
  %1036 = vst.msk [vmem:[#allocation2 + $0x30] sm:$0xff] %vm213, %v1034
  %v1037 = vsub.f32 %v1031, %v926
  %1039 = vset.pattern.permute.xlu0 0
  %1040 = vperm.xlu0 %1039, %v59
  %v1041 = vpop.permute.xlu0 %1040
  %v1043 = vmul.f32 %v1041, %v1037
  %v1044 = vadd.f32 %v926, %v1043
  %1046 = vrot.lane.b32.xlu0 %v1044, 112
  %v1047 = vpop.permute.xlu0 %1046
  %v1048 = vsel %vm213, %v1047, 0
  %1050 = vmatprep.subr.mxu0 0.0
  %1051 = vmatpush1.msra.mxu0 %v70
  %1052 = vmatprep.subr.mxu0 0.0
  %1053 = vmatpush1.msra.mxu0 0.0
  %1054 = vmatprep.subr.mxu0 0.0
  %1055 = vmatpush1.msra.mxu0 0.0
  %1056 = vmatprep.subr.mxu0 0.0
  %1057 = vmatpush1.msra.mxu0 0.0
  %1058 = vmatprep.subr.mxu0 0.0
  %1059 = vmatpush1.msra.mxu0 0.0
  %1060 = vmatprep.subr.mxu0 0.0
  %1061 = vmatpush1.msra.mxu0 0.0
  %1062 = vmatprep.subr.mxu0 0.0
  %1063 = vmatpush1.msra.mxu0 0.0
  %1064 = vmatprep.subr.mxu0 0.0
  %1065 = vmatpush1.msra.mxu0 0.0
  %1066 = vmatprep.subr.mxu0 0.0
  %1067 = vmatpush1.msra.mxu0 0.0
  %1068 = vmatprep.subr.mxu0 0.0
  %1069 = vmatpush1.msra.mxu0 0.0
  %1070 = vmatprep.subr.mxu0 0.0
  %1071 = vmatpush1.msra.mxu0 0.0
  %1072 = vmatprep.subr.mxu0 0.0
  %1073 = vmatpush1.msra.mxu0 0.0
  %1074 = vmatprep.subr.mxu0 0.0
  %1075 = vmatpush1.msra.mxu0 0.0
  %1076 = vmatprep.subr.mxu0 0.0
  %1077 = vmatpush1.msra.mxu0 0.0
  %1078 = vmatprep.subr.mxu0 0.0
  %1079 = vmatpush1.msra.mxu0 0.0
  %1080 = vmatprep.subr.mxu0 0.0
  %1081 = vmatpush1.msra.mxu0 0.0
  %1082 = vmatprep.subr.mxu0 0.0
  %1083 = vmatpush1.msra.mxu0 0.0
  %1084 = vmatprep.subr.mxu0 0.0
  %1085 = vmatpush1.msra.mxu0 0.0
  %1086 = vmatprep.subr.mxu0 0.0
  %1087 = vmatpush1.msra.mxu0 0.0
  %1088 = vmatprep.subr.mxu0 0.0
  %1089 = vmatpush1.msra.mxu0 0.0
  %1090 = vmatprep.subr.mxu0 0.0
  %1091 = vmatpush1.msra.mxu0 0.0
  %1092 = vmatprep.subr.mxu0 0.0
  %1093 = vmatpush1.msra.mxu0 0.0
  %1094 = vmatprep.subr.mxu0 0.0
  %1095 = vmatpush1.msra.mxu0 0.0
  %1096 = vmatprep.subr.mxu0 0.0
  %1097 = vmatpush1.msra.mxu0 0.0
  %1098 = vmatprep.subr.mxu0 0.0
  %1099 = vmatpush1.msra.mxu0 0.0
  %1100 = vmatprep.subr.mxu0 0.0
  %1101 = vmatpush1.msra.mxu0 0.0
  %1102 = vmatprep.subr.mxu0 0.0
  %1103 = vmatpush1.msra.mxu0 0.0
  %1104 = vmatprep.subr.mxu0 0.0
  %1105 = vmatpush1.msra.mxu0 0.0
  %1106 = vmatprep.subr.mxu0 0.0
  %1107 = vmatpush1.msra.mxu0 0.0
  %1108 = vmatprep.subr.mxu0 0.0
  %1109 = vmatpush1.msra.mxu0 0.0
  %1110 = vmatprep.subr.mxu0 0.0
  %1111 = vmatpush1.msra.mxu0 0.0
  %1112 = vmatprep.subr.mxu0 0.0
  %1113 = vmatpush1.msra.mxu0 0.0
  %1114 = vmatprep.mubr.f32.mxu0 0.0
  %1115 = vmatmul.mubr.f32.gmra.mrb[0].mxu0 %v1048
  %v1116 = vpop.f32.mrb[0].mxu0
  %v1117 = vadd.f32 0.0, %v1116
  %v1118 = vpop.f32.mrb[0].mxu0
  %1119 = vdwg.mxu0
  %v1120 = vadd.f32 %v210, %v1117
  %v1121 = vxor.u32 %v1120, 2147483648
  %v1122 = vmul.f32 %v1121, 1.442695
  %v1123 = vpow.pop %v1122
  %v1124 = vadd.f32 %v1123, 1.0
  %v1125 = vrcp.pop %v1124
  %v1126 = vmul.f32 1.0, %v1125
  %v1127 = vadd.f32 %v1117, %v300
  %1129 = vrot.lane.b32.xlu0 %v1127, 112
  %v1130 = vpop.permute.xlu0 %1129
  %v1132 = vmul.f32 %v1126, %v1130
  %1134 = vrot.lane.b32.xlu0 %v1132, 16
  %v1135 = vpop.permute.xlu0 %1134
  %v1137 = vadd.f32 %v210, %v1135
  %v1138 = vtanh.pop %v1137
  %v1139 = vsub.f32 %v1044, %v1138
  %1141 = vrot.lane.b32.xlu0 %v1139, 120
  %v1142 = vpop.permute.xlu0 %1141
  %v1144 = vmul.f32 %v1126, %v1142
  %1146 = vrot.lane.b32.xlu0 %v1144, 8
  %v1147 = vpop.permute.xlu0 %1146
  %v1149 = vadd.f32 %v1138, %v1147
  %1151 = vrot.lane.b32.xlu0 %v1149, 112
  %v1152 = vpop.permute.xlu0 %1151
  %1154 = vst.msk [vmem:[#allocation2 + $0x38] sm:$0xff] %vm213, %v1152
  %v1155 = vld [vmem:[#allocation2] sm:$0xff]
  %v1156 = vld [vmem:[#allocation2 + $0x8] sm:$0xff]
  %v1157 = vld [vmem:[#allocation2 + $0x10] sm:$0xff]
  %v1158 = vld [vmem:[#allocation2 + $0x18] sm:$0xff]
  %v1159 = vld [vmem:[#allocation2 + $0x20] sm:$0xff]
  %v1160 = vld [vmem:[#allocation2 + $0x28] sm:$0xff]
  %v1161 = vld [vmem:[#allocation2 + $0x30] sm:$0xff]
  %v1162 = vld [vmem:[#allocation2 + $0x38] sm:$0xff]
  %v1163 = vld [vmem:[%s6] sm:$0xff]
  %v1164 = vld [vmem:[%s7] sm:$0xff]
  %v1165 = vld [vmem:[%s8] sm:$0x1]
  %v1166 = vld [vmem:[%s9] sm:$0x1]
  %v1168 = vlaneseq
  %v1169 = vshrl.u32 %v1168, 7
  %v1170 = vsub.s32 0, %v1169
  %v1171 = vrot.slane %v1165, %v1170
  %v1174 = vsel %vm213, %v1155, 0
  %v1177 = vsel %vm213, %v1156, 0
  %v1180 = vsel %vm213, %v1157, 0
  %v1183 = vsel %vm213, %v1158, 0
  %v1186 = vsel %vm213, %v1159, 0
  %v1189 = vsel %vm213, %v1160, 0
  %v1192 = vsel %vm213, %v1161, 0
  %v1195 = vsel %vm213, %v1162, 0
  %1197 = vmatprep.subr.mxu0 0.0
  %1198 = vmatpush1.msra.mxu0 %v1163
  %1199 = vmatprep.subr.mxu0 0.0
  %1200 = vmatpush1.msra.mxu0 0.0
  %1201 = vmatprep.subr.mxu0 0.0
  %1202 = vmatpush1.msra.mxu0 0.0
  %1203 = vmatprep.subr.mxu0 0.0
  %1204 = vmatpush1.msra.mxu0 0.0
  %1205 = vmatprep.subr.mxu0 0.0
  %1206 = vmatpush1.msra.mxu0 0.0
  %1207 = vmatprep.subr.mxu0 0.0
  %1208 = vmatpush1.msra.mxu0 0.0
  %1209 = vmatprep.subr.mxu0 0.0
  %1210 = vmatpush1.msra.mxu0 0.0
  %1211 = vmatprep.subr.mxu0 0.0
  %1212 = vmatpush1.msra.mxu0 0.0
  %1213 = vmatprep.subr.mxu0 0.0
  %1214 = vmatpush1.msra.mxu0 0.0
  %1215 = vmatprep.subr.mxu0 0.0
  %1216 = vmatpush1.msra.mxu0 0.0
  %1217 = vmatprep.subr.mxu0 0.0
  %1218 = vmatpush1.msra.mxu0 0.0
  %1219 = vmatprep.subr.mxu0 0.0
  %1220 = vmatpush1.msra.mxu0 0.0
  %1221 = vmatprep.subr.mxu0 0.0
  %1222 = vmatpush1.msra.mxu0 0.0
  %1223 = vmatprep.subr.mxu0 0.0
  %1224 = vmatpush1.msra.mxu0 0.0
  %1225 = vmatprep.subr.mxu0 0.0
  %1226 = vmatpush1.msra.mxu0 0.0
  %1227 = vmatprep.subr.mxu0 0.0
  %1228 = vmatpush1.msra.mxu0 0.0
  %1229 = vmatprep.subr.mxu0 0.0
  %1230 = vmatpush1.msra.mxu0 0.0
  %1231 = vmatprep.subr.mxu0 0.0
  %1232 = vmatpush1.msra.mxu0 0.0
  %1233 = vmatprep.subr.mxu0 0.0
  %1234 = vmatpush1.msra.mxu0 0.0
  %1235 = vmatprep.subr.mxu0 0.0
  %1236 = vmatpush1.msra.mxu0 0.0
  %1237 = vmatprep.subr.mxu0 0.0
  %1238 = vmatpush1.msra.mxu0 0.0
  %1239 = vmatprep.subr.mxu0 0.0
  %1240 = vmatpush1.msra.mxu0 0.0
  %1241 = vmatprep.subr.mxu0 0.0
  %1242 = vmatpush1.msra.mxu0 0.0
  %1243 = vmatprep.subr.mxu0 0.0
  %1244 = vmatpush1.msra.mxu0 0.0
  %1245 = vmatprep.subr.mxu0 0.0
  %1246 = vmatpush1.msra.mxu0 0.0
  %1247 = vmatprep.subr.mxu0 0.0
  %1248 = vmatpush1.msra.mxu0 0.0
  %1249 = vmatprep.subr.mxu0 0.0
  %1250 = vmatpush1.msra.mxu0 0.0
  %1251 = vmatprep.subr.mxu0 0.0
  %1252 = vmatpush1.msra.mxu0 0.0
  %1253 = vmatprep.subr.mxu0 0.0
  %1254 = vmatpush1.msra.mxu0 0.0
  %1255 = vmatprep.subr.mxu0 0.0
  %1256 = vmatpush1.msra.mxu0 0.0
  %1257 = vmatprep.subr.mxu0 0.0
  %1258 = vmatpush1.msra.mxu0 0.0
  %1259 = vmatprep.subr.mxu0 0.0
  %1260 = vmatpush1.msra.mxu0 0.0
  %1261 = vmatprep.mubr.f32.mxu0 0.0
  %1262 = vmatmul.mubr.f32.gmra.mrb[0].mxu0 %v1174
  %v1263 = vpop.f32.mrb[0].mxu0
  %v1264 = vadd.f32 %v1171, %v1263
  %v1265 = vpop.f32.mrb[0].mxu0
  %1266 = vmatprep.mubr.f32.mxu0 0.0
  %1267 = vmatmul.mubr.f32.gmra.mrb[0].mxu0 %v1177
  %v1268 = vpop.f32.mrb[0].mxu0
  %v1269 = vadd.f32 %v1171, %v1268
  %v1270 = vpop.f32.mrb[0].mxu0
  %1271 = vmatprep.mubr.f32.mxu0 0.0
  %1272 = vmatmul.mubr.f32.gmra.mrb[0].mxu0 %v1180
  %v1273 = vpop.f32.mrb[0].mxu0
  %v1274 = vadd.f32 %v1171, %v1273
  %v1275 = vpop.f32.mrb[0].mxu0
  %1276 = vmatprep.mubr.f32.mxu0 0.0
  %1277 = vmatmul.mubr.f32.gmra.mrb[0].mxu0 %v1183
  %v1278 = vpop.f32.mrb[0].mxu0
  %v1279 = vadd.f32 %v1171, %v1278
  %v1280 = vpop.f32.mrb[0].mxu0
  %1281 = vmatprep.mubr.f32.mxu0 0.0
  %1282 = vmatmul.mubr.f32.gmra.mrb[0].mxu0 %v1186
  %v1283 = vpop.f32.mrb[0].mxu0
  %v1284 = vadd.f32 %v1171, %v1283
  %v1285 = vpop.f32.mrb[0].mxu0
  %1286 = vmatprep.mubr.f32.mxu0 0.0
  %1287 = vmatmul.mubr.f32.gmra.mrb[0].mxu0 %v1189
  %v1288 = vpop.f32.mrb[0].mxu0
  %v1289 = vadd.f32 %v1171, %v1288
  %v1290 = vpop.f32.mrb[0].mxu0
  %1291 = vmatprep.mubr.f32.mxu0 0.0
  %1292 = vmatmul.mubr.f32.gmra.mrb[0].mxu0 %v1192
  %v1293 = vpop.f32.mrb[0].mxu0
  %v1294 = vadd.f32 %v1171, %v1293
  %v1295 = vpop.f32.mrb[0].mxu0
  %1296 = vmatprep.mubr.f32.mxu0 0.0
  %1297 = vmatmul.mubr.f32.gmra.mrb[0].mxu0 %v1195
  %v1298 = vpop.f32.mrb[0].mxu0
  %v1299 = vadd.f32 %v1171, %v1298
  %v1300 = vpop.f32.mrb[0].mxu0
  %1301 = vdwg.mxu0
  %1302 = vmatprep.subr.mxu0 0.0
  %1303 = vmatpush1.msra.mxu0 %v1164
  %1304 = vmatprep.subr.mxu0 0.0
  %1305 = vmatpush1.msra.mxu0 0.0
  %1306 = vmatprep.subr.mxu0 0.0
  %1307 = vmatpush1.msra.mxu0 0.0
  %1308 = vmatprep.subr.mxu0 0.0
  %1309 = vmatpush1.msra.mxu0 0.0
  %1310 = vmatprep.subr.mxu0 0.0
  %1311 = vmatpush1.msra.mxu0 0.0
  %1312 = vmatprep.subr.mxu0 0.0
  %1313 = vmatpush1.msra.mxu0 0.0
  %1314 = vmatprep.subr.mxu0 0.0
  %1315 = vmatpush1.msra.mxu0 0.0
  %1316 = vmatprep.subr.mxu0 0.0
  %1317 = vmatpush1.msra.mxu0 0.0
  %1318 = vmatprep.subr.mxu0 0.0
  %1319 = vmatpush1.msra.mxu0 0.0
  %1320 = vmatprep.subr.mxu0 0.0
  %1321 = vmatpush1.msra.mxu0 0.0
  %1322 = vmatprep.subr.mxu0 0.0
  %1323 = vmatpush1.msra.mxu0 0.0
  %1324 = vmatprep.subr.mxu0 0.0
  %1325 = vmatpush1.msra.mxu0 0.0
  %1326 = vmatprep.subr.mxu0 0.0
  %1327 = vmatpush1.msra.mxu0 0.0
  %1328 = vmatprep.subr.mxu0 0.0
  %1329 = vmatpush1.msra.mxu0 0.0
  %1330 = vmatprep.subr.mxu0 0.0
  %1331 = vmatpush1.msra.mxu0 0.0
  %1332 = vmatprep.subr.mxu0 0.0
  %1333 = vmatpush1.msra.mxu0 0.0
  %1334 = vmatprep.subr.mxu0 0.0
  %1335 = vmatpush1.msra.mxu0 0.0
  %1336 = vmatprep.subr.mxu0 0.0
  %1337 = vmatpush1.msra.mxu0 0.0
  %1338 = vmatprep.subr.mxu0 0.0
  %1339 = vmatpush1.msra.mxu0 0.0
  %1340 = vmatprep.subr.mxu0 0.0
  %1341 = vmatpush1.msra.mxu0 0.0
  %1342 = vmatprep.subr.mxu0 0.0
  %1343 = vmatpush1.msra.mxu0 0.0
  %1344 = vmatprep.subr.mxu0 0.0
  %1345 = vmatpush1.msra.mxu0 0.0
  %1346 = vmatprep.subr.mxu0 0.0
  %1347 = vmatpush1.msra.mxu0 0.0
  %1348 = vmatprep.subr.mxu0 0.0
  %1349 = vmatpush1.msra.mxu0 0.0
  %1350 = vmatprep.subr.mxu0 0.0
  %1351 = vmatpush1.msra.mxu0 0.0
  %1352 = vmatprep.subr.mxu0 0.0
  %1353 = vmatpush1.msra.mxu0 0.0
  %1354 = vmatprep.subr.mxu0 0.0
  %1355 = vmatpush1.msra.mxu0 0.0
  %1356 = vmatprep.subr.mxu0 0.0
  %1357 = vmatpush1.msra.mxu0 0.0
  %1358 = vmatprep.subr.mxu0 0.0
  %1359 = vmatpush1.msra.mxu0 0.0
  %1360 = vmatprep.subr.mxu0 0.0
  %1361 = vmatpush1.msra.mxu0 0.0
  %1362 = vmatprep.subr.mxu0 0.0
  %1363 = vmatpush1.msra.mxu0 0.0
  %1364 = vmatprep.subr.mxu0 0.0
  %1365 = vmatpush1.msra.mxu0 0.0
  %1366 = vmatprep.mubr.f32.mxu0 0.0
  %1367 = vmatmul.mubr.f32.gmra.mrb[0].mxu0 %v215
  %v1368 = vpop.f32.mrb[0].mxu0
  %v1369 = vadd.f32 0.0, %v1368
  %v1370 = vpop.f32.mrb[0].mxu0
  %1371 = vdwg.mxu0
  %v1372 = vadd.f32 %v1264, %v1369
  %v1373 = vxor.u32 %v1372, 2147483648
  %v1374 = vmul.f32 %v1373, 1.442695
  %v1375 = vpow.pop %v1374
  %v1376 = vadd.f32 %v1375, 1.0
  %v1377 = vrcp.pop %v1376
  %v1378 = vmul.f32 1.0, %v1377
  %v1380 = vlaneseq
  %v1381 = vshrl.u32 %v1380, 7
  %v1382 = vsub.s32 0, %v1381
  %v1383 = vrot.slane %v1166, %v1382
  %1384 = vrot.lane.b32.xlu0 %v1383, 16
  %v1385 = vpop.permute.xlu0 %1384
  %v1387 = vadd.f32 %v1369, %v1385
  %1389 = vrot.lane.b32.xlu0 %v1387, 112
  %v1390 = vpop.permute.xlu0 %1389
  %v1392 = vmul.f32 %v1378, %v1390
  %1394 = vrot.lane.b32.xlu0 %v1392, 16
  %v1395 = vpop.permute.xlu0 %1394
  %v1397 = vadd.f32 %v1264, %v1395
  %v1398 = vtanh.pop %v1397
  %v1399 = vsub.f32 0.0, %v1398
  %1401 = vrot.lane.b32.xlu0 %v1399, 120
  %v1402 = vpop.permute.xlu0 %1401
  %v1404 = vmul.f32 %v1378, %v1402
  %1406 = vrot.lane.b32.xlu0 %v1404, 8
  %v1407 = vpop.permute.xlu0 %1406
  %v1409 = vadd.f32 %v1398, %v1407
  %1411 = vrot.lane.b32.xlu0 %v1409, 112
  %v1412 = vpop.permute.xlu0 %1411
  %1414 = vst.msk [vmem:[#allocation2] sm:$0xff] %vm213, %v1412
  %v1415 = vmul.f32 %v333, %v1409
  %v1416 = vadd.f32 %v1415, 0.0
  %1418 = vrot.lane.b32.xlu0 %v1416, 112
  %v1419 = vpop.permute.xlu0 %1418
  %v1420 = vsel %vm213, %v1419, 0
  %1422 = vmatprep.subr.mxu0 0.0
  %1423 = vmatpush1.msra.mxu0 %v1164
  %1424 = vmatprep.subr.mxu0 0.0
  %1425 = vmatpush1.msra.mxu0 0.0
  %1426 = vmatprep.subr.mxu0 0.0
  %1427 = vmatpush1.msra.mxu0 0.0
  %1428 = vmatprep.subr.mxu0 0.0
  %1429 = vmatpush1.msra.mxu0 0.0
  %1430 = vmatprep.subr.mxu0 0.0
  %1431 = vmatpush1.msra.mxu0 0.0
  %1432 = vmatprep.subr.mxu0 0.0
  %1433 = vmatpush1.msra.mxu0 0.0
  %1434 = vmatprep.subr.mxu0 0.0
  %1435 = vmatpush1.msra.mxu0 0.0
  %1436 = vmatprep.subr.mxu0 0.0
  %1437 = vmatpush1.msra.mxu0 0.0
  %1438 = vmatprep.subr.mxu0 0.0
  %1439 = vmatpush1.msra.mxu0 0.0
  %1440 = vmatprep.subr.mxu0 0.0
  %1441 = vmatpush1.msra.mxu0 0.0
  %1442 = vmatprep.subr.mxu0 0.0
  %1443 = vmatpush1.msra.mxu0 0.0
  %1444 = vmatprep.subr.mxu0 0.0
  %1445 = vmatpush1.msra.mxu0 0.0
  %1446 = vmatprep.subr.mxu0 0.0
  %1447 = vmatpush1.msra.mxu0 0.0
  %1448 = vmatprep.subr.mxu0 0.0
  %1449 = vmatpush1.msra.mxu0 0.0
  %1450 = vmatprep.subr.mxu0 0.0
  %1451 = vmatpush1.msra.mxu0 0.0
  %1452 = vmatprep.subr.mxu0 0.0
  %1453 = vmatpush1.msra.mxu0 0.0
  %1454 = vmatprep.subr.mxu0 0.0
  %1455 = vmatpush1.msra.mxu0 0.0
  %1456 = vmatprep.subr.mxu0 0.0
  %1457 = vmatpush1.msra.mxu0 0.0
  %1458 = vmatprep.subr.mxu0 0.0
  %1459 = vmatpush1.msra.mxu0 0.0
  %1460 = vmatprep.subr.mxu0 0.0
  %1461 = vmatpush1.msra.mxu0 0.0
  %1462 = vmatprep.subr.mxu0 0.0
  %1463 = vmatpush1.msra.mxu0 0.0
  %1464 = vmatprep.subr.mxu0 0.0
  %1465 = vmatpush1.msra.mxu0 0.0
  %1466 = vmatprep.subr.mxu0 0.0
  %1467 = vmatpush1.msra.mxu0 0.0
  %1468 = vmatprep.subr.mxu0 0.0
  %1469 = vmatpush1.msra.mxu0 0.0
  %1470 = vmatprep.subr.mxu0 0.0
  %1471 = vmatpush1.msra.mxu0 0.0
  %1472 = vmatprep.subr.mxu0 0.0
  %1473 = vmatpush1.msra.mxu0 0.0
  %1474 = vmatprep.subr.mxu0 0.0
  %1475 = vmatpush1.msra.mxu0 0.0
  %1476 = vmatprep.subr.mxu0 0.0
  %1477 = vmatpush1.msra.mxu0 0.0
  %1478 = vmatprep.subr.mxu0 0.0
  %1479 = vmatpush1.msra.mxu0 0.0
  %1480 = vmatprep.subr.mxu0 0.0
  %1481 = vmatpush1.msra.mxu0 0.0
  %1482 = vmatprep.subr.mxu0 0.0
  %1483 = vmatpush1.msra.mxu0 0.0
  %1484 = vmatprep.subr.mxu0 0.0
  %1485 = vmatpush1.msra.mxu0 0.0
  %1486 = vmatprep.mubr.f32.mxu0 0.0
  %1487 = vmatmul.mubr.f32.gmra.mrb[0].mxu0 %v1420
  %v1488 = vpop.f32.mrb[0].mxu0
  %v1489 = vadd.f32 0.0, %v1488
  %v1490 = vpop.f32.mrb[0].mxu0
  %1491 = vdwg.mxu0
  %v1492 = vadd.f32 %v1269, %v1489
  %v1493 = vxor.u32 %v1492, 2147483648
  %v1494 = vmul.f32 %v1493, 1.442695
  %v1495 = vpow.pop %v1494
  %v1496 = vadd.f32 %v1495, 1.0
  %v1497 = vrcp.pop %v1496
  %v1498 = vmul.f32 1.0, %v1497
  %v1499 = vadd.f32 %v1489, %v1385
  %1501 = vrot.lane.b32.xlu0 %v1499, 112
  %v1502 = vpop.permute.xlu0 %1501
  %v1504 = vmul.f32 %v1498, %v1502
  %1506 = vrot.lane.b32.xlu0 %v1504, 16
  %v1507 = vpop.permute.xlu0 %1506
  %v1509 = vadd.f32 %v1269, %v1507
  %v1510 = vtanh.pop %v1509
  %v1511 = vsub.f32 %v1416, %v1510
  %1513 = vrot.lane.b32.xlu0 %v1511, 120
  %v1514 = vpop.permute.xlu0 %1513
  %v1516 = vmul.f32 %v1498, %v1514
  %1518 = vrot.lane.b32.xlu0 %v1516, 8
  %v1519 = vpop.permute.xlu0 %1518
  %v1521 = vadd.f32 %v1510, %v1519
  %1523 = vrot.lane.b32.xlu0 %v1521, 112
  %v1524 = vpop.permute.xlu0 %1523
  %1526 = vst.msk [vmem:[#allocation2 + $0x8] sm:$0xff] %vm213, %v1524
  %v1527 = vsub.f32 %v1521, %v1416
  %v1528 = vmul.f32 %v451, %v1527
  %v1529 = vadd.f32 %v1416, %v1528
  %1531 = vrot.lane.b32.xlu0 %v1529, 112
  %v1532 = vpop.permute.xlu0 %1531
  %v1533 = vsel %vm213, %v1532, 0
  %1535 = vmatprep.subr.mxu0 0.0
  %1536 = vmatpush1.msra.mxu0 %v1164
  %1537 = vmatprep.subr.mxu0 0.0
  %1538 = vmatpush1.msra.mxu0 0.0
  %1539 = vmatprep.subr.mxu0 0.0
  %1540 = vmatpush1.msra.mxu0 0.0
  %1541 = vmatprep.subr.mxu0 0.0
  %1542 = vmatpush1.msra.mxu0 0.0
  %1543 = vmatprep.subr.mxu0 0.0
  %1544 = vmatpush1.msra.mxu0 0.0
  %1545 = vmatprep.subr.mxu0 0.0
  %1546 = vmatpush1.msra.mxu0 0.0
  %1547 = vmatprep.subr.mxu0 0.0
  %1548 = vmatpush1.msra.mxu0 0.0
  %1549 = vmatprep.subr.mxu0 0.0
  %1550 = vmatpush1.msra.mxu0 0.0
  %1551 = vmatprep.subr.mxu0 0.0
  %1552 = vmatpush1.msra.mxu0 0.0
  %1553 = vmatprep.subr.mxu0 0.0
  %1554 = vmatpush1.msra.mxu0 0.0
  %1555 = vmatprep.subr.mxu0 0.0
  %1556 = vmatpush1.msra.mxu0 0.0
  %1557 = vmatprep.subr.mxu0 0.0
  %1558 = vmatpush1.msra.mxu0 0.0
  %1559 = vmatprep.subr.mxu0 0.0
  %1560 = vmatpush1.msra.mxu0 0.0
  %1561 = vmatprep.subr.mxu0 0.0
  %1562 = vmatpush1.msra.mxu0 0.0
  %1563 = vmatprep.subr.mxu0 0.0
  %1564 = vmatpush1.msra.mxu0 0.0
  %1565 = vmatprep.subr.mxu0 0.0
  %1566 = vmatpush1.msra.mxu0 0.0
  %1567 = vmatprep.subr.mxu0 0.0
  %1568 = vmatpush1.msra.mxu0 0.0
  %1569 = vmatprep.subr.mxu0 0.0
  %1570 = vmatpush1.msra.mxu0 0.0
  %1571 = vmatprep.subr.mxu0 0.0
  %1572 = vmatpush1.msra.mxu0 0.0
  %1573 = vmatprep.subr.mxu0 0.0
  %1574 = vmatpush1.msra.mxu0 0.0
  %1575 = vmatprep.subr.mxu0 0.0
  %1576 = vmatpush1.msra.mxu0 0.0
  %1577 = vmatprep.subr.mxu0 0.0
  %1578 = vmatpush1.msra.mxu0 0.0
  %1579 = vmatprep.subr.mxu0 0.0
  %1580 = vmatpush1.msra.mxu0 0.0
  %1581 = vmatprep.subr.mxu0 0.0
  %1582 = vmatpush1.msra.mxu0 0.0
  %1583 = vmatprep.subr.mxu0 0.0
  %1584 = vmatpush1.msra.mxu0 0.0
  %1585 = vmatprep.subr.mxu0 0.0
  %1586 = vmatpush1.msra.mxu0 0.0
  %1587 = vmatprep.subr.mxu0 0.0
  %1588 = vmatpush1.msra.mxu0 0.0
  %1589 = vmatprep.subr.mxu0 0.0
  %1590 = vmatpush1.msra.mxu0 0.0
  %1591 = vmatprep.subr.mxu0 0.0
  %1592 = vmatpush1.msra.mxu0 0.0
  %1593 = vmatprep.subr.mxu0 0.0
  %1594 = vmatpush1.msra.mxu0 0.0
  %1595 = vmatprep.subr.mxu0 0.0
  %1596 = vmatpush1.msra.mxu0 0.0
  %1597 = vmatprep.subr.mxu0 0.0
  %1598 = vmatpush1.msra.mxu0 0.0
  %1599 = vmatprep.mubr.f32.mxu0 0.0
  %1600 = vmatmul.mubr.f32.gmra.mrb[0].mxu0 %v1533
  %v1601 = vpop.f32.mrb[0].mxu0
  %v1602 = vadd.f32 0.0, %v1601
  %v1603 = vpop.f32.mrb[0].mxu0
  %1604 = vdwg.mxu0
  %v1605 = vadd.f32 %v1274, %v1602
  %v1606 = vxor.u32 %v1605, 2147483648
  %v1607 = vmul.f32 %v1606, 1.442695
  %v1608 = vpow.pop %v1607
  %v1609 = vadd.f32 %v1608, 1.0
  %v1610 = vrcp.pop %v1609
  %v1611 = vmul.f32 1.0, %v1610
  %v1612 = vadd.f32 %v1602, %v1385
  %1614 = vrot.lane.b32.xlu0 %v1612, 112
  %v1615 = vpop.permute.xlu0 %1614
  %v1617 = vmul.f32 %v1611, %v1615
  %1619 = vrot.lane.b32.xlu0 %v1617, 16
  %v1620 = vpop.permute.xlu0 %1619
  %v1622 = vadd.f32 %v1274, %v1620
  %v1623 = vtanh.pop %v1622
  %v1624 = vsub.f32 %v1529, %v1623
  %1626 = vrot.lane.b32.xlu0 %v1624, 120
  %v1627 = vpop.permute.xlu0 %1626
  %v1629 = vmul.f32 %v1611, %v1627
  %1631 = vrot.lane.b32.xlu0 %v1629, 8
  %v1632 = vpop.permute.xlu0 %1631
  %v1634 = vadd.f32 %v1623, %v1632
  %1636 = vrot.lane.b32.xlu0 %v1634, 112
  %v1637 = vpop.permute.xlu0 %1636
  %1639 = vst.msk [vmem:[#allocation2 + $0x10] sm:$0xff] %vm213, %v1637
  %v1640 = vsub.f32 %v1634, %v1529
  %v1641 = vmul.f32 %v569, %v1640
  %v1642 = vadd.f32 %v1529, %v1641
  %1644 = vrot.lane.b32.xlu0 %v1642, 112
  %v1645 = vpop.permute.xlu0 %1644
  %v1646 = vsel %vm213, %v1645, 0
  %1648 = vmatprep.subr.mxu0 0.0
  %1649 = vmatpush1.msra.mxu0 %v1164
  %1650 = vmatprep.subr.mxu0 0.0
  %1651 = vmatpush1.msra.mxu0 0.0
  %1652 = vmatprep.subr.mxu0 0.0
  %1653 = vmatpush1.msra.mxu0 0.0
  %1654 = vmatprep.subr.mxu0 0.0
  %1655 = vmatpush1.msra.mxu0 0.0
  %1656 = vmatprep.subr.mxu0 0.0
  %1657 = vmatpush1.msra.mxu0 0.0
  %1658 = vmatprep.subr.mxu0 0.0
  %1659 = vmatpush1.msra.mxu0 0.0
  %1660 = vmatprep.subr.mxu0 0.0
  %1661 = vmatpush1.msra.mxu0 0.0
  %1662 = vmatprep.subr.mxu0 0.0
  %1663 = vmatpush1.msra.mxu0 0.0
  %1664 = vmatprep.subr.mxu0 0.0
  %1665 = vmatpush1.msra.mxu0 0.0
  %1666 = vmatprep.subr.mxu0 0.0
  %1667 = vmatpush1.msra.mxu0 0.0
  %1668 = vmatprep.subr.mxu0 0.0
  %1669 = vmatpush1.msra.mxu0 0.0
  %1670 = vmatprep.subr.mxu0 0.0
  %1671 = vmatpush1.msra.mxu0 0.0
  %1672 = vmatprep.subr.mxu0 0.0
  %1673 = vmatpush1.msra.mxu0 0.0
  %1674 = vmatprep.subr.mxu0 0.0
  %1675 = vmatpush1.msra.mxu0 0.0
  %1676 = vmatprep.subr.mxu0 0.0
  %1677 = vmatpush1.msra.mxu0 0.0
  %1678 = vmatprep.subr.mxu0 0.0
  %1679 = vmatpush1.msra.mxu0 0.0
  %1680 = vmatprep.subr.mxu0 0.0
  %1681 = vmatpush1.msra.mxu0 0.0
  %1682 = vmatprep.subr.mxu0 0.0
  %1683 = vmatpush1.msra.mxu0 0.0
  %1684 = vmatprep.subr.mxu0 0.0
  %1685 = vmatpush1.msra.mxu0 0.0
  %1686 = vmatprep.subr.mxu0 0.0
  %1687 = vmatpush1.msra.mxu0 0.0
  %1688 = vmatprep.subr.mxu0 0.0
  %1689 = vmatpush1.msra.mxu0 0.0
  %1690 = vmatprep.subr.mxu0 0.0
  %1691 = vmatpush1.msra.mxu0 0.0
  %1692 = vmatprep.subr.mxu0 0.0
  %1693 = vmatpush1.msra.mxu0 0.0
  %1694 = vmatprep.subr.mxu0 0.0
  %1695 = vmatpush1.msra.mxu0 0.0
  %1696 = vmatprep.subr.mxu0 0.0
  %1697 = vmatpush1.msra.mxu0 0.0
  %1698 = vmatprep.subr.mxu0 0.0
  %1699 = vmatpush1.msra.mxu0 0.0
  %1700 = vmatprep.subr.mxu0 0.0
  %1701 = vmatpush1.msra.mxu0 0.0
  %1702 = vmatprep.subr.mxu0 0.0
  %1703 = vmatpush1.msra.mxu0 0.0
  %1704 = vmatprep.subr.mxu0 0.0
  %1705 = vmatpush1.msra.mxu0 0.0
  %1706 = vmatprep.subr.mxu0 0.0
  %1707 = vmatpush1.msra.mxu0 0.0
  %1708 = vmatprep.subr.mxu0 0.0
  %1709 = vmatpush1.msra.mxu0 0.0
  %1710 = vmatprep.subr.mxu0 0.0
  %1711 = vmatpush1.msra.mxu0 0.0
  %1712 = vmatprep.mubr.f32.mxu0 0.0
  %1713 = vmatmul.mubr.f32.gmra.mrb[0].mxu0 %v1646
  %v1714 = vpop.f32.mrb[0].mxu0
  %v1715 = vadd.f32 0.0, %v1714
  %v1716 = vpop.f32.mrb[0].mxu0
  %1717 = vdwg.mxu0
  %v1718 = vadd.f32 %v1279, %v1715
  %v1719 = vxor.u32 %v1718, 2147483648
  %v1720 = vmul.f32 %v1719, 1.442695
  %v1721 = vpow.pop %v1720
  %v1722 = vadd.f32 %v1721, 1.0
  %v1723 = vrcp.pop %v1722
  %v1724 = vmul.f32 1.0, %v1723
  %v1725 = vadd.f32 %v1715, %v1385
  %1727 = vrot.lane.b32.xlu0 %v1725, 112
  %v1728 = vpop.permute.xlu0 %1727
  %v1730 = vmul.f32 %v1724, %v1728
  %1732 = vrot.lane.b32.xlu0 %v1730, 16
  %v1733 = vpop.permute.xlu0 %1732
  %v1735 = vadd.f32 %v1279, %v1733
  %v1736 = vtanh.pop %v1735
  %v1737 = vsub.f32 %v1642, %v1736
  %1739 = vrot.lane.b32.xlu0 %v1737, 120
  %v1740 = vpop.permute.xlu0 %1739
  %v1742 = vmul.f32 %v1724, %v1740
  %1744 = vrot.lane.b32.xlu0 %v1742, 8
  %v1745 = vpop.permute.xlu0 %1744
  %v1747 = vadd.f32 %v1736, %v1745
  %1749 = vrot.lane.b32.xlu0 %v1747, 112
  %v1750 = vpop.permute.xlu0 %1749
  %1752 = vst.msk [vmem:[#allocation2 + $0x18] sm:$0xff] %vm213, %v1750
  %v1753 = vsub.f32 %v1747, %v1642
  %v1754 = vmul.f32 %v687, %v1753
  %v1755 = vadd.f32 %v1642, %v1754
  %1757 = vrot.lane.b32.xlu0 %v1755, 112
  %v1758 = vpop.permute.xlu0 %1757
  %v1759 = vsel %vm213, %v1758, 0
  %1761 = vmatprep.subr.mxu0 0.0
  %1762 = vmatpush1.msra.mxu0 %v1164
  %1763 = vmatprep.subr.mxu0 0.0
  %1764 = vmatpush1.msra.mxu0 0.0
  %1765 = vmatprep.subr.mxu0 0.0
  %1766 = vmatpush1.msra.mxu0 0.0
  %1767 = vmatprep.subr.mxu0 0.0
  %1768 = vmatpush1.msra.mxu0 0.0
  %1769 = vmatprep.subr.mxu0 0.0
  %1770 = vmatpush1.msra.mxu0 0.0
  %1771 = vmatprep.subr.mxu0 0.0
  %1772 = vmatpush1.msra.mxu0 0.0
  %1773 = vmatprep.subr.mxu0 0.0
  %1774 = vmatpush1.msra.mxu0 0.0
  %1775 = vmatprep.subr.mxu0 0.0
  %1776 = vmatpush1.msra.mxu0 0.0
  %1777 = vmatprep.subr.mxu0 0.0
  %1778 = vmatpush1.msra.mxu0 0.0
  %1779 = vmatprep.subr.mxu0 0.0
  %1780 = vmatpush1.msra.mxu0 0.0
  %1781 = vmatprep.subr.mxu0 0.0
  %1782 = vmatpush1.msra.mxu0 0.0
  %1783 = vmatprep.subr.mxu0 0.0
  %1784 = vmatpush1.msra.mxu0 0.0
  %1785 = vmatprep.subr.mxu0 0.0
  %1786 = vmatpush1.msra.mxu0 0.0
  %1787 = vmatprep.subr.mxu0 0.0
  %1788 = vmatpush1.msra.mxu0 0.0
  %1789 = vmatprep.subr.mxu0 0.0
  %1790 = vmatpush1.msra.mxu0 0.0
  %1791 = vmatprep.subr.mxu0 0.0
  %1792 = vmatpush1.msra.mxu0 0.0
  %1793 = vmatprep.subr.mxu0 0.0
  %1794 = vmatpush1.msra.mxu0 0.0
  %1795 = vmatprep.subr.mxu0 0.0
  %1796 = vmatpush1.msra.mxu0 0.0
  %1797 = vmatprep.subr.mxu0 0.0
  %1798 = vmatpush1.msra.mxu0 0.0
  %1799 = vmatprep.subr.mxu0 0.0
  %1800 = vmatpush1.msra.mxu0 0.0
  %1801 = vmatprep.subr.mxu0 0.0
  %1802 = vmatpush1.msra.mxu0 0.0
  %1803 = vmatprep.subr.mxu0 0.0
  %1804 = vmatpush1.msra.mxu0 0.0
  %1805 = vmatprep.subr.mxu0 0.0
  %1806 = vmatpush1.msra.mxu0 0.0
  %1807 = vmatprep.subr.mxu0 0.0
  %1808 = vmatpush1.msra.mxu0 0.0
  %1809 = vmatprep.subr.mxu0 0.0
  %1810 = vmatpush1.msra.mxu0 0.0
  %1811 = vmatprep.subr.mxu0 0.0
  %1812 = vmatpush1.msra.mxu0 0.0
  %1813 = vmatprep.subr.mxu0 0.0
  %1814 = vmatpush1.msra.mxu0 0.0
  %1815 = vmatprep.subr.mxu0 0.0
  %1816 = vmatpush1.msra.mxu0 0.0
  %1817 = vmatprep.subr.mxu0 0.0
  %1818 = vmatpush1.msra.mxu0 0.0
  %1819 = vmatprep.subr.mxu0 0.0
  %1820 = vmatpush1.msra.mxu0 0.0
  %1821 = vmatprep.subr.mxu0 0.0
  %1822 = vmatpush1.msra.mxu0 0.0
  %1823 = vmatprep.subr.mxu0 0.0
  %1824 = vmatpush1.msra.mxu0 0.0
  %1825 = vmatprep.mubr.f32.mxu0 0.0
  %1826 = vmatmul.mubr.f32.gmra.mrb[0].mxu0 %v1759
  %v1827 = vpop.f32.mrb[0].mxu0
  %v1828 = vadd.f32 0.0, %v1827
  %v1829 = vpop.f32.mrb[0].mxu0
  %1830 = vdwg.mxu0
  %v1831 = vadd.f32 %v1284, %v1828
  %v1832 = vxor.u32 %v1831, 2147483648
  %v1833 = vmul.f32 %v1832, 1.442695
  %v1834 = vpow.pop %v1833
  %v1835 = vadd.f32 %v1834, 1.0
  %v1836 = vrcp.pop %v1835
  %v1837 = vmul.f32 1.0, %v1836
  %v1838 = vadd.f32 %v1828, %v1385
  %1840 = vrot.lane.b32.xlu0 %v1838, 112
  %v1841 = vpop.permute.xlu0 %1840
  %v1843 = vmul.f32 %v1837, %v1841
  %1845 = vrot.lane.b32.xlu0 %v1843, 16
  %v1846 = vpop.permute.xlu0 %1845
  %v1848 = vadd.f32 %v1284, %v1846
  %v1849 = vtanh.pop %v1848
  %v1850 = vsub.f32 %v1755, %v1849
  %1852 = vrot.lane.b32.xlu0 %v1850, 120
  %v1853 = vpop.permute.xlu0 %1852
  %v1855 = vmul.f32 %v1837, %v1853
  %1857 = vrot.lane.b32.xlu0 %v1855, 8
  %v1858 = vpop.permute.xlu0 %1857
  %v1860 = vadd.f32 %v1849, %v1858
  %1862 = vrot.lane.b32.xlu0 %v1860, 112
  %v1863 = vpop.permute.xlu0 %1862
  %1865 = vst.msk [vmem:[#allocation2 + $0x20] sm:$0xff] %vm213, %v1863
  %v1866 = vsub.f32 %v1860, %v1755
  %v1867 = vmul.f32 %v805, %v1866
  %v1868 = vadd.f32 %v1755, %v1867
  %1870 = vrot.lane.b32.xlu0 %v1868, 112
  %v1871 = vpop.permute.xlu0 %1870
  %v1872 = vsel %vm213, %v1871, 0
  %1874 = vmatprep.subr.mxu0 0.0
  %1875 = vmatpush1.msra.mxu0 %v1164
  %1876 = vmatprep.subr.mxu0 0.0
  %1877 = vmatpush1.msra.mxu0 0.0
  %1878 = vmatprep.subr.mxu0 0.0
  %1879 = vmatpush1.msra.mxu0 0.0
  %1880 = vmatprep.subr.mxu0 0.0
  %1881 = vmatpush1.msra.mxu0 0.0
  %1882 = vmatprep.subr.mxu0 0.0
  %1883 = vmatpush1.msra.mxu0 0.0
  %1884 = vmatprep.subr.mxu0 0.0
  %1885 = vmatpush1.msra.mxu0 0.0
  %1886 = vmatprep.subr.mxu0 0.0
  %1887 = vmatpush1.msra.mxu0 0.0
  %1888 = vmatprep.subr.mxu0 0.0
  %1889 = vmatpush1.msra.mxu0 0.0
  %1890 = vmatprep.subr.mxu0 0.0
  %1891 = vmatpush1.msra.mxu0 0.0
  %1892 = vmatprep.subr.mxu0 0.0
  %1893 = vmatpush1.msra.mxu0 0.0
  %1894 = vmatprep.subr.mxu0 0.0
  %1895 = vmatpush1.msra.mxu0 0.0
  %1896 = vmatprep.subr.mxu0 0.0
  %1897 = vmatpush1.msra.mxu0 0.0
  %1898 = vmatprep.subr.mxu0 0.0
  %1899 = vmatpush1.msra.mxu0 0.0
  %1900 = vmatprep.subr.mxu0 0.0
  %1901 = vmatpush1.msra.mxu0 0.0
  %1902 = vmatprep.subr.mxu0 0.0
  %1903 = vmatpush1.msra.mxu0 0.0
  %1904 = vmatprep.subr.mxu0 0.0
  %1905 = vmatpush1.msra.mxu0 0.0
  %1906 = vmatprep.subr.mxu0 0.0
  %1907 = vmatpush1.msra.mxu0 0.0
  %1908 = vmatprep.subr.mxu0 0.0
  %1909 = vmatpush1.msra.mxu0 0.0
  %1910 = vmatprep.subr.mxu0 0.0
  %1911 = vmatpush1.msra.mxu0 0.0
  %1912 = vmatprep.subr.mxu0 0.0
  %1913 = vmatpush1.msra.mxu0 0.0
  %1914 = vmatprep.subr.mxu0 0.0
  %1915 = vmatpush1.msra.mxu0 0.0
  %1916 = vmatprep.subr.mxu0 0.0
  %1917 = vmatpush1.msra.mxu0 0.0
  %1918 = vmatprep.subr.mxu0 0.0
  %1919 = vmatpush1.msra.mxu0 0.0
  %1920 = vmatprep.subr.mxu0 0.0
  %1921 = vmatpush1.msra.mxu0 0.0
  %1922 = vmatprep.subr.mxu0 0.0
  %1923 = vmatpush1.msra.mxu0 0.0
  %1924 = vmatprep.subr.mxu0 0.0
  %1925 = vmatpush1.msra.mxu0 0.0
  %1926 = vmatprep.subr.mxu0 0.0
  %1927 = vmatpush1.msra.mxu0 0.0
  %1928 = vmatprep.subr.mxu0 0.0
  %1929 = vmatpush1.msra.mxu0 0.0
  %1930 = vmatprep.subr.mxu0 0.0
  %1931 = vmatpush1.msra.mxu0 0.0
  %1932 = vmatprep.subr.mxu0 0.0
  %1933 = vmatpush1.msra.mxu0 0.0
  %1934 = vmatprep.subr.mxu0 0.0
  %1935 = vmatpush1.msra.mxu0 0.0
  %1936 = vmatprep.subr.mxu0 0.0
  %1937 = vmatpush1.msra.mxu0 0.0
  %1938 = vmatprep.mubr.f32.mxu0 0.0
  %1939 = vmatmul.mubr.f32.gmra.mrb[0].mxu0 %v1872
  %v1940 = vpop.f32.mrb[0].mxu0
  %v1941 = vadd.f32 0.0, %v1940
  %v1942 = vpop.f32.mrb[0].mxu0
  %1943 = vdwg.mxu0
  %v1944 = vadd.f32 %v1289, %v1941
  %v1945 = vxor.u32 %v1944, 2147483648
  %v1946 = vmul.f32 %v1945, 1.442695
  %v1947 = vpow.pop %v1946
  %v1948 = vadd.f32 %v1947, 1.0
  %v1949 = vrcp.pop %v1948
  %v1950 = vmul.f32 1.0, %v1949
  %v1951 = vadd.f32 %v1941, %v1385
  %1953 = vrot.lane.b32.xlu0 %v1951, 112
  %v1954 = vpop.permute.xlu0 %1953
  %v1956 = vmul.f32 %v1950, %v1954
  %1958 = vrot.lane.b32.xlu0 %v1956, 16
  %v1959 = vpop.permute.xlu0 %1958
  %v1961 = vadd.f32 %v1289, %v1959
  %v1962 = vtanh.pop %v1961
  %v1963 = vsub.f32 %v1868, %v1962
  %1965 = vrot.lane.b32.xlu0 %v1963, 120
  %v1966 = vpop.permute.xlu0 %1965
  %v1968 = vmul.f32 %v1950, %v1966
  %1970 = vrot.lane.b32.xlu0 %v1968, 8
  %v1971 = vpop.permute.xlu0 %1970
  %v1973 = vadd.f32 %v1962, %v1971
  %1975 = vrot.lane.b32.xlu0 %v1973, 112
  %v1976 = vpop.permute.xlu0 %1975
  %1978 = vst.msk [vmem:[#allocation2 + $0x28] sm:$0xff] %vm213, %v1976
  %v1979 = vsub.f32 %v1973, %v1868
  %v1980 = vmul.f32 %v923, %v1979
  %v1981 = vadd.f32 %v1868, %v1980
  %1983 = vrot.lane.b32.xlu0 %v1981, 112
  %v1984 = vpop.permute.xlu0 %1983
  %v1985 = vsel %vm213, %v1984, 0
  %1987 = vmatprep.subr.mxu0 0.0
  %1988 = vmatpush1.msra.mxu0 %v1164
  %1989 = vmatprep.subr.mxu0 0.0
  %1990 = vmatpush1.msra.mxu0 0.0
  %1991 = vmatprep.subr.mxu0 0.0
  %1992 = vmatpush1.msra.mxu0 0.0
  %1993 = vmatprep.subr.mxu0 0.0
  %1994 = vmatpush1.msra.mxu0 0.0
  %1995 = vmatprep.subr.mxu0 0.0
  %1996 = vmatpush1.msra.mxu0 0.0
  %1997 = vmatprep.subr.mxu0 0.0
  %1998 = vmatpush1.msra.mxu0 0.0
  %1999 = vmatprep.subr.mxu0 0.0
  %2000 = vmatpush1.msra.mxu0 0.0
  %2001 = vmatprep.subr.mxu0 0.0
  %2002 = vmatpush1.msra.mxu0 0.0
  %2003 = vmatprep.subr.mxu0 0.0
  %2004 = vmatpush1.msra.mxu0 0.0
  %2005 = vmatprep.subr.mxu0 0.0
  %2006 = vmatpush1.msra.mxu0 0.0
  %2007 = vmatprep.subr.mxu0 0.0
  %2008 = vmatpush1.msra.mxu0 0.0
  %2009 = vmatprep.subr.mxu0 0.0
  %2010 = vmatpush1.msra.mxu0 0.0
  %2011 = vmatprep.subr.mxu0 0.0
  %2012 = vmatpush1.msra.mxu0 0.0
  %2013 = vmatprep.subr.mxu0 0.0
  %2014 = vmatpush1.msra.mxu0 0.0
  %2015 = vmatprep.subr.mxu0 0.0
  %2016 = vmatpush1.msra.mxu0 0.0
  %2017 = vmatprep.subr.mxu0 0.0
  %2018 = vmatpush1.msra.mxu0 0.0
  %2019 = vmatprep.subr.mxu0 0.0
  %2020 = vmatpush1.msra.mxu0 0.0
  %2021 = vmatprep.subr.mxu0 0.0
  %2022 = vmatpush1.msra.mxu0 0.0
  %2023 = vmatprep.subr.mxu0 0.0
  %2024 = vmatpush1.msra.mxu0 0.0
  %2025 = vmatprep.subr.mxu0 0.0
  %2026 = vmatpush1.msra.mxu0 0.0
  %2027 = vmatprep.subr.mxu0 0.0
  %2028 = vmatpush1.msra.mxu0 0.0
  %2029 = vmatprep.subr.mxu0 0.0
  %2030 = vmatpush1.msra.mxu0 0.0
  %2031 = vmatprep.subr.mxu0 0.0
  %2032 = vmatpush1.msra.mxu0 0.0
  %2033 = vmatprep.subr.mxu0 0.0
  %2034 = vmatpush1.msra.mxu0 0.0
  %2035 = vmatprep.subr.mxu0 0.0
  %2036 = vmatpush1.msra.mxu0 0.0
  %2037 = vmatprep.subr.mxu0 0.0
  %2038 = vmatpush1.msra.mxu0 0.0
  %2039 = vmatprep.subr.mxu0 0.0
  %2040 = vmatpush1.msra.mxu0 0.0
  %2041 = vmatprep.subr.mxu0 0.0
  %2042 = vmatpush1.msra.mxu0 0.0
  %2043 = vmatprep.subr.mxu0 0.0
  %2044 = vmatpush1.msra.mxu0 0.0
  %2045 = vmatprep.subr.mxu0 0.0
  %2046 = vmatpush1.msra.mxu0 0.0
  %2047 = vmatprep.subr.mxu0 0.0
  %2048 = vmatpush1.msra.mxu0 0.0
  %2049 = vmatprep.subr.mxu0 0.0
  %2050 = vmatpush1.msra.mxu0 0.0
  %2051 = vmatprep.mubr.f32.mxu0 0.0
  %2052 = vmatmul.mubr.f32.gmra.mrb[0].mxu0 %v1985
  %v2053 = vpop.f32.mrb[0].mxu0
  %v2054 = vadd.f32 0.0, %v2053
  %v2055 = vpop.f32.mrb[0].mxu0
  %2056 = vdwg.mxu0
  %v2057 = vadd.f32 %v1294, %v2054
  %v2058 = vxor.u32 %v2057, 2147483648
  %v2059 = vmul.f32 %v2058, 1.442695
  %v2060 = vpow.pop %v2059
  %v2061 = vadd.f32 %v2060, 1.0
  %v2062 = vrcp.pop %v2061
  %v2063 = vmul.f32 1.0, %v2062
  %v2064 = vadd.f32 %v2054, %v1385
  %2066 = vrot.lane.b32.xlu0 %v2064, 112
  %v2067 = vpop.permute.xlu0 %2066
  %v2069 = vmul.f32 %v2063, %v2067
  %2071 = vrot.lane.b32.xlu0 %v2069, 16
  %v2072 = vpop.permute.xlu0 %2071
  %v2074 = vadd.f32 %v1294, %v2072
  %v2075 = vtanh.pop %v2074
  %v2076 = vsub.f32 %v1981, %v2075
  %2078 = vrot.lane.b32.xlu0 %v2076, 120
  %v2079 = vpop.permute.xlu0 %2078
  %v2081 = vmul.f32 %v2063, %v2079
  %2083 = vrot.lane.b32.xlu0 %v2081, 8
  %v2084 = vpop.permute.xlu0 %2083
  %v2086 = vadd.f32 %v2075, %v2084
  %2088 = vrot.lane.b32.xlu0 %v2086, 112
  %v2089 = vpop.permute.xlu0 %2088
  %2091 = vst.msk [vmem:[#allocation2 + $0x30] sm:$0xff] %vm213, %v2089
  %v2092 = vsub.f32 %v2086, %v1981
  %v2093 = vmul.f32 %v1041, %v2092
  %v2094 = vadd.f32 %v1981, %v2093
  %2096 = vrot.lane.b32.xlu0 %v2094, 112
  %v2097 = vpop.permute.xlu0 %2096
  %v2098 = vsel %vm213, %v2097, 0
  %2100 = vmatprep.subr.mxu0 0.0
  %2101 = vmatpush1.msra.mxu0 %v1164
  %2102 = vmatprep.subr.mxu0 0.0
  %2103 = vmatpush1.msra.mxu0 0.0
  %2104 = vmatprep.subr.mxu0 0.0
  %2105 = vmatpush1.msra.mxu0 0.0
  %2106 = vmatprep.subr.mxu0 0.0
  %2107 = vmatpush1.msra.mxu0 0.0
  %2108 = vmatprep.subr.mxu0 0.0
  %2109 = vmatpush1.msra.mxu0 0.0
  %2110 = vmatprep.subr.mxu0 0.0
  %2111 = vmatpush1.msra.mxu0 0.0
  %2112 = vmatprep.subr.mxu0 0.0
  %2113 = vmatpush1.msra.mxu0 0.0
  %2114 = vmatprep.subr.mxu0 0.0
  %2115 = vmatpush1.msra.mxu0 0.0
  %2116 = vmatprep.subr.mxu0 0.0
  %2117 = vmatpush1.msra.mxu0 0.0
  %2118 = vmatprep.subr.mxu0 0.0
  %2119 = vmatpush1.msra.mxu0 0.0
  %2120 = vmatprep.subr.mxu0 0.0
  %2121 = vmatpush1.msra.mxu0 0.0
  %2122 = vmatprep.subr.mxu0 0.0
  %2123 = vmatpush1.msra.mxu0 0.0
  %2124 = vmatprep.subr.mxu0 0.0
  %2125 = vmatpush1.msra.mxu0 0.0
  %2126 = vmatprep.subr.mxu0 0.0
  %2127 = vmatpush1.msra.mxu0 0.0
  %2128 = vmatprep.subr.mxu0 0.0
  %2129 = vmatpush1.msra.mxu0 0.0
  %2130 = vmatprep.subr.mxu0 0.0
  %2131 = vmatpush1.msra.mxu0 0.0
  %2132 = vmatprep.subr.mxu0 0.0
  %2133 = vmatpush1.msra.mxu0 0.0
  %2134 = vmatprep.subr.mxu0 0.0
  %2135 = vmatpush1.msra.mxu0 0.0
  %2136 = vmatprep.subr.mxu0 0.0
  %2137 = vmatpush1.msra.mxu0 0.0
  %2138 = vmatprep.subr.mxu0 0.0
  %2139 = vmatpush1.msra.mxu0 0.0
  %2140 = vmatprep.subr.mxu0 0.0
  %2141 = vmatpush1.msra.mxu0 0.0
  %2142 = vmatprep.subr.mxu0 0.0
  %2143 = vmatpush1.msra.mxu0 0.0
  %2144 = vmatprep.subr.mxu0 0.0
  %2145 = vmatpush1.msra.mxu0 0.0
  %2146 = vmatprep.subr.mxu0 0.0
  %2147 = vmatpush1.msra.mxu0 0.0
  %2148 = vmatprep.subr.mxu0 0.0
  %2149 = vmatpush1.msra.mxu0 0.0
  %2150 = vmatprep.subr.mxu0 0.0
  %2151 = vmatpush1.msra.mxu0 0.0
  %2152 = vmatprep.subr.mxu0 0.0
  %2153 = vmatpush1.msra.mxu0 0.0
  %2154 = vmatprep.subr.mxu0 0.0
  %2155 = vmatpush1.msra.mxu0 0.0
  %2156 = vmatprep.subr.mxu0 0.0
  %2157 = vmatpush1.msra.mxu0 0.0
  %2158 = vmatprep.subr.mxu0 0.0
  %2159 = vmatpush1.msra.mxu0 0.0
  %2160 = vmatprep.subr.mxu0 0.0
  %2161 = vmatpush1.msra.mxu0 0.0
  %2162 = vmatprep.subr.mxu0 0.0
  %2163 = vmatpush1.msra.mxu0 0.0
  %2164 = vmatprep.mubr.f32.mxu0 0.0
  %2165 = vmatmul.mubr.f32.gmra.mrb[0].mxu0 %v2098
  %v2166 = vpop.f32.mrb[0].mxu0
  %v2167 = vadd.f32 0.0, %v2166
  %v2168 = vpop.f32.mrb[0].mxu0
  %2169 = vdwg.mxu0
  %v2170 = vadd.f32 %v1299, %v2167
  %v2171 = vxor.u32 %v2170, 2147483648
  %v2172 = vmul.f32 %v2171, 1.442695
  %v2173 = vpow.pop %v2172
  %v2174 = vadd.f32 %v2173, 1.0
  %v2175 = vrcp.pop %v2174
  %v2176 = vmul.f32 1.0, %v2175
  %v2177 = vadd.f32 %v2167, %v1385
  %2179 = vrot.lane.b32.xlu0 %v2177, 112
  %v2180 = vpop.permute.xlu0 %2179
  %v2182 = vmul.f32 %v2176, %v2180
  %2184 = vrot.lane.b32.xlu0 %v2182, 16
  %v2185 = vpop.permute.xlu0 %2184
  %v2187 = vadd.f32 %v1299, %v2185
  %v2188 = vtanh.pop %v2187
  %v2189 = vsub.f32 %v2094, %v2188
  %2191 = vrot.lane.b32.xlu0 %v2189, 120
  %v2192 = vpop.permute.xlu0 %2191
  %v2194 = vmul.f32 %v2176, %v2192
  %2196 = vrot.lane.b32.xlu0 %v2194, 8
  %v2197 = vpop.permute.xlu0 %2196
  %v2199 = vadd.f32 %v2188, %v2197
  %2201 = vrot.lane.b32.xlu0 %v2199, 112
  %v2202 = vpop.permute.xlu0 %2201
  %2204 = vst.msk [vmem:[#allocation2 + $0x38] sm:$0xff] %vm213, %v2202
  %v2205 = vld [vmem:[#allocation2] sm:$0xff]
  %v2206 = vld [vmem:[#allocation2 + $0x8] sm:$0xff]
  %v2207 = vld [vmem:[#allocation2 + $0x10] sm:$0xff]
  %v2208 = vld [vmem:[#allocation2 + $0x18] sm:$0xff]
  %v2209 = vld [vmem:[#allocation2 + $0x20] sm:$0xff]
  %v2210 = vld [vmem:[#allocation2 + $0x28] sm:$0xff]
  %v2211 = vld [vmem:[#allocation2 + $0x30] sm:$0xff]
  %v2212 = vld [vmem:[#allocation2 + $0x38] sm:$0xff]
  %v2213 = vld [vmem:[%s10] sm:$0xff]
  %v2214 = vld [vmem:[%s11] sm:$0xff]
  %v2215 = vld [vmem:[%s12] sm:$0x1]
  %v2216 = vld [vmem:[%s13] sm:$0x1]
  %v2218 = vlaneseq
  %v2219 = vshrl.u32 %v2218, 7
  %v2220 = vsub.s32 0, %v2219
  %v2221 = vrot.slane %v2215, %v2220
  %v2224 = vsel %vm213, %v2205, 0
  %v2227 = vsel %vm213, %v2206, 0
  %v2230 = vsel %vm213, %v2207, 0
  %v2233 = vsel %vm213, %v2208, 0
  %v2236 = vsel %vm213, %v2209, 0
  %v2239 = vsel %vm213, %v2210, 0
  %v2242 = vsel %vm213, %v2211, 0
  %v2245 = vsel %vm213, %v2212, 0
  %2247 = vmatprep.subr.mxu0 0.0
  %2248 = vmatpush1.msra.mxu0 %v2213
  %2249 = vmatprep.subr.mxu0 0.0
  %2250 = vmatpush1.msra.mxu0 0.0
  %2251 = vmatprep.subr.mxu0 0.0
  %2252 = vmatpush1.msra.mxu0 0.0
  %2253 = vmatprep.subr.mxu0 0.0
  %2254 = vmatpush1.msra.mxu0 0.0
  %2255 = vmatprep.subr.mxu0 0.0
  %2256 = vmatpush1.msra.mxu0 0.0
  %2257 = vmatprep.subr.mxu0 0.0
  %2258 = vmatpush1.msra.mxu0 0.0
  %2259 = vmatprep.subr.mxu0 0.0
  %2260 = vmatpush1.msra.mxu0 0.0
  %2261 = vmatprep.subr.mxu0 0.0
  %2262 = vmatpush1.msra.mxu0 0.0
  %2263 = vmatprep.subr.mxu0 0.0
  %2264 = vmatpush1.msra.mxu0 0.0
  %2265 = vmatprep.subr.mxu0 0.0
  %2266 = vmatpush1.msra.mxu0 0.0
  %2267 = vmatprep.subr.mxu0 0.0
  %2268 = vmatpush1.msra.mxu0 0.0
  %2269 = vmatprep.subr.mxu0 0.0
  %2270 = vmatpush1.msra.mxu0 0.0
  %2271 = vmatprep.subr.mxu0 0.0
  %2272 = vmatpush1.msra.mxu0 0.0
  %2273 = vmatprep.subr.mxu0 0.0
  %2274 = vmatpush1.msra.mxu0 0.0
  %2275 = vmatprep.subr.mxu0 0.0
  %2276 = vmatpush1.msra.mxu0 0.0
  %2277 = vmatprep.subr.mxu0 0.0
  %2278 = vmatpush1.msra.mxu0 0.0
  %2279 = vmatprep.subr.mxu0 0.0
  %2280 = vmatpush1.msra.mxu0 0.0
  %2281 = vmatprep.subr.mxu0 0.0
  %2282 = vmatpush1.msra.mxu0 0.0
  %2283 = vmatprep.subr.mxu0 0.0
  %2284 = vmatpush1.msra.mxu0 0.0
  %2285 = vmatprep.subr.mxu0 0.0
  %2286 = vmatpush1.msra.mxu0 0.0
  %2287 = vmatprep.subr.mxu0 0.0
  %2288 = vmatpush1.msra.mxu0 0.0
  %2289 = vmatprep.subr.mxu0 0.0
  %2290 = vmatpush1.msra.mxu0 0.0
  %2291 = vmatprep.subr.mxu0 0.0
  %2292 = vmatpush1.msra.mxu0 0.0
  %2293 = vmatprep.subr.mxu0 0.0
  %2294 = vmatpush1.msra.mxu0 0.0
  %2295 = vmatprep.subr.mxu0 0.0
  %2296 = vmatpush1.msra.mxu0 0.0
  %2297 = vmatprep.subr.mxu0 0.0
  %2298 = vmatpush1.msra.mxu0 0.0
  %2299 = vmatprep.subr.mxu0 0.0
  %2300 = vmatpush1.msra.mxu0 0.0
  %2301 = vmatprep.subr.mxu0 0.0
  %2302 = vmatpush1.msra.mxu0 0.0
  %2303 = vmatprep.subr.mxu0 0.0
  %2304 = vmatpush1.msra.mxu0 0.0
  %2305 = vmatprep.subr.mxu0 0.0
  %2306 = vmatpush1.msra.mxu0 0.0
  %2307 = vmatprep.subr.mxu0 0.0
  %2308 = vmatpush1.msra.mxu0 0.0
  %2309 = vmatprep.subr.mxu0 0.0
  %2310 = vmatpush1.msra.mxu0 0.0
  %2311 = vmatprep.mubr.f32.mxu0 0.0
  %2312 = vmatmul.mubr.f32.gmra.mrb[0].mxu0 %v2224
  %v2313 = vpop.f32.mrb[0].mxu0
  %v2314 = vadd.f32 %v2221, %v2313
  %v2315 = vpop.f32.mrb[0].mxu0
  %2316 = vmatprep.mubr.f32.mxu0 0.0
  %2317 = vmatmul.mubr.f32.gmra.mrb[0].mxu0 %v2227
  %v2318 = vpop.f32.mrb[0].mxu0
  %v2319 = vadd.f32 %v2221, %v2318
  %v2320 = vpop.f32.mrb[0].mxu0
  %2321 = vmatprep.mubr.f32.mxu0 0.0
  %2322 = vmatmul.mubr.f32.gmra.mrb[0].mxu0 %v2230
  %v2323 = vpop.f32.mrb[0].mxu0
  %v2324 = vadd.f32 %v2221, %v2323
  %v2325 = vpop.f32.mrb[0].mxu0
  %2326 = vmatprep.mubr.f32.mxu0 0.0
  %2327 = vmatmul.mubr.f32.gmra.mrb[0].mxu0 %v2233
  %v2328 = vpop.f32.mrb[0].mxu0
  %v2329 = vadd.f32 %v2221, %v2328
  %v2330 = vpop.f32.mrb[0].mxu0
  %2331 = vmatprep.mubr.f32.mxu0 0.0
  %2332 = vmatmul.mubr.f32.gmra.mrb[0].mxu0 %v2236
  %v2333 = vpop.f32.mrb[0].mxu0
  %v2334 = vadd.f32 %v2221, %v2333
  %v2335 = vpop.f32.mrb[0].mxu0
  %2336 = vmatprep.mubr.f32.mxu0 0.0
  %2337 = vmatmul.mubr.f32.gmra.mrb[0].mxu0 %v2239
  %v2338 = vpop.f32.mrb[0].mxu0
  %v2339 = vadd.f32 %v2221, %v2338
  %v2340 = vpop.f32.mrb[0].mxu0
  %2341 = vmatprep.mubr.f32.mxu0 0.0
  %2342 = vmatmul.mubr.f32.gmra.mrb[0].mxu0 %v2242
  %v2343 = vpop.f32.mrb[0].mxu0
  %v2344 = vadd.f32 %v2221, %v2343
  %v2345 = vpop.f32.mrb[0].mxu0
  %2346 = vmatprep.mubr.f32.mxu0 0.0
  %2347 = vmatmul.mubr.f32.gmra.mrb[0].mxu0 %v2245
  %v2348 = vpop.f32.mrb[0].mxu0
  %v2349 = vadd.f32 %v2221, %v2348
  %v2350 = vpop.f32.mrb[0].mxu0
  %2351 = vdwg.mxu0
  %2352 = vmatprep.subr.mxu0 0.0
  %2353 = vmatpush1.msra.mxu0 %v2214
  %2354 = vmatprep.subr.mxu0 0.0
  %2355 = vmatpush1.msra.mxu0 0.0
  %2356 = vmatprep.subr.mxu0 0.0
  %2357 = vmatpush1.msra.mxu0 0.0
  %2358 = vmatprep.subr.mxu0 0.0
  %2359 = vmatpush1.msra.mxu0 0.0
  %2360 = vmatprep.subr.mxu0 0.0
  %2361 = vmatpush1.msra.mxu0 0.0
  %2362 = vmatprep.subr.mxu0 0.0
  %2363 = vmatpush1.msra.mxu0 0.0
  %2364 = vmatprep.subr.mxu0 0.0
  %2365 = vmatpush1.msra.mxu0 0.0
  %2366 = vmatprep.subr.mxu0 0.0
  %2367 = vmatpush1.msra.mxu0 0.0
  %2368 = vmatprep.subr.mxu0 0.0
  %2369 = vmatpush1.msra.mxu0 0.0
  %2370 = vmatprep.subr.mxu0 0.0
  %2371 = vmatpush1.msra.mxu0 0.0
  %2372 = vmatprep.subr.mxu0 0.0
  %2373 = vmatpush1.msra.mxu0 0.0
  %2374 = vmatprep.subr.mxu0 0.0
  %2375 = vmatpush1.msra.mxu0 0.0
  %2376 = vmatprep.subr.mxu0 0.0
  %2377 = vmatpush1.msra.mxu0 0.0
  %2378 = vmatprep.subr.mxu0 0.0
  %2379 = vmatpush1.msra.mxu0 0.0
  %2380 = vmatprep.subr.mxu0 0.0
  %2381 = vmatpush1.msra.mxu0 0.0
  %2382 = vmatprep.subr.mxu0 0.0
  %2383 = vmatpush1.msra.mxu0 0.0
  %2384 = vmatprep.subr.mxu0 0.0
  %2385 = vmatpush1.msra.mxu0 0.0
  %2386 = vmatprep.subr.mxu0 0.0
  %2387 = vmatpush1.msra.mxu0 0.0
  %2388 = vmatprep.subr.mxu0 0.0
  %2389 = vmatpush1.msra.mxu0 0.0
  %2390 = vmatprep.subr.mxu0 0.0
  %2391 = vmatpush1.msra.mxu0 0.0
  %2392 = vmatprep.subr.mxu0 0.0
  %2393 = vmatpush1.msra.mxu0 0.0
  %2394 = vmatprep.subr.mxu0 0.0
  %2395 = vmatpush1.msra.mxu0 0.0
  %2396 = vmatprep.subr.mxu0 0.0
  %2397 = vmatpush1.msra.mxu0 0.0
  %2398 = vmatprep.subr.mxu0 0.0
  %2399 = vmatpush1.msra.mxu0 0.0
  %2400 = vmatprep.subr.mxu0 0.0
  %2401 = vmatpush1.msra.mxu0 0.0
  %2402 = vmatprep.subr.mxu0 0.0
  %2403 = vmatpush1.msra.mxu0 0.0
  %2404 = vmatprep.subr.mxu0 0.0
  %2405 = vmatpush1.msra.mxu0 0.0
  %2406 = vmatprep.subr.mxu0 0.0
  %2407 = vmatpush1.msra.mxu0 0.0
  %2408 = vmatprep.subr.mxu0 0.0
  %2409 = vmatpush1.msra.mxu0 0.0
  %2410 = vmatprep.subr.mxu0 0.0
  %2411 = vmatpush1.msra.mxu0 0.0
  %2412 = vmatprep.subr.mxu0 0.0
  %2413 = vmatpush1.msra.mxu0 0.0
  %2414 = vmatprep.subr.mxu0 0.0
  %2415 = vmatpush1.msra.mxu0 0.0
  %2416 = vmatprep.mubr.f32.mxu0 0.0
  %2417 = vmatmul.mubr.f32.gmra.mrb[0].mxu0 %v215
  %v2418 = vpop.f32.mrb[0].mxu0
  %v2419 = vadd.f32 0.0, %v2418
  %v2420 = vpop.f32.mrb[0].mxu0
  %2421 = vdwg.mxu0
  %v2422 = vadd.f32 %v2314, %v2419
  %v2423 = vxor.u32 %v2422, 2147483648
  %v2424 = vmul.f32 %v2423, 1.442695
  %v2425 = vpow.pop %v2424
  %v2426 = vadd.f32 %v2425, 1.0
  %v2427 = vrcp.pop %v2426
  %v2428 = vmul.f32 1.0, %v2427
  %v2430 = vlaneseq
  %v2431 = vshrl.u32 %v2430, 7
  %v2432 = vsub.s32 0, %v2431
  %v2433 = vrot.slane %v2216, %v2432
  %2434 = vrot.lane.b32.xlu0 %v2433, 16
  %v2435 = vpop.permute.xlu0 %2434
  %v2437 = vadd.f32 %v2419, %v2435
  %2439 = vrot.lane.b32.xlu0 %v2437, 112
  %v2440 = vpop.permute.xlu0 %2439
  %v2442 = vmul.f32 %v2428, %v2440
  %2444 = vrot.lane.b32.xlu0 %v2442, 16
  %v2445 = vpop.permute.xlu0 %2444
  %v2447 = vadd.f32 %v2314, %v2445
  %v2448 = vtanh.pop %v2447
  %v2449 = vsub.f32 0.0, %v2448
  %2451 = vrot.lane.b32.xlu0 %v2449, 120
  %v2452 = vpop.permute.xlu0 %2451
  %v2454 = vmul.f32 %v2428, %v2452
  %2456 = vrot.lane.b32.xlu0 %v2454, 8
  %v2457 = vpop.permute.xlu0 %2456
  %v2459 = vadd.f32 %v2448, %v2457
  %2461 = vrot.lane.b32.xlu0 %v2459, 112
  %v2462 = vpop.permute.xlu0 %2461
  %2464 = vst.msk [vmem:[#allocation2] sm:$0xff] %vm213, %v2462
  %v2465 = vmul.f32 %v333, %v2459
  %v2466 = vadd.f32 %v2465, 0.0
  %2468 = vrot.lane.b32.xlu0 %v2466, 112
  %v2469 = vpop.permute.xlu0 %2468
  %v2470 = vsel %vm213, %v2469, 0
  %2472 = vmatprep.subr.mxu0 0.0
  %2473 = vmatpush1.msra.mxu0 %v2214
  %2474 = vmatprep.subr.mxu0 0.0
  %2475 = vmatpush1.msra.mxu0 0.0
  %2476 = vmatprep.subr.mxu0 0.0
  %2477 = vmatpush1.msra.mxu0 0.0
  %2478 = vmatprep.subr.mxu0 0.0
  %2479 = vmatpush1.msra.mxu0 0.0
  %2480 = vmatprep.subr.mxu0 0.0
  %2481 = vmatpush1.msra.mxu0 0.0
  %2482 = vmatprep.subr.mxu0 0.0
  %2483 = vmatpush1.msra.mxu0 0.0
  %2484 = vmatprep.subr.mxu0 0.0
  %2485 = vmatpush1.msra.mxu0 0.0
  %2486 = vmatprep.subr.mxu0 0.0
  %2487 = vmatpush1.msra.mxu0 0.0
  %2488 = vmatprep.subr.mxu0 0.0
  %2489 = vmatpush1.msra.mxu0 0.0
  %2490 = vmatprep.subr.mxu0 0.0
  %2491 = vmatpush1.msra.mxu0 0.0
  %2492 = vmatprep.subr.mxu0 0.0
  %2493 = vmatpush1.msra.mxu0 0.0
  %2494 = vmatprep.subr.mxu0 0.0
  %2495 = vmatpush1.msra.mxu0 0.0
  %2496 = vmatprep.subr.mxu0 0.0
  %2497 = vmatpush1.msra.mxu0 0.0
  %2498 = vmatprep.subr.mxu0 0.0
  %2499 = vmatpush1.msra.mxu0 0.0
  %2500 = vmatprep.subr.mxu0 0.0
  %2501 = vmatpush1.msra.mxu0 0.0
  %2502 = vmatprep.subr.mxu0 0.0
  %2503 = vmatpush1.msra.mxu0 0.0
  %2504 = vmatprep.subr.mxu0 0.0
  %2505 = vmatpush1.msra.mxu0 0.0
  %2506 = vmatprep.subr.mxu0 0.0
  %2507 = vmatpush1.msra.mxu0 0.0
  %2508 = vmatprep.subr.mxu0 0.0
  %2509 = vmatpush1.msra.mxu0 0.0
  %2510 = vmatprep.subr.mxu0 0.0
  %2511 = vmatpush1.msra.mxu0 0.0
  %2512 = vmatprep.subr.mxu0 0.0
  %2513 = vmatpush1.msra.mxu0 0.0
  %2514 = vmatprep.subr.mxu0 0.0
  %2515 = vmatpush1.msra.mxu0 0.0
  %2516 = vmatprep.subr.mxu0 0.0
  %2517 = vmatpush1.msra.mxu0 0.0
  %2518 = vmatprep.subr.mxu0 0.0
  %2519 = vmatpush1.msra.mxu0 0.0
  %2520 = vmatprep.subr.mxu0 0.0
  %2521 = vmatpush1.msra.mxu0 0.0
  %2522 = vmatprep.subr.mxu0 0.0
  %2523 = vmatpush1.msra.mxu0 0.0
  %2524 = vmatprep.subr.mxu0 0.0
  %2525 = vmatpush1.msra.mxu0 0.0
  %2526 = vmatprep.subr.mxu0 0.0
  %2527 = vmatpush1.msra.mxu0 0.0
  %2528 = vmatprep.subr.mxu0 0.0
  %2529 = vmatpush1.msra.mxu0 0.0
  %2530 = vmatprep.subr.mxu0 0.0
  %2531 = vmatpush1.msra.mxu0 0.0
  %2532 = vmatprep.subr.mxu0 0.0
  %2533 = vmatpush1.msra.mxu0 0.0
  %2534 = vmatprep.subr.mxu0 0.0
  %2535 = vmatpush1.msra.mxu0 0.0
  %2536 = vmatprep.mubr.f32.mxu0 0.0
  %2537 = vmatmul.mubr.f32.gmra.mrb[0].mxu0 %v2470
  %v2538 = vpop.f32.mrb[0].mxu0
  %v2539 = vadd.f32 0.0, %v2538
  %v2540 = vpop.f32.mrb[0].mxu0
  %2541 = vdwg.mxu0
  %v2542 = vadd.f32 %v2319, %v2539
  %v2543 = vxor.u32 %v2542, 2147483648
  %v2544 = vmul.f32 %v2543, 1.442695
  %v2545 = vpow.pop %v2544
  %v2546 = vadd.f32 %v2545, 1.0
  %v2547 = vrcp.pop %v2546
  %v2548 = vmul.f32 1.0, %v2547
  %v2549 = vadd.f32 %v2539, %v2435
  %2551 = vrot.lane.b32.xlu0 %v2549, 112
  %v2552 = vpop.permute.xlu0 %2551
  %v2554 = vmul.f32 %v2548, %v2552
  %2556 = vrot.lane.b32.xlu0 %v2554, 16
  %v2557 = vpop.permute.xlu0 %2556
  %v2559 = vadd.f32 %v2319, %v2557
  %v2560 = vtanh.pop %v2559
  %v2561 = vsub.f32 %v2466, %v2560
  %2563 = vrot.lane.b32.xlu0 %v2561, 120
  %v2564 = vpop.permute.xlu0 %2563
  %v2566 = vmul.f32 %v2548, %v2564
  %2568 = vrot.lane.b32.xlu0 %v2566, 8
  %v2569 = vpop.permute.xlu0 %2568
  %v2571 = vadd.f32 %v2560, %v2569
  %2573 = vrot.lane.b32.xlu0 %v2571, 112
  %v2574 = vpop.permute.xlu0 %2573
  %2576 = vst.msk [vmem:[#allocation2 + $0x8] sm:$0xff] %vm213, %v2574
  %v2577 = vsub.f32 %v2571, %v2466
  %v2578 = vmul.f32 %v451, %v2577
  %v2579 = vadd.f32 %v2466, %v2578
  %2581 = vrot.lane.b32.xlu0 %v2579, 112
  %v2582 = vpop.permute.xlu0 %2581
  %v2583 = vsel %vm213, %v2582, 0
  %2585 = vmatprep.subr.mxu0 0.0
  %2586 = vmatpush1.msra.mxu0 %v2214
  %2587 = vmatprep.subr.mxu0 0.0
  %2588 = vmatpush1.msra.mxu0 0.0
  %2589 = vmatprep.subr.mxu0 0.0
  %2590 = vmatpush1.msra.mxu0 0.0
  %2591 = vmatprep.subr.mxu0 0.0
  %2592 = vmatpush1.msra.mxu0 0.0
  %2593 = vmatprep.subr.mxu0 0.0
  %2594 = vmatpush1.msra.mxu0 0.0
  %2595 = vmatprep.subr.mxu0 0.0
  %2596 = vmatpush1.msra.mxu0 0.0
  %2597 = vmatprep.subr.mxu0 0.0
  %2598 = vmatpush1.msra.mxu0 0.0
  %2599 = vmatprep.subr.mxu0 0.0
  %2600 = vmatpush1.msra.mxu0 0.0
  %2601 = vmatprep.subr.mxu0 0.0
  %2602 = vmatpush1.msra.mxu0 0.0
  %2603 = vmatprep.subr.mxu0 0.0
  %2604 = vmatpush1.msra.mxu0 0.0
  %2605 = vmatprep.subr.mxu0 0.0
  %2606 = vmatpush1.msra.mxu0 0.0
  %2607 = vmatprep.subr.mxu0 0.0
  %2608 = vmatpush1.msra.mxu0 0.0
  %2609 = vmatprep.subr.mxu0 0.0
  %2610 = vmatpush1.msra.mxu0 0.0
  %2611 = vmatprep.subr.mxu0 0.0
  %2612 = vmatpush1.msra.mxu0 0.0
  %2613 = vmatprep.subr.mxu0 0.0
  %2614 = vmatpush1.msra.mxu0 0.0
  %2615 = vmatprep.subr.mxu0 0.0
  %2616 = vmatpush1.msra.mxu0 0.0
  %2617 = vmatprep.subr.mxu0 0.0
  %2618 = vmatpush1.msra.mxu0 0.0
  %2619 = vmatprep.subr.mxu0 0.0
  %2620 = vmatpush1.msra.mxu0 0.0
  %2621 = vmatprep.subr.mxu0 0.0
  %2622 = vmatpush1.msra.mxu0 0.0
  %2623 = vmatprep.subr.mxu0 0.0
  %2624 = vmatpush1.msra.mxu0 0.0
  %2625 = vmatprep.subr.mxu0 0.0
  %2626 = vmatpush1.msra.mxu0 0.0
  %2627 = vmatprep.subr.mxu0 0.0
  %2628 = vmatpush1.msra.mxu0 0.0
  %2629 = vmatprep.subr.mxu0 0.0
  %2630 = vmatpush1.msra.mxu0 0.0
  %2631 = vmatprep.subr.mxu0 0.0
  %2632 = vmatpush1.msra.mxu0 0.0
  %2633 = vmatprep.subr.mxu0 0.0
  %2634 = vmatpush1.msra.mxu0 0.0
  %2635 = vmatprep.subr.mxu0 0.0
  %2636 = vmatpush1.msra.mxu0 0.0
  %2637 = vmatprep.subr.mxu0 0.0
  %2638 = vmatpush1.msra.mxu0 0.0
  %2639 = vmatprep.subr.mxu0 0.0
  %2640 = vmatpush1.msra.mxu0 0.0
  %2641 = vmatprep.subr.mxu0 0.0
  %2642 = vmatpush1.msra.mxu0 0.0
  %2643 = vmatprep.subr.mxu0 0.0
  %2644 = vmatpush1.msra.mxu0 0.0
  %2645 = vmatprep.subr.mxu0 0.0
  %2646 = vmatpush1.msra.mxu0 0.0
  %2647 = vmatprep.subr.mxu0 0.0
  %2648 = vmatpush1.msra.mxu0 0.0
  %2649 = vmatprep.mubr.f32.mxu0 0.0
  %2650 = vmatmul.mubr.f32.gmra.mrb[0].mxu0 %v2583
  %v2651 = vpop.f32.mrb[0].mxu0
  %v2652 = vadd.f32 0.0, %v2651
  %v2653 = vpop.f32.mrb[0].mxu0
  %2654 = vdwg.mxu0
  %v2655 = vadd.f32 %v2324, %v2652
  %v2656 = vxor.u32 %v2655, 2147483648
  %v2657 = vmul.f32 %v2656, 1.442695
  %v2658 = vpow.pop %v2657
  %v2659 = vadd.f32 %v2658, 1.0
  %v2660 = vrcp.pop %v2659
  %v2661 = vmul.f32 1.0, %v2660
  %v2662 = vadd.f32 %v2652, %v2435
  %2664 = vrot.lane.b32.xlu0 %v2662, 112
  %v2665 = vpop.permute.xlu0 %2664
  %v2667 = vmul.f32 %v2661, %v2665
  %2669 = vrot.lane.b32.xlu0 %v2667, 16
  %v2670 = vpop.permute.xlu0 %2669
  %v2672 = vadd.f32 %v2324, %v2670
  %v2673 = vtanh.pop %v2672
  %v2674 = vsub.f32 %v2579, %v2673
  %2676 = vrot.lane.b32.xlu0 %v2674, 120
  %v2677 = vpop.permute.xlu0 %2676
  %v2679 = vmul.f32 %v2661, %v2677
  %2681 = vrot.lane.b32.xlu0 %v2679, 8
  %v2682 = vpop.permute.xlu0 %2681
  %v2684 = vadd.f32 %v2673, %v2682
  %2686 = vrot.lane.b32.xlu0 %v2684, 112
  %v2687 = vpop.permute.xlu0 %2686
  %2689 = vst.msk [vmem:[#allocation2 + $0x10] sm:$0xff] %vm213, %v2687
  %v2690 = vsub.f32 %v2684, %v2579
  %v2691 = vmul.f32 %v569, %v2690
  %v2692 = vadd.f32 %v2579, %v2691
  %2694 = vrot.lane.b32.xlu0 %v2692, 112
  %v2695 = vpop.permute.xlu0 %2694
  %v2696 = vsel %vm213, %v2695, 0
  %2698 = vmatprep.subr.mxu0 0.0
  %2699 = vmatpush1.msra.mxu0 %v2214
  %2700 = vmatprep.subr.mxu0 0.0
  %2701 = vmatpush1.msra.mxu0 0.0
  %2702 = vmatprep.subr.mxu0 0.0
  %2703 = vmatpush1.msra.mxu0 0.0
  %2704 = vmatprep.subr.mxu0 0.0
  %2705 = vmatpush1.msra.mxu0 0.0
  %2706 = vmatprep.subr.mxu0 0.0
  %2707 = vmatpush1.msra.mxu0 0.0
  %2708 = vmatprep.subr.mxu0 0.0
  %2709 = vmatpush1.msra.mxu0 0.0
  %2710 = vmatprep.subr.mxu0 0.0
  %2711 = vmatpush1.msra.mxu0 0.0
  %2712 = vmatprep.subr.mxu0 0.0
  %2713 = vmatpush1.msra.mxu0 0.0
  %2714 = vmatprep.subr.mxu0 0.0
  %2715 = vmatpush1.msra.mxu0 0.0
  %2716 = vmatprep.subr.mxu0 0.0
  %2717 = vmatpush1.msra.mxu0 0.0
  %2718 = vmatprep.subr.mxu0 0.0
  %2719 = vmatpush1.msra.mxu0 0.0
  %2720 = vmatprep.subr.mxu0 0.0
  %2721 = vmatpush1.msra.mxu0 0.0
  %2722 = vmatprep.subr.mxu0 0.0
  %2723 = vmatpush1.msra.mxu0 0.0
  %2724 = vmatprep.subr.mxu0 0.0
  %2725 = vmatpush1.msra.mxu0 0.0
  %2726 = vmatprep.subr.mxu0 0.0
  %2727 = vmatpush1.msra.mxu0 0.0
  %2728 = vmatprep.subr.mxu0 0.0
  %2729 = vmatpush1.msra.mxu0 0.0
  %2730 = vmatprep.subr.mxu0 0.0
  %2731 = vmatpush1.msra.mxu0 0.0
  %2732 = vmatprep.subr.mxu0 0.0
  %2733 = vmatpush1.msra.mxu0 0.0
  %2734 = vmatprep.subr.mxu0 0.0
  %2735 = vmatpush1.msra.mxu0 0.0
  %2736 = vmatprep.subr.mxu0 0.0
  %2737 = vmatpush1.msra.mxu0 0.0
  %2738 = vmatprep.subr.mxu0 0.0
  %2739 = vmatpush1.msra.mxu0 0.0
  %2740 = vmatprep.subr.mxu0 0.0
  %2741 = vmatpush1.msra.mxu0 0.0
  %2742 = vmatprep.subr.mxu0 0.0
  %2743 = vmatpush1.msra.mxu0 0.0
  %2744 = vmatprep.subr.mxu0 0.0
  %2745 = vmatpush1.msra.mxu0 0.0
  %2746 = vmatprep.subr.mxu0 0.0
  %2747 = vmatpush1.msra.mxu0 0.0
  %2748 = vmatprep.subr.mxu0 0.0
  %2749 = vmatpush1.msra.mxu0 0.0
  %2750 = vmatprep.subr.mxu0 0.0
  %2751 = vmatpush1.msra.mxu0 0.0
  %2752 = vmatprep.subr.mxu0 0.0
  %2753 = vmatpush1.msra.mxu0 0.0
  %2754 = vmatprep.subr.mxu0 0.0
  %2755 = vmatpush1.msra.mxu0 0.0
  %2756 = vmatprep.subr.mxu0 0.0
  %2757 = vmatpush1.msra.mxu0 0.0
  %2758 = vmatprep.subr.mxu0 0.0
  %2759 = vmatpush1.msra.mxu0 0.0
  %2760 = vmatprep.subr.mxu0 0.0
  %2761 = vmatpush1.msra.mxu0 0.0
  %2762 = vmatprep.mubr.f32.mxu0 0.0
  %2763 = vmatmul.mubr.f32.gmra.mrb[0].mxu0 %v2696
  %v2764 = vpop.f32.mrb[0].mxu0
  %v2765 = vadd.f32 0.0, %v2764
  %v2766 = vpop.f32.mrb[0].mxu0
  %2767 = vdwg.mxu0
  %v2768 = vadd.f32 %v2329, %v2765
  %v2769 = vxor.u32 %v2768, 2147483648
  %v2770 = vmul.f32 %v2769, 1.442695
  %v2771 = vpow.pop %v2770
  %v2772 = vadd.f32 %v2771, 1.0
  %v2773 = vrcp.pop %v2772
  %v2774 = vmul.f32 1.0, %v2773
  %v2775 = vadd.f32 %v2765, %v2435
  %2777 = vrot.lane.b32.xlu0 %v2775, 112
  %v2778 = vpop.permute.xlu0 %2777
  %v2780 = vmul.f32 %v2774, %v2778
  %2782 = vrot.lane.b32.xlu0 %v2780, 16
  %v2783 = vpop.permute.xlu0 %2782
  %v2785 = vadd.f32 %v2329, %v2783
  %v2786 = vtanh.pop %v2785
  %v2787 = vsub.f32 %v2692, %v2786
  %2789 = vrot.lane.b32.xlu0 %v2787, 120
  %v2790 = vpop.permute.xlu0 %2789
  %v2792 = vmul.f32 %v2774, %v2790
  %2794 = vrot.lane.b32.xlu0 %v2792, 8
  %v2795 = vpop.permute.xlu0 %2794
  %v2797 = vadd.f32 %v2786, %v2795
  %2799 = vrot.lane.b32.xlu0 %v2797, 112
  %v2800 = vpop.permute.xlu0 %2799
  %2802 = vst.msk [vmem:[#allocation2 + $0x18] sm:$0xff] %vm213, %v2800
  %v2803 = vsub.f32 %v2797, %v2692
  %v2804 = vmul.f32 %v687, %v2803
  %v2805 = vadd.f32 %v2692, %v2804
  %2807 = vrot.lane.b32.xlu0 %v2805, 112
  %v2808 = vpop.permute.xlu0 %2807
  %v2809 = vsel %vm213, %v2808, 0
  %2811 = vmatprep.subr.mxu0 0.0
  %2812 = vmatpush1.msra.mxu0 %v2214
  %2813 = vmatprep.subr.mxu0 0.0
  %2814 = vmatpush1.msra.mxu0 0.0
  %2815 = vmatprep.subr.mxu0 0.0
  %2816 = vmatpush1.msra.mxu0 0.0
  %2817 = vmatprep.subr.mxu0 0.0
  %2818 = vmatpush1.msra.mxu0 0.0
  %2819 = vmatprep.subr.mxu0 0.0
  %2820 = vmatpush1.msra.mxu0 0.0
  %2821 = vmatprep.subr.mxu0 0.0
  %2822 = vmatpush1.msra.mxu0 0.0
  %2823 = vmatprep.subr.mxu0 0.0
  %2824 = vmatpush1.msra.mxu0 0.0
  %2825 = vmatprep.subr.mxu0 0.0
  %2826 = vmatpush1.msra.mxu0 0.0
  %2827 = vmatprep.subr.mxu0 0.0
  %2828 = vmatpush1.msra.mxu0 0.0
  %2829 = vmatprep.subr.mxu0 0.0
  %2830 = vmatpush1.msra.mxu0 0.0
  %2831 = vmatprep.subr.mxu0 0.0
  %2832 = vmatpush1.msra.mxu0 0.0
  %2833 = vmatprep.subr.mxu0 0.0
  %2834 = vmatpush1.msra.mxu0 0.0
  %2835 = vmatprep.subr.mxu0 0.0
  %2836 = vmatpush1.msra.mxu0 0.0
  %2837 = vmatprep.subr.mxu0 0.0
  %2838 = vmatpush1.msra.mxu0 0.0
  %2839 = vmatprep.subr.mxu0 0.0
  %2840 = vmatpush1.msra.mxu0 0.0
  %2841 = vmatprep.subr.mxu0 0.0
  %2842 = vmatpush1.msra.mxu0 0.0
  %2843 = vmatprep.subr.mxu0 0.0
  %2844 = vmatpush1.msra.mxu0 0.0
  %2845 = vmatprep.subr.mxu0 0.0
  %2846 = vmatpush1.msra.mxu0 0.0
  %2847 = vmatprep.subr.mxu0 0.0
  %2848 = vmatpush1.msra.mxu0 0.0
  %2849 = vmatprep.subr.mxu0 0.0
  %2850 = vmatpush1.msra.mxu0 0.0
  %2851 = vmatprep.subr.mxu0 0.0
  %2852 = vmatpush1.msra.mxu0 0.0
  %2853 = vmatprep.subr.mxu0 0.0
  %2854 = vmatpush1.msra.mxu0 0.0
  %2855 = vmatprep.subr.mxu0 0.0
  %2856 = vmatpush1.msra.mxu0 0.0
  %2857 = vmatprep.subr.mxu0 0.0
  %2858 = vmatpush1.msra.mxu0 0.0
  %2859 = vmatprep.subr.mxu0 0.0
  %2860 = vmatpush1.msra.mxu0 0.0
  %2861 = vmatprep.subr.mxu0 0.0
  %2862 = vmatpush1.msra.mxu0 0.0
  %2863 = vmatprep.subr.mxu0 0.0
  %2864 = vmatpush1.msra.mxu0 0.0
  %2865 = vmatprep.subr.mxu0 0.0
  %2866 = vmatpush1.msra.mxu0 0.0
  %2867 = vmatprep.subr.mxu0 0.0
  %2868 = vmatpush1.msra.mxu0 0.0
  %2869 = vmatprep.subr.mxu0 0.0
  %2870 = vmatpush1.msra.mxu0 0.0
  %2871 = vmatprep.subr.mxu0 0.0
  %2872 = vmatpush1.msra.mxu0 0.0
  %2873 = vmatprep.subr.mxu0 0.0
  %2874 = vmatpush1.msra.mxu0 0.0
  %2875 = vmatprep.mubr.f32.mxu0 0.0
  %2876 = vmatmul.mubr.f32.gmra.mrb[0].mxu0 %v2809
  %v2877 = vpop.f32.mrb[0].mxu0
  %v2878 = vadd.f32 0.0, %v2877
  %v2879 = vpop.f32.mrb[0].mxu0
  %2880 = vdwg.mxu0
  %v2881 = vadd.f32 %v2334, %v2878
  %v2882 = vxor.u32 %v2881, 2147483648
  %v2883 = vmul.f32 %v2882, 1.442695
  %v2884 = vpow.pop %v2883
  %v2885 = vadd.f32 %v2884, 1.0
  %v2886 = vrcp.pop %v2885
  %v2887 = vmul.f32 1.0, %v2886
  %v2888 = vadd.f32 %v2878, %v2435
  %2890 = vrot.lane.b32.xlu0 %v2888, 112
  %v2891 = vpop.permute.xlu0 %2890
  %v2893 = vmul.f32 %v2887, %v2891
  %2895 = vrot.lane.b32.xlu0 %v2893, 16
  %v2896 = vpop.permute.xlu0 %2895
  %v2898 = vadd.f32 %v2334, %v2896
  %v2899 = vtanh.pop %v2898
  %v2900 = vsub.f32 %v2805, %v2899
  %2902 = vrot.lane.b32.xlu0 %v2900, 120
  %v2903 = vpop.permute.xlu0 %2902
  %v2905 = vmul.f32 %v2887, %v2903
  %2907 = vrot.lane.b32.xlu0 %v2905, 8
  %v2908 = vpop.permute.xlu0 %2907
  %v2910 = vadd.f32 %v2899, %v2908
  %2912 = vrot.lane.b32.xlu0 %v2910, 112
  %v2913 = vpop.permute.xlu0 %2912
  %2915 = vst.msk [vmem:[#allocation2 + $0x20] sm:$0xff] %vm213, %v2913
  %v2916 = vsub.f32 %v2910, %v2805
  %v2917 = vmul.f32 %v805, %v2916
  %v2918 = vadd.f32 %v2805, %v2917
  %2920 = vrot.lane.b32.xlu0 %v2918, 112
  %v2921 = vpop.permute.xlu0 %2920
  %v2922 = vsel %vm213, %v2921, 0
  %2924 = vmatprep.subr.mxu0 0.0
  %2925 = vmatpush1.msra.mxu0 %v2214
  %2926 = vmatprep.subr.mxu0 0.0
  %2927 = vmatpush1.msra.mxu0 0.0
  %2928 = vmatprep.subr.mxu0 0.0
  %2929 = vmatpush1.msra.mxu0 0.0
  %2930 = vmatprep.subr.mxu0 0.0
  %2931 = vmatpush1.msra.mxu0 0.0
  %2932 = vmatprep.subr.mxu0 0.0
  %2933 = vmatpush1.msra.mxu0 0.0
  %2934 = vmatprep.subr.mxu0 0.0
  %2935 = vmatpush1.msra.mxu0 0.0
  %2936 = vmatprep.subr.mxu0 0.0
  %2937 = vmatpush1.msra.mxu0 0.0
  %2938 = vmatprep.subr.mxu0 0.0
  %2939 = vmatpush1.msra.mxu0 0.0
  %2940 = vmatprep.subr.mxu0 0.0
  %2941 = vmatpush1.msra.mxu0 0.0
  %2942 = vmatprep.subr.mxu0 0.0
  %2943 = vmatpush1.msra.mxu0 0.0
  %2944 = vmatprep.subr.mxu0 0.0
  %2945 = vmatpush1.msra.mxu0 0.0
  %2946 = vmatprep.subr.mxu0 0.0
  %2947 = vmatpush1.msra.mxu0 0.0
  %2948 = vmatprep.subr.mxu0 0.0
  %2949 = vmatpush1.msra.mxu0 0.0
  %2950 = vmatprep.subr.mxu0 0.0
  %2951 = vmatpush1.msra.mxu0 0.0
  %2952 = vmatprep.subr.mxu0 0.0
  %2953 = vmatpush1.msra.mxu0 0.0
  %2954 = vmatprep.subr.mxu0 0.0
  %2955 = vmatpush1.msra.mxu0 0.0
  %2956 = vmatprep.subr.mxu0 0.0
  %2957 = vmatpush1.msra.mxu0 0.0
  %2958 = vmatprep.subr.mxu0 0.0
  %2959 = vmatpush1.msra.mxu0 0.0
  %2960 = vmatprep.subr.mxu0 0.0
  %2961 = vmatpush1.msra.mxu0 0.0
  %2962 = vmatprep.subr.mxu0 0.0
  %2963 = vmatpush1.msra.mxu0 0.0
  %2964 = vmatprep.subr.mxu0 0.0
  %2965 = vmatpush1.msra.mxu0 0.0
  %2966 = vmatprep.subr.mxu0 0.0
  %2967 = vmatpush1.msra.mxu0 0.0
  %2968 = vmatprep.subr.mxu0 0.0
  %2969 = vmatpush1.msra.mxu0 0.0
  %2970 = vmatprep.subr.mxu0 0.0
  %2971 = vmatpush1.msra.mxu0 0.0
  %2972 = vmatprep.subr.mxu0 0.0
  %2973 = vmatpush1.msra.mxu0 0.0
  %2974 = vmatprep.subr.mxu0 0.0
  %2975 = vmatpush1.msra.mxu0 0.0
  %2976 = vmatprep.subr.mxu0 0.0
  %2977 = vmatpush1.msra.mxu0 0.0
  %2978 = vmatprep.subr.mxu0 0.0
  %2979 = vmatpush1.msra.mxu0 0.0
  %2980 = vmatprep.subr.mxu0 0.0
  %2981 = vmatpush1.msra.mxu0 0.0
  %2982 = vmatprep.subr.mxu0 0.0
  %2983 = vmatpush1.msra.mxu0 0.0
  %2984 = vmatprep.subr.mxu0 0.0
  %2985 = vmatpush1.msra.mxu0 0.0
  %2986 = vmatprep.subr.mxu0 0.0
  %2987 = vmatpush1.msra.mxu0 0.0
  %2988 = vmatprep.mubr.f32.mxu0 0.0
  %2989 = vmatmul.mubr.f32.gmra.mrb[0].mxu0 %v2922
  %v2990 = vpop.f32.mrb[0].mxu0
  %v2991 = vadd.f32 0.0, %v2990
  %v2992 = vpop.f32.mrb[0].mxu0
  %2993 = vdwg.mxu0
  %v2994 = vadd.f32 %v2339, %v2991
  %v2995 = vxor.u32 %v2994, 2147483648
  %v2996 = vmul.f32 %v2995, 1.442695
  %v2997 = vpow.pop %v2996
  %v2998 = vadd.f32 %v2997, 1.0
  %v2999 = vrcp.pop %v2998
  %v3000 = vmul.f32 1.0, %v2999
  %v3001 = vadd.f32 %v2991, %v2435
  %3003 = vrot.lane.b32.xlu0 %v3001, 112
  %v3004 = vpop.permute.xlu0 %3003
  %v3006 = vmul.f32 %v3000, %v3004
  %3008 = vrot.lane.b32.xlu0 %v3006, 16
  %v3009 = vpop.permute.xlu0 %3008
  %v3011 = vadd.f32 %v2339, %v3009
  %v3012 = vtanh.pop %v3011
  %v3013 = vsub.f32 %v2918, %v3012
  %3015 = vrot.lane.b32.xlu0 %v3013, 120
  %v3016 = vpop.permute.xlu0 %3015
  %v3018 = vmul.f32 %v3000, %v3016
  %3020 = vrot.lane.b32.xlu0 %v3018, 8
  %v3021 = vpop.permute.xlu0 %3020
  %v3023 = vadd.f32 %v3012, %v3021
  %3025 = vrot.lane.b32.xlu0 %v3023, 112
  %v3026 = vpop.permute.xlu0 %3025
  %3028 = vst.msk [vmem:[#allocation2 + $0x28] sm:$0xff] %vm213, %v3026
  %v3029 = vsub.f32 %v3023, %v2918
  %v3030 = vmul.f32 %v923, %v3029
  %v3031 = vadd.f32 %v2918, %v3030
  %3033 = vrot.lane.b32.xlu0 %v3031, 112
  %v3034 = vpop.permute.xlu0 %3033
  %v3035 = vsel %vm213, %v3034, 0
  %3037 = vmatprep.subr.mxu0 0.0
  %3038 = vmatpush1.msra.mxu0 %v2214
  %3039 = vmatprep.subr.mxu0 0.0
  %3040 = vmatpush1.msra.mxu0 0.0
  %3041 = vmatprep.subr.mxu0 0.0
  %3042 = vmatpush1.msra.mxu0 0.0
  %3043 = vmatprep.subr.mxu0 0.0
  %3044 = vmatpush1.msra.mxu0 0.0
  %3045 = vmatprep.subr.mxu0 0.0
  %3046 = vmatpush1.msra.mxu0 0.0
  %3047 = vmatprep.subr.mxu0 0.0
  %3048 = vmatpush1.msra.mxu0 0.0
  %3049 = vmatprep.subr.mxu0 0.0
  %3050 = vmatpush1.msra.mxu0 0.0
  %3051 = vmatprep.subr.mxu0 0.0
  %3052 = vmatpush1.msra.mxu0 0.0
  %3053 = vmatprep.subr.mxu0 0.0
  %3054 = vmatpush1.msra.mxu0 0.0
  %3055 = vmatprep.subr.mxu0 0.0
  %3056 = vmatpush1.msra.mxu0 0.0
  %3057 = vmatprep.subr.mxu0 0.0
  %3058 = vmatpush1.msra.mxu0 0.0
  %3059 = vmatprep.subr.mxu0 0.0
  %3060 = vmatpush1.msra.mxu0 0.0
  %3061 = vmatprep.subr.mxu0 0.0
  %3062 = vmatpush1.msra.mxu0 0.0
  %3063 = vmatprep.subr.mxu0 0.0
  %3064 = vmatpush1.msra.mxu0 0.0
  %3065 = vmatprep.subr.mxu0 0.0
  %3066 = vmatpush1.msra.mxu0 0.0
  %3067 = vmatprep.subr.mxu0 0.0
  %3068 = vmatpush1.msra.mxu0 0.0
  %3069 = vmatprep.subr.mxu0 0.0
  %3070 = vmatpush1.msra.mxu0 0.0
  %3071 = vmatprep.subr.mxu0 0.0
  %3072 = vmatpush1.msra.mxu0 0.0
  %3073 = vmatprep.subr.mxu0 0.0
  %3074 = vmatpush1.msra.mxu0 0.0
  %3075 = vmatprep.subr.mxu0 0.0
  %3076 = vmatpush1.msra.mxu0 0.0
  %3077 = vmatprep.subr.mxu0 0.0
  %3078 = vmatpush1.msra.mxu0 0.0
  %3079 = vmatprep.subr.mxu0 0.0
  %3080 = vmatpush1.msra.mxu0 0.0
  %3081 = vmatprep.subr.mxu0 0.0
  %3082 = vmatpush1.msra.mxu0 0.0
  %3083 = vmatprep.subr.mxu0 0.0
  %3084 = vmatpush1.msra.mxu0 0.0
  %3085 = vmatprep.subr.mxu0 0.0
  %3086 = vmatpush1.msra.mxu0 0.0
  %3087 = vmatprep.subr.mxu0 0.0
  %3088 = vmatpush1.msra.mxu0 0.0
  %3089 = vmatprep.subr.mxu0 0.0
  %3090 = vmatpush1.msra.mxu0 0.0
  %3091 = vmatprep.subr.mxu0 0.0
  %3092 = vmatpush1.msra.mxu0 0.0
  %3093 = vmatprep.subr.mxu0 0.0
  %3094 = vmatpush1.msra.mxu0 0.0
  %3095 = vmatprep.subr.mxu0 0.0
  %3096 = vmatpush1.msra.mxu0 0.0
  %3097 = vmatprep.subr.mxu0 0.0
  %3098 = vmatpush1.msra.mxu0 0.0
  %3099 = vmatprep.subr.mxu0 0.0
  %3100 = vmatpush1.msra.mxu0 0.0
  %3101 = vmatprep.mubr.f32.mxu0 0.0
  %3102 = vmatmul.mubr.f32.gmra.mrb[0].mxu0 %v3035
  %v3103 = vpop.f32.mrb[0].mxu0
  %v3104 = vadd.f32 0.0, %v3103
  %v3105 = vpop.f32.mrb[0].mxu0
  %3106 = vdwg.mxu0
  %v3107 = vadd.f32 %v2344, %v3104
  %v3108 = vxor.u32 %v3107, 2147483648
  %v3109 = vmul.f32 %v3108, 1.442695
  %v3110 = vpow.pop %v3109
  %v3111 = vadd.f32 %v3110, 1.0
  %v3112 = vrcp.pop %v3111
  %v3113 = vmul.f32 1.0, %v3112
  %v3114 = vadd.f32 %v3104, %v2435
  %3116 = vrot.lane.b32.xlu0 %v3114, 112
  %v3117 = vpop.permute.xlu0 %3116
  %v3119 = vmul.f32 %v3113, %v3117
  %3121 = vrot.lane.b32.xlu0 %v3119, 16
  %v3122 = vpop.permute.xlu0 %3121
  %v3124 = vadd.f32 %v2344, %v3122
  %v3125 = vtanh.pop %v3124
  %v3126 = vsub.f32 %v3031, %v3125
  %3128 = vrot.lane.b32.xlu0 %v3126, 120
  %v3129 = vpop.permute.xlu0 %3128
  %v3131 = vmul.f32 %v3113, %v3129
  %3133 = vrot.lane.b32.xlu0 %v3131, 8
  %v3134 = vpop.permute.xlu0 %3133
  %v3136 = vadd.f32 %v3125, %v3134
  %3138 = vrot.lane.b32.xlu0 %v3136, 112
  %v3139 = vpop.permute.xlu0 %3138
  %3141 = vst.msk [vmem:[#allocation2 + $0x30] sm:$0xff] %vm213, %v3139
  %v3142 = vsub.f32 %v3136, %v3031
  %v3143 = vmul.f32 %v1041, %v3142
  %v3144 = vadd.f32 %v3031, %v3143
  %3146 = vrot.lane.b32.xlu0 %v3144, 112
  %v3147 = vpop.permute.xlu0 %3146
  %v3148 = vsel %vm213, %v3147, 0
  %3150 = vmatprep.subr.mxu0 0.0
  %3151 = vmatpush1.msra.mxu0 %v2214
  %3152 = vmatprep.subr.mxu0 0.0
  %3153 = vmatpush1.msra.mxu0 0.0
  %3154 = vmatprep.subr.mxu0 0.0
  %3155 = vmatpush1.msra.mxu0 0.0
  %3156 = vmatprep.subr.mxu0 0.0
  %3157 = vmatpush1.msra.mxu0 0.0
  %3158 = vmatprep.subr.mxu0 0.0
  %3159 = vmatpush1.msra.mxu0 0.0
  %3160 = vmatprep.subr.mxu0 0.0
  %3161 = vmatpush1.msra.mxu0 0.0
  %3162 = vmatprep.subr.mxu0 0.0
  %3163 = vmatpush1.msra.mxu0 0.0
  %3164 = vmatprep.subr.mxu0 0.0
  %3165 = vmatpush1.msra.mxu0 0.0
  %3166 = vmatprep.subr.mxu0 0.0
  %3167 = vmatpush1.msra.mxu0 0.0
  %3168 = vmatprep.subr.mxu0 0.0
  %3169 = vmatpush1.msra.mxu0 0.0
  %3170 = vmatprep.subr.mxu0 0.0
  %3171 = vmatpush1.msra.mxu0 0.0
  %3172 = vmatprep.subr.mxu0 0.0
  %3173 = vmatpush1.msra.mxu0 0.0
  %3174 = vmatprep.subr.mxu0 0.0
  %3175 = vmatpush1.msra.mxu0 0.0
  %3176 = vmatprep.subr.mxu0 0.0
  %3177 = vmatpush1.msra.mxu0 0.0
  %3178 = vmatprep.subr.mxu0 0.0
  %3179 = vmatpush1.msra.mxu0 0.0
  %3180 = vmatprep.subr.mxu0 0.0
  %3181 = vmatpush1.msra.mxu0 0.0
  %3182 = vmatprep.subr.mxu0 0.0
  %3183 = vmatpush1.msra.mxu0 0.0
  %3184 = vmatprep.subr.mxu0 0.0
  %3185 = vmatpush1.msra.mxu0 0.0
  %3186 = vmatprep.subr.mxu0 0.0
  %3187 = vmatpush1.msra.mxu0 0.0
  %3188 = vmatprep.subr.mxu0 0.0
  %3189 = vmatpush1.msra.mxu0 0.0
  %3190 = vmatprep.subr.mxu0 0.0
  %3191 = vmatpush1.msra.mxu0 0.0
  %3192 = vmatprep.subr.mxu0 0.0
  %3193 = vmatpush1.msra.mxu0 0.0
  %3194 = vmatprep.subr.mxu0 0.0
  %3195 = vmatpush1.msra.mxu0 0.0
  %3196 = vmatprep.subr.mxu0 0.0
  %3197 = vmatpush1.msra.mxu0 0.0
  %3198 = vmatprep.subr.mxu0 0.0
  %3199 = vmatpush1.msra.mxu0 0.0
  %3200 = vmatprep.subr.mxu0 0.0
  %3201 = vmatpush1.msra.mxu0 0.0
  %3202 = vmatprep.subr.mxu0 0.0
  %3203 = vmatpush1.msra.mxu0 0.0
  %3204 = vmatprep.subr.mxu0 0.0
  %3205 = vmatpush1.msra.mxu0 0.0
  %3206 = vmatprep.subr.mxu0 0.0
  %3207 = vmatpush1.msra.mxu0 0.0
  %3208 = vmatprep.subr.mxu0 0.0
  %3209 = vmatpush1.msra.mxu0 0.0
  %3210 = vmatprep.subr.mxu0 0.0
  %3211 = vmatpush1.msra.mxu0 0.0
  %3212 = vmatprep.subr.mxu0 0.0
  %3213 = vmatpush1.msra.mxu0 0.0
  %3214 = vmatprep.mubr.f32.mxu0 0.0
  %3215 = vmatmul.mubr.f32.gmra.mrb[0].mxu0 %v3148
  %v3216 = vpop.f32.mrb[0].mxu0
  %v3217 = vadd.f32 0.0, %v3216
  %v3218 = vpop.f32.mrb[0].mxu0
  %3219 = vdwg.mxu0
  %v3220 = vadd.f32 %v2349, %v3217
  %v3221 = vxor.u32 %v3220, 2147483648
  %v3222 = vmul.f32 %v3221, 1.442695
  %v3223 = vpow.pop %v3222
  %v3224 = vadd.f32 %v3223, 1.0
  %v3225 = vrcp.pop %v3224
  %v3226 = vmul.f32 1.0, %v3225
  %v3227 = vadd.f32 %v3217, %v2435
  %3229 = vrot.lane.b32.xlu0 %v3227, 112
  %v3230 = vpop.permute.xlu0 %3229
  %v3232 = vmul.f32 %v3226, %v3230
  %3234 = vrot.lane.b32.xlu0 %v3232, 16
  %v3235 = vpop.permute.xlu0 %3234
  %v3237 = vadd.f32 %v2349, %v3235
  %v3238 = vtanh.pop %v3237
  %v3239 = vsub.f32 %v3144, %v3238
  %3241 = vrot.lane.b32.xlu0 %v3239, 120
  %v3242 = vpop.permute.xlu0 %3241
  %v3244 = vmul.f32 %v3226, %v3242
  %3246 = vrot.lane.b32.xlu0 %v3244, 8
  %v3247 = vpop.permute.xlu0 %3246
  %v3249 = vadd.f32 %v3238, %v3247
  %3251 = vrot.lane.b32.xlu0 %v3249, 112
  %v3252 = vpop.permute.xlu0 %3251
  %3254 = vst.msk [vmem:[#allocation2 + $0x38] sm:$0xff] %vm213, %v3252
  %v3255 = vld [vmem:[#allocation2] sm:$0xff]
  %v3256 = vld [vmem:[#allocation2 + $0x8] sm:$0xff]
  %v3257 = vld [vmem:[#allocation2 + $0x10] sm:$0xff]
  %v3258 = vld [vmem:[#allocation2 + $0x18] sm:$0xff]
  %v3259 = vld [vmem:[#allocation2 + $0x20] sm:$0xff]
  %v3260 = vld [vmem:[#allocation2 + $0x28] sm:$0xff]
  %v3261 = vld [vmem:[#allocation2 + $0x30] sm:$0xff]
  %v3262 = vld [vmem:[#allocation2 + $0x38] sm:$0xff]
  %3264 = vset.pattern.permute.xlu0 0
  %3265 = vperm.xlu0 %3264, %v60
  %v3266 = vpop.permute.xlu0 %3265
  %v3268 = vmul.f32 %v333, %v3255
  %v3269 = vmul.f32 %v451, %v3256
  %v3270 = vmul.f32 %v569, %v3257
  %v3271 = vmul.f32 %v687, %v3258
  %v3272 = vmul.f32 %v805, %v3259
  %v3273 = vmul.f32 %v923, %v3260
  %v3274 = vmul.f32 %v1041, %v3261
  %v3275 = vmul.f32 %v3266, %v3262
  %v3276 = vld [vmem:[%s14] sm:$0xff]
  %v3277 = vld [vmem:[%s15] sm:$0x1]
  %v3279 = vlaneseq
  %v3280 = vshrl.u32 %v3279, 7
  %v3281 = vsub.s32 0, %v3280
  %v3282 = vrot.slane %v3277, %v3281
  %v3285 = vsel %vm213, %v3268, 0
  %v3288 = vsel %vm213, %v3269, 0
  %v3291 = vsel %vm213, %v3270, 0
  %v3294 = vsel %vm213, %v3271, 0
  %v3297 = vsel %vm213, %v3272, 0
  %v3300 = vsel %vm213, %v3273, 0
  %v3303 = vsel %vm213, %v3274, 0
  %v3306 = vsel %vm213, %v3275, 0
  %3308 = vmatprep.subr.mxu0 0.0
  %3309 = vmatpush1.msra.mxu0 %v3276
  %3310 = vmatprep.subr.mxu0 0.0
  %3311 = vmatpush1.msra.mxu0 0.0
  %3312 = vmatprep.subr.mxu0 0.0
  %3313 = vmatpush1.msra.mxu0 0.0
  %3314 = vmatprep.subr.mxu0 0.0
  %3315 = vmatpush1.msra.mxu0 0.0
  %3316 = vmatprep.subr.mxu0 0.0
  %3317 = vmatpush1.msra.mxu0 0.0
  %3318 = vmatprep.subr.mxu0 0.0
  %3319 = vmatpush1.msra.mxu0 0.0
  %3320 = vmatprep.subr.mxu0 0.0
  %3321 = vmatpush1.msra.mxu0 0.0
  %3322 = vmatprep.subr.mxu0 0.0
  %3323 = vmatpush1.msra.mxu0 0.0
  %3324 = vmatprep.subr.mxu0 0.0
  %3325 = vmatpush1.msra.mxu0 0.0
  %3326 = vmatprep.subr.mxu0 0.0
  %3327 = vmatpush1.msra.mxu0 0.0
  %3328 = vmatprep.subr.mxu0 0.0
  %3329 = vmatpush1.msra.mxu0 0.0
  %3330 = vmatprep.subr.mxu0 0.0
  %3331 = vmatpush1.msra.mxu0 0.0
  %3332 = vmatprep.subr.mxu0 0.0
  %3333 = vmatpush1.msra.mxu0 0.0
  %3334 = vmatprep.subr.mxu0 0.0
  %3335 = vmatpush1.msra.mxu0 0.0
  %3336 = vmatprep.subr.mxu0 0.0
  %3337 = vmatpush1.msra.mxu0 0.0
  %3338 = vmatprep.subr.mxu0 0.0
  %3339 = vmatpush1.msra.mxu0 0.0
  %3340 = vmatprep.subr.mxu0 0.0
  %3341 = vmatpush1.msra.mxu0 0.0
  %3342 = vmatprep.subr.mxu0 0.0
  %3343 = vmatpush1.msra.mxu0 0.0
  %3344 = vmatprep.subr.mxu0 0.0
  %3345 = vmatpush1.msra.mxu0 0.0
  %3346 = vmatprep.subr.mxu0 0.0
  %3347 = vmatpush1.msra.mxu0 0.0
  %3348 = vmatprep.subr.mxu0 0.0
  %3349 = vmatpush1.msra.mxu0 0.0
  %3350 = vmatprep.subr.mxu0 0.0
  %3351 = vmatpush1.msra.mxu0 0.0
  %3352 = vmatprep.subr.mxu0 0.0
  %3353 = vmatpush1.msra.mxu0 0.0
  %3354 = vmatprep.subr.mxu0 0.0
  %3355 = vmatpush1.msra.mxu0 0.0
  %3356 = vmatprep.subr.mxu0 0.0
  %3357 = vmatpush1.msra.mxu0 0.0
  %3358 = vmatprep.subr.mxu0 0.0
  %3359 = vmatpush1.msra.mxu0 0.0
  %3360 = vmatprep.subr.mxu0 0.0
  %3361 = vmatpush1.msra.mxu0 0.0
  %3362 = vmatprep.subr.mxu0 0.0
  %3363 = vmatpush1.msra.mxu0 0.0
  %3364 = vmatprep.subr.mxu0 0.0
  %3365 = vmatpush1.msra.mxu0 0.0
  %3366 = vmatprep.subr.mxu0 0.0
  %3367 = vmatpush1.msra.mxu0 0.0
  %3368 = vmatprep.subr.mxu0 0.0
  %3369 = vmatpush1.msra.mxu0 0.0
  %3370 = vmatprep.subr.mxu0 0.0
  %3371 = vmatpush1.msra.mxu0 0.0
  %3372 = vmatprep.mubr.f32.mxu0 0.0
  %3373 = vmatmul.mubr.f32.gmra.mrb[0].mxu0 %v3285
  %v3374 = vpop.f32.mrb[0].mxu0
  %v3375 = vadd.f32 %v3282, %v3374
  %v3376 = vpop.f32.mrb[0].mxu0
  %3377 = vmatprep.mubr.f32.mxu0 0.0
  %3378 = vmatmul.mubr.f32.gmra.mrb[0].mxu0 %v3288
  %v3379 = vpop.f32.mrb[0].mxu0
  %v3380 = vadd.f32 %v3282, %v3379
  %v3381 = vpop.f32.mrb[0].mxu0
  %3382 = vmatprep.mubr.f32.mxu0 0.0
  %3383 = vmatmul.mubr.f32.gmra.mrb[0].mxu0 %v3291
  %v3384 = vpop.f32.mrb[0].mxu0
  %v3385 = vadd.f32 %v3282, %v3384
  %v3386 = vpop.f32.mrb[0].mxu0
  %3387 = vmatprep.mubr.f32.mxu0 0.0
  %3388 = vmatmul.mubr.f32.gmra.mrb[0].mxu0 %v3294
  %v3389 = vpop.f32.mrb[0].mxu0
  %v3390 = vadd.f32 %v3282, %v3389
  %v3391 = vpop.f32.mrb[0].mxu0
  %3392 = vmatprep.mubr.f32.mxu0 0.0
  %3393 = vmatmul.mubr.f32.gmra.mrb[0].mxu0 %v3297
  %v3394 = vpop.f32.mrb[0].mxu0
  %v3395 = vadd.f32 %v3282, %v3394
  %v3396 = vpop.f32.mrb[0].mxu0
  %3397 = vmatprep.mubr.f32.mxu0 0.0
  %3398 = vmatmul.mubr.f32.gmra.mrb[0].mxu0 %v3300
  %v3399 = vpop.f32.mrb[0].mxu0
  %v3400 = vadd.f32 %v3282, %v3399
  %v3401 = vpop.f32.mrb[0].mxu0
  %3402 = vmatprep.mubr.f32.mxu0 0.0
  %3403 = vmatmul.mubr.f32.gmra.mrb[0].mxu0 %v3303
  %v3404 = vpop.f32.mrb[0].mxu0
  %v3405 = vadd.f32 %v3282, %v3404
  %v3406 = vpop.f32.mrb[0].mxu0
  %3407 = vmatprep.mubr.f32.mxu0 0.0
  %3408 = vmatmul.mubr.f32.gmra.mrb[0].mxu0 %v3306
  %v3409 = vpop.f32.mrb[0].mxu0
  %v3410 = vadd.f32 %v3282, %v3409
  %v3411 = vpop.f32.mrb[0].mxu0
  %3412 = vdwg.mxu0
  %3413 = vst.msk [vmem:[%s16] sm:$0xff] %vm79, %v3375
  %3414 = vst.msk [vmem:[%s16 + $0x8] sm:$0xff] %vm79, %v3380
  %3415 = vst.msk [vmem:[%s16 + $0x10] sm:$0xff] %vm79, %v3385
  %3416 = vst.msk [vmem:[%s16 + $0x18] sm:$0xff] %vm79, %v3390
  %3417 = vst.msk [vmem:[%s16 + $0x20] sm:$0xff] %vm79, %v3395
  %3418 = vst.msk [vmem:[%s16 + $0x28] sm:$0xff] %vm79, %v3400
  %3419 = vst.msk [vmem:[%s16 + $0x30] sm:$0xff] %vm79, %v3405
  %3420 = vst.msk [vmem:[%s16 + $0x38] sm:$0xff] %vm79, %v3410
  // Predicated region
  $region66: #{tpu_custom_call.1} parent=0 // pred_check
    _
  $region67: #{tpu_custom_call.1} parent=0 // pred_check_branch
    %3422 = sbr.rel (0) target = $region69
  $region68: #{tpu_custom_call.1} parent=0 // pred_region
    _
  $region69: #{tpu_custom_call.1} parent=0 // pred_fallthru
    _
  // Predicated region
  $region70: #{tpu_custom_call.1} parent=0 // pred_check
    _
  $region71: #{tpu_custom_call.1} parent=0 // pred_check_branch
    %3424 = sbr.rel (0) target = $region73
  $region72: #{tpu_custom_call.1} parent=0 // pred_region
    _
  $region73: #{tpu_custom_call.1} parent=0 // pred_fallthru
    _

</llo_original>
